<compile_context>
chip_gen: v5e
topology: v5e:2x2
jax: 0.10.0
libtpu: 0.0.40
codegen_flags: <defaults>
</compile_context>

<pallas_src>
import functools

import jax
import jax.numpy as jnp
from jax.experimental import pallas as pl
from jax.experimental.pallas import tpu as pltpu

_LANES = 128  # im2col slab stride (one vreg lane width)


# ------------------------------ fused kernel ------------------------------

def _fcrn_kernel(x_ref, h0_ref, c0_ref,
                 en1_w, en1_b, en2_w, en2_b, en3_w, en3_b, en4_w, en4_b,
                 lstm_w,
                 de1_w, de1_b, de2_w, de2_b, de3_w, de3_b, de4_w, de4_b,
                 out_w, out_b,
                 real_ref, imag_ref, h_out_ref, c_out_ref,
                 pad_ref, cols_ref, tmp_ref,
                 *, N, F, H):
    """Whole FCRN forward for one batch element, entirely in VMEM.

    x_ref: (H, Cin) noisy frame, channels-last.  h0/c0: (L, F) ConvLSTM state.
    Conv weights are pre-flattened/zero-padded to (N*128, Cout) (tap n lives
    in rows [n*128, n*128+Cin)); biases are (1, Cout).
    """
    Hp = H + 3                    # reference hard-codes F.pad(x, (0, 0, 0, 3))
    L = Hp // 4

    # Zero the im2col workspace once: lanes never written afterwards stay 0,
    # and lanes holding stale (finite) activations always meet zero weight
    # rows, so they contribute exactly 0 to the matmuls.
    cols_ref[...] = jnp.zeros_like(cols_ref)

    def im2col(v, hin, slab0):
        """cols[h, (slab0+n)*128 + c] = v_padded[h + n, c] (causal end pad)."""
        rows, cin = v.shape
        pad_ref[...] = jnp.zeros_like(pad_ref)        # zero rows == padding
        pad_ref[0:rows, 0:cin] = v
        for n in range(N):                            # static unroll
            base = (slab0 + n) * _LANES
            cols_ref[0:hin, base:base + cin] = pad_ref[n:n + hin, 0:cin]
        return (slab0 + N) * _LANES                   # total K written

    def conv(v, hin, w_ref, b_ref, activate):
        k = im2col(v, hin, 0)
        y = jnp.dot(cols_ref[0:hin, 0:k], w_ref[...],     # single MXU dot
                    preferred_element_type=jnp.float32)
        y = y + b_ref[...]
        if activate:
            y = jnp.where(y >= 0.0, y, 0.2 * y)            # LeakyReLU(0.2)
        return y

    def maxpool2(v):              # MaxPool2d((2, 1)) over the frequency axis
        hv, c = v.shape
        pad_ref[0:hv, 0:c] = v
        for k in range(hv // 2):
            tmp_ref[k:k + 1, 0:c] = jnp.maximum(
                pad_ref[2 * k:2 * k + 1, 0:c],
                pad_ref[2 * k + 1:2 * k + 2, 0:c])
        return tmp_ref[0:hv // 2, 0:c]

    def upsample2(v):             # Upsample(scale_factor=(2, 1)), nearest
        hv, c = v.shape
        pad_ref[0:hv, 0:c] = v
        for k in range(hv):
            row = pad_ref[k:k + 1, 0:c]
            tmp_ref[2 * k:2 * k + 1, 0:c] = row
            tmp_ref[2 * k + 1:2 * k + 2, 0:c] = row
        return tmp_ref[0:2 * hv, 0:c]

    x = x_ref[...].astype(jnp.float32)                     # (H, Cin)

    # ------------------------------ encoder ------------------------------
    e1 = conv(x, Hp, en1_w, en1_b, True)                   # (Hp,   F)
    e2 = conv(e1, Hp, en2_w, en2_b, True)                  # (Hp,   F)
    e3 = conv(maxpool2(e2), Hp // 2, en3_w, en3_b, True)   # (Hp/2, 2F)
    e4 = conv(e3, Hp // 2, en4_w, en4_b, True)             # (Hp/2, 2F)
    p2 = maxpool2(e4)                                      # (L,    2F)

    # --------------------- ConvLSTM cell (one time step) ------------------
    # TODO(synk): the ConvLSTM class is not in the reference source; a
    # standard 1-D ConvLSTM cell (i,f,g,o gates from kernel-N causal 'same'
    # convs, bias=False, dropout inert at inference) is assumed.
    h_prev = h0_ref[...].astype(jnp.float32)               # (L, F)
    c_prev = c0_ref[...].astype(jnp.float32)
    im2col(p2, L, 0)                                       # input-conv slabs
    k = im2col(h_prev, L, N)                               # recurrent slabs
    g = jnp.dot(cols_ref[0:L, 0:k], lstm_w[...],           # fused Wx|Wh dot
                preferred_element_type=jnp.float32)        # (L, 4F)
    sg = jax.nn.sigmoid(g)                                 # full-slab EUP pass
    tg = jnp.tanh(g)
    c_new = sg[:, F:2 * F] * c_prev + sg[:, 0:F] * tg[:, 2 * F:3 * F]
    h_new = sg[:, 3 * F:4 * F] * jnp.tanh(c_new)
    h_out_ref[...] = h_new.astype(h_out_ref.dtype)
    c_out_ref[...] = c_new.astype(c_out_ref.dtype)

    # ------------------------------ decoder ------------------------------
    d1 = conv(upsample2(h_new), Hp // 2, de1_w, de1_b, True)   # (Hp/2, 2F)
    d2 = conv(d1, Hp // 2, de2_w, de2_b, True)                 # (Hp/2, 2F)
    d3 = conv(upsample2(d2 + e4), Hp, de3_w, de3_b, True)      # (Hp,   F)
    d4 = conv(d3, Hp, de4_w, de4_b, True)                      # (Hp,   F)
    out = conv(d4 + e2, Hp, out_w, out_b, False)               # (Hp,   Cout)
    out = out[0:H, :]                        # == [:, :, :-3, :] in NCHW

    # ----------------- complex-ratio-mask application ---------------------
    # tanh(|m|)*|y|*cos/sin(atan2(m)+atan2(y)) rewritten algebraically as
    # scale*(r_hat*r - i_hat*i) / scale*(i_hat*r + r_hat*i) with
    # scale = tanh(|m|)/|m|  (avoids atan2/cos/sin; EUP only).
    r = x[:, 2:3]
    im = x[:, 3:4]
    i_hat = x[:, 1:2]            # (sic) reference takes i_hat from noisy ch 1
    r_hat = out[:, 0:1]
    m1 = jnp.sqrt(r_hat * r_hat + i_hat * i_hat)
    scale = jnp.where(m1 > 0.0, jnp.tanh(m1) / m1, 1.0)
    real_ref[...] = (scale * (r_hat * r - i_hat * im)).astype(real_ref.dtype)
    imag_ref[...] = (scale * (i_hat * r + r_hat * im)).astype(imag_ref.dtype)


# ------------------------------ host wrapper ------------------------------

def _pack_conv_w(w):
    """(N, Cin, Cout) -> (N*128, Cout); each tap's Cin rows start at a
    128-row boundary so in-kernel im2col stores stay lane-aligned."""
    n, cin, cout = w.shape
    wp = jnp.zeros((n, _LANES, cout), w.dtype).at[:, :cin, :].set(w)
    return wp.reshape(n * _LANES, cout)


def fcrn_forward(x_nchw, params, F, N, rnn_state=None):
    """x_nchw: (B, Cin, H, 1).  Returns (est (B,2,H,1), (h, c))."""
    B, Cin, H, W = x_nchw.shape
    assert W == 1, "streaming model: one time frame per forward call"
    Hp = H + 3
    assert Hp % 4 == 0, "H + 3 must be divisible by 4 (two 2x max-pools)"
    L = Hp // 4

    x = jnp.transpose(x_nchw[:, :, :, 0], (0, 2, 1)).astype(jnp.float32)
    if rnn_state is None:
        h_prev = jnp.zeros((B, L, F), jnp.float32)
        c_prev = jnp.zeros((B, L, F), jnp.float32)
    else:
        h_prev, c_prev = rnn_state

    wf = lambda n: _pack_conv_w(params[n])
    bf = lambda n: params[n].reshape(1, -1)
    lstm_w = jnp.concatenate([wf('lstm_wx'), wf('lstm_wh')], axis=0)

    weight_args = [
        wf('en1_w'), bf('en1_b'), wf('en2_w'), bf('en2_b'),
        wf('en3_w'), bf('en3_b'), wf('en4_w'), bf('en4_b'),
        lstm_w,
        wf('de1_w'), bf('de1_b'), wf('de2_w'), bf('de2_b'),
        wf('de3_w'), bf('de3_b'), wf('de4_w'), bf('de4_b'),
        wf('out_w'), bf('out_b'),
    ]

    kern = functools.partial(_fcrn_kernel, N=N, F=F, H=H)
    real, imag, h_new, c_new = pl.pallas_call(
        kern,
        out_shape=(jax.ShapeDtypeStruct((B, H, 1), jnp.float32),
                   jax.ShapeDtypeStruct((B, H, 1), jnp.float32),
                   jax.ShapeDtypeStruct((B, L, F), jnp.float32),
                   jax.ShapeDtypeStruct((B, L, F), jnp.float32)),
        grid=(B,),
        in_specs=(
            [pl.BlockSpec((None, H, Cin), lambda b: (b, 0, 0)),
             pl.BlockSpec((None, L, F), lambda b: (b, 0, 0)),
             pl.BlockSpec((None, L, F), lambda b: (b, 0, 0))]
            + [pl.BlockSpec(w.shape, lambda b: (0, 0)) for w in weight_args]
        ),
        out_specs=[
            pl.BlockSpec((None, H, 1), lambda b: (b, 0, 0)),
            pl.BlockSpec((None, H, 1), lambda b: (b, 0, 0)),
            pl.BlockSpec((None, L, F), lambda b: (b, 0, 0)),
            pl.BlockSpec((None, L, F), lambda b: (b, 0, 0)),
        ],
        scratch_shapes=[
            pltpu.VMEM((Hp + N - 1, max(Cin, 2 * F)), jnp.float32),  # pad
            pltpu.VMEM((Hp, 2 * N * _LANES), jnp.float32),           # im2col
            pltpu.VMEM((Hp, 2 * F), jnp.float32),                    # pool/up
        ],
        compiler_params=pltpu.CompilerParams(
            dimension_semantics=("parallel",)),   # v7x: one batch elem per TC
    )(x, h_prev, c_prev, *weight_args)

    est = jnp.concatenate([real[:, None, :, :], imag[:, None, :, :]], axis=1)
    return est, (h_new, c_new)                          # est: (B, 2, H, 1)


def init_params(key, in_channels, out_channels, F, N):
    shapes = {
        'en1_w': (N, in_channels, F), 'en1_b': (F,),
        'en2_w': (N, F, F), 'en2_b': (F,),
        'en3_w': (N, F, 2 * F), 'en3_b': (2 * F,),
        'en4_w': (N, 2 * F, 2 * F), 'en4_b': (2 * F,),
        'lstm_wx': (N, 2 * F, 4 * F),          # ConvLSTM input conv, bias=False
        'lstm_wh': (N, F, 4 * F),              # ConvLSTM recurrent conv, bias=False
        'de1_w': (N, F, 2 * F), 'de1_b': (2 * F,),
        'de2_w': (N, 2 * F, 2 * F), 'de2_b': (2 * F,),
        'de3_w': (N, 2 * F, F), 'de3_b': (F,),
        'de4_w': (N, F, F), 'de4_b': (F,),
        'out_w': (N, F, out_channels), 'out_b': (out_channels,),
    }
    params = {}
    keys = jax.random.split(key, len(shapes))
    for k, (name, shp) in zip(keys, sorted(shapes.items())):
        params[name] = 0.1 * jax.random.normal(k, shp, jnp.float32)
    return params


# -------------------- pure-JAX reference (validation) ---------------------

def _ref_forward(x_nchw, params, F, N, rnn_state=None):
    B, Cin, H, _ = x_nchw.shape
    Hp, L = H + 3, (H + 3) // 4
    hi = jax.lax.Precision.HIGHEST
    x = jnp.transpose(x_nchw[:, :, :, 0], (0, 2, 1)).astype(jnp.float32)

    def conv(v, w, b, act, hout=None):
        hv = v.shape[1]
        hout = hv if hout is None else hout
        vp = jnp.pad(v, ((0, 0), (0, hout + N - 1 - hv), (0, 0)))
        y = sum(jnp.einsum('bhc,cd->bhd', vp[:, n:n + hout, :], w[n],
                           precision=hi) for n in range(N))
        if b is not None:
            y = y + b
        return jnp.where(y >= 0, y, 0.2 * y) if act else y

    pool = lambda v: v.reshape(v.shape[0], v.shape[1] // 2, 2, v.shape[2]).max(2)
    up = lambda v: jnp.repeat(v, 2, axis=1)

    e1 = conv(x, params['en1_w'], params['en1_b'], True, hout=Hp)
    e2 = conv(e1, params['en2_w'], params['en2_b'], True)
    e3 = conv(pool(e2), params['en3_w'], params['en3_b'], True)
    e4 = conv(e3, params['en4_w'], params['en4_b'], True)
    p2 = pool(e4)
    if rnn_state is None:
        h_prev = jnp.zeros((B, L, F), jnp.float32)
        c_prev = jnp.zeros((B, L, F), jnp.float32)
    else:
        h_prev, c_prev = rnn_state
    g = (conv(p2, params['lstm_wx'], None, False)
         + conv(h_prev, params['lstm_wh'], None, False))
    sg, tg = jax.nn.sigmoid(g), jnp.tanh(g)
    c_new = sg[..., F:2 * F] * c_prev + sg[..., 0:F] * tg[..., 2 * F:3 * F]
    h_new = sg[..., 3 * F:4 * F] * jnp.tanh(c_new)
    d1 = conv(up(h_new), params['de1_w'], params['de1_b'], True)
    d2 = conv(d1, params['de2_w'], params['de2_b'], True)
    d3 = conv(up(d2 + e4), params['de3_w'], params['de3_b'], True)
    d4 = conv(d3, params['de4_w'], params['de4_b'], True)
    out = conv(d4 + e2, params['out_w'], params['out_b'], False)[:, :H, :]

    r, i = x[..., 2], x[..., 3]
    r_hat, i_hat = out[..., 0], x[..., 1]
    mag = jnp.tanh(jnp.sqrt(r_hat ** 2 + i_hat ** 2)) * jnp.sqrt(r ** 2 + i ** 2)
    phase = jnp.arctan2(i_hat, r_hat) + jnp.arctan2(i, r)
    est = jnp.stack([mag * jnp.cos(phase), mag * jnp.sin(phase)], axis=1)[..., None]
    return est, (h_new, c_new)


if __name__ == "__main__":
    B, Cin, Cout, F, N, H = 2, 4, 2, 16, 4, 13    # H+3=16 -> 8 -> 4 after pools
    key = jax.random.PRNGKey(0)
    kx, kp = jax.random.split(key)
    x = jax.random.normal(kx, (B, Cin, H, 1), jnp.float32)
    params = init_params(kp, Cin, Cout, F, N)

    fwd = jax.jit(functools.partial(fcrn_forward, F=F, N=N))
    est, state = fwd(x, params)
    jax.block_until_ready(est)
    assert est.shape == (B, 2, H, 1)

    est_r, state_r = _ref_forward(x, params, F, N)
    err = float(jnp.max(jnp.abs(est - est_r)))
    assert bool(jnp.all(jnp.isfinite(est))), "non-finite output"
    assert jnp.allclose(est, est_r, rtol=5e-2, atol=5e-2), f"est mismatch {err}"
    assert jnp.allclose(state[0], state_r[0], rtol=5e-2, atol=5e-2), "h mismatch"
    assert jnp.allclose(state[1], state_r[1], rtol=5e-2, atol=5e-2), "c mismatch"
    print("KERNEL_OK")
</pallas_src>

<mosaic_0001>
module attributes {stable_mosaic.version = 11 : i64} {
  func.func @_fcrn_kernel(%arg0: i32, %arg1: memref<1x13x4xf32, #tpu.memory_space<vmem>>, %arg2: memref<1x4x16xf32, #tpu.memory_space<vmem>>, %arg3: memref<1x4x16xf32, #tpu.memory_space<vmem>>, %arg4: memref<512x16xf32, #tpu.memory_space<vmem>>, %arg5: memref<1x16xf32, #tpu.memory_space<vmem>>, %arg6: memref<512x16xf32, #tpu.memory_space<vmem>>, %arg7: memref<1x16xf32, #tpu.memory_space<vmem>>, %arg8: memref<512x32xf32, #tpu.memory_space<vmem>>, %arg9: memref<1x32xf32, #tpu.memory_space<vmem>>, %arg10: memref<512x32xf32, #tpu.memory_space<vmem>>, %arg11: memref<1x32xf32, #tpu.memory_space<vmem>>, %arg12: memref<1024x64xf32, #tpu.memory_space<vmem>>, %arg13: memref<512x32xf32, #tpu.memory_space<vmem>>, %arg14: memref<1x32xf32, #tpu.memory_space<vmem>>, %arg15: memref<512x32xf32, #tpu.memory_space<vmem>>, %arg16: memref<1x32xf32, #tpu.memory_space<vmem>>, %arg17: memref<512x16xf32, #tpu.memory_space<vmem>>, %arg18: memref<1x16xf32, #tpu.memory_space<vmem>>, %arg19: memref<512x16xf32, #tpu.memory_space<vmem>>, %arg20: memref<1x16xf32, #tpu.memory_space<vmem>>, %arg21: memref<512x2xf32, #tpu.memory_space<vmem>>, %arg22: memref<1x2xf32, #tpu.memory_space<vmem>>, %arg23: memref<1x13x1xf32, #tpu.memory_space<vmem>>, %arg24: memref<1x13x1xf32, #tpu.memory_space<vmem>>, %arg25: memref<1x4x16xf32, #tpu.memory_space<vmem>>, %arg26: memref<1x4x16xf32, #tpu.memory_space<vmem>>, %arg27: memref<19x32xf32, #tpu.memory_space<vmem>>, %arg28: memref<16x1024xf32, #tpu.memory_space<vmem>>, %arg29: memref<16x32xf32, #tpu.memory_space<vmem>>) attributes {dimension_semantics = [#tpu.dimension_semantics<parallel>], iteration_bounds = array<i64: 2>, scalar_prefetch = 0 : i64, scratch_operands = 3 : i64, tpu.core_type = #tpu.core_type<tc>, window_params = [{transform_indices = @transform_0, window_bounds = array<i64: 1, 13, 4>}, {transform_indices = @transform_1, window_bounds = array<i64: 1, 4, 16>}, {transform_indices = @transform_2, window_bounds = array<i64: 1, 4, 16>}, {pipeline_mode = #tpu.pipeline_mode<synchronous>, transform_indices = @transform_3, window_bounds = array<i64: 512, 16>}, {pipeline_mode = #tpu.pipeline_mode<synchronous>, transform_indices = @transform_4, window_bounds = array<i64: 1, 16>}, {pipeline_mode = #tpu.pipeline_mode<synchronous>, transform_indices = @transform_5, window_bounds = array<i64: 512, 16>}, {pipeline_mode = #tpu.pipeline_mode<synchronous>, transform_indices = @transform_6, window_bounds = array<i64: 1, 16>}, {pipeline_mode = #tpu.pipeline_mode<synchronous>, transform_indices = @transform_7, window_bounds = array<i64: 512, 32>}, {pipeline_mode = #tpu.pipeline_mode<synchronous>, transform_indices = @transform_8, window_bounds = array<i64: 1, 32>}, {pipeline_mode = #tpu.pipeline_mode<synchronous>, transform_indices = @transform_9, window_bounds = array<i64: 512, 32>}, {pipeline_mode = #tpu.pipeline_mode<synchronous>, transform_indices = @transform_10, window_bounds = array<i64: 1, 32>}, {pipeline_mode = #tpu.pipeline_mode<synchronous>, transform_indices = @transform_11, window_bounds = array<i64: 1024, 64>}, {pipeline_mode = #tpu.pipeline_mode<synchronous>, transform_indices = @transform_12, window_bounds = array<i64: 512, 32>}, {pipeline_mode = #tpu.pipeline_mode<synchronous>, transform_indices = @transform_13, window_bounds = array<i64: 1, 32>}, {pipeline_mode = #tpu.pipeline_mode<synchronous>, transform_indices = @transform_14, window_bounds = array<i64: 512, 32>}, {pipeline_mode = #tpu.pipeline_mode<synchronous>, transform_indices = @transform_15, window_bounds = array<i64: 1, 32>}, {pipeline_mode = #tpu.pipeline_mode<synchronous>, transform_indices = @transform_16, window_bounds = array<i64: 512, 16>}, {pipeline_mode = #tpu.pipeline_mode<synchronous>, transform_indices = @transform_17, window_bounds = array<i64: 1, 16>}, {pipeline_mode = #tpu.pipeline_mode<synchronous>, transform_indices = @transform_18, window_bounds = array<i64: 512, 16>}, {pipeline_mode = #tpu.pipeline_mode<synchronous>, transform_indices = @transform_19, window_bounds = array<i64: 1, 16>}, {pipeline_mode = #tpu.pipeline_mode<synchronous>, transform_indices = @transform_20, window_bounds = array<i64: 512, 2>}, {pipeline_mode = #tpu.pipeline_mode<synchronous>, transform_indices = @transform_21, window_bounds = array<i64: 1, 2>}, {transform_indices = @transform_22, window_bounds = array<i64: 1, 13, 1>}, {transform_indices = @transform_23, window_bounds = array<i64: 1, 13, 1>}, {transform_indices = @transform_24, window_bounds = array<i64: 1, 4, 16>}, {transform_indices = @transform_25, window_bounds = array<i64: 1, 4, 16>}]} {
    %cst = arith.constant 0.000000e+00 : f32
    %0 = vector.broadcast %cst : f32 to vector<16x1024xf32>
    %c0 = arith.constant 0 : index
    %c0_0 = arith.constant 0 : index
    %1 = vector.load %arg28[%c0, %c0_0] : memref<16x1024xf32, #tpu.memory_space<vmem>>, vector<16x1024xf32>
    tpu.vector_store %arg28[%c0, %c0_0], %0 {strides = array<i32>} : memref<16x1024xf32, #tpu.memory_space<vmem>>, vector<16x1024xf32>,
    %c0_1 = arith.constant 0 : index
    %c0_2 = arith.constant 0 : index
    %c0_3 = arith.constant 0 : index
    %2 = vector.load %arg1[%c0_1, %c0_2, %c0_3] : memref<1x13x4xf32, #tpu.memory_space<vmem>>, vector<1x13x4xf32>
    %3 = vector.shape_cast %2 : vector<1x13x4xf32> to vector<13x4xf32>
    %cst_4 = arith.constant 0.000000e+00 : f32
    %4 = vector.broadcast %cst_4 : f32 to vector<19x32xf32>
    %c0_5 = arith.constant 0 : index
    %c0_6 = arith.constant 0 : index
    %5 = vector.load %arg27[%c0_5, %c0_6] : memref<19x32xf32, #tpu.memory_space<vmem>>, vector<19x32xf32>
    tpu.vector_store %arg27[%c0_5, %c0_6], %4 {strides = array<i32>} : memref<19x32xf32, #tpu.memory_space<vmem>>, vector<19x32xf32>,
    %c0_7 = arith.constant 0 : index
    %c0_8 = arith.constant 0 : index
    %6 = vector.load %arg27[%c0_7, %c0_8] : memref<19x32xf32, #tpu.memory_space<vmem>>, vector<13x4xf32>
    tpu.vector_store %arg27[%c0_7, %c0_8], %3 {strides = array<i32>} : memref<19x32xf32, #tpu.memory_space<vmem>>, vector<13x4xf32>,
    %c0_9 = arith.constant 0 : index
    %c0_10 = arith.constant 0 : index
    %7 = vector.load %arg27[%c0_9, %c0_10] : memref<19x32xf32, #tpu.memory_space<vmem>>, vector<16x4xf32>
    %c0_11 = arith.constant 0 : index
    %c0_12 = arith.constant 0 : index
    %8 = vector.load %arg28[%c0_11, %c0_12] : memref<16x1024xf32, #tpu.memory_space<vmem>>, vector<16x4xf32>
    tpu.vector_store %arg28[%c0_11, %c0_12], %7 {strides = array<i32>} : memref<16x1024xf32, #tpu.memory_space<vmem>>, vector<16x4xf32>,
    %c1 = arith.constant 1 : index
    %c0_13 = arith.constant 0 : index
    %9 = vector.load %arg27[%c1, %c0_13] : memref<19x32xf32, #tpu.memory_space<vmem>>, vector<16x4xf32>
    %c0_14 = arith.constant 0 : index
    %c128 = arith.constant 128 : index
    %10 = vector.load %arg28[%c0_14, %c128] : memref<16x1024xf32, #tpu.memory_space<vmem>>, vector<16x4xf32>
    tpu.vector_store %arg28[%c0_14, %c128], %9 {strides = array<i32>} : memref<16x1024xf32, #tpu.memory_space<vmem>>, vector<16x4xf32>,
    %c2 = arith.constant 2 : index
    %c0_15 = arith.constant 0 : index
    %11 = vector.load %arg27[%c2, %c0_15] : memref<19x32xf32, #tpu.memory_space<vmem>>, vector<16x4xf32>
    %c0_16 = arith.constant 0 : index
    %c256 = arith.constant 256 : index
    %12 = vector.load %arg28[%c0_16, %c256] : memref<16x1024xf32, #tpu.memory_space<vmem>>, vector<16x4xf32>
    tpu.vector_store %arg28[%c0_16, %c256], %11 {strides = array<i32>} : memref<16x1024xf32, #tpu.memory_space<vmem>>, vector<16x4xf32>,
    %c3 = arith.constant 3 : index
    %c0_17 = arith.constant 0 : index
    %13 = vector.load %arg27[%c3, %c0_17] : memref<19x32xf32, #tpu.memory_space<vmem>>, vector<16x4xf32>
    %c0_18 = arith.constant 0 : index
    %c384 = arith.constant 384 : index
    %14 = vector.load %arg28[%c0_18, %c384] : memref<16x1024xf32, #tpu.memory_space<vmem>>, vector<16x4xf32>
    tpu.vector_store %arg28[%c0_18, %c384], %13 {strides = array<i32>} : memref<16x1024xf32, #tpu.memory_space<vmem>>, vector<16x4xf32>,
    %c0_19 = arith.constant 0 : index
    %c0_20 = arith.constant 0 : index
    %15 = vector.load %arg28[%c0_19, %c0_20] : memref<16x1024xf32, #tpu.memory_space<vmem>>, vector<16x512xf32>
    %c0_21 = arith.constant 0 : index
    %c0_22 = arith.constant 0 : index
    %16 = vector.load %arg4[%c0_21, %c0_22] : memref<512x16xf32, #tpu.memory_space<vmem>>, vector<512x16xf32>
    %cst_23 = arith.constant dense<0.000000e+00> : vector<16x16xf32>
    %17 = tpu.matmul %15, %16, %cst_23 {dimension_numbers = #tpu.dot_dimension_numbers<[1], [0], [0], [1], [0, 0, 1, 1], [], []>} : vector<16x512xf32>, vector<512x16xf32>, vector<16x16xf32> -> vector<16x16xf32>
    %c0_24 = arith.constant 0 : index
    %c0_25 = arith.constant 0 : index
    %18 = vector.load %arg5[%c0_24, %c0_25] : memref<1x16xf32, #tpu.memory_space<vmem>>, vector<1x16xf32>
    %19 = vector.broadcast %18 : vector<1x16xf32> to vector<16x16xf32>
    %20 = arith.addf %17, %19 : vector<16x16xf32>
    %cst_26 = arith.constant 0.000000e+00 : f32
    %21 = vector.broadcast %cst_26 : f32 to vector<16x16xf32>
    %22 = arith.cmpf oge, %20, %21 : vector<16x16xf32>
    %cst_27 = arith.constant 2.000000e-01 : f32
    %23 = vector.broadcast %cst_27 : f32 to vector<16x16xf32>
    %24 = arith.mulf %23, %20 : vector<16x16xf32>
    %25 = arith.select %22, %20, %24 : vector<16x16xi1>, vector<16x16xf32>
    %cst_28 = arith.constant 0.000000e+00 : f32
    %26 = vector.broadcast %cst_28 : f32 to vector<19x32xf32>
    %c0_29 = arith.constant 0 : index
    %c0_30 = arith.constant 0 : index
    %27 = vector.load %arg27[%c0_29, %c0_30] : memref<19x32xf32, #tpu.memory_space<vmem>>, vector<19x32xf32>
    tpu.vector_store %arg27[%c0_29, %c0_30], %26 {strides = array<i32>} : memref<19x32xf32, #tpu.memory_space<vmem>>, vector<19x32xf32>,
    %c0_31 = arith.constant 0 : index
    %c0_32 = arith.constant 0 : index
    %28 = vector.load %arg27[%c0_31, %c0_32] : memref<19x32xf32, #tpu.memory_space<vmem>>, vector<16x16xf32>
    tpu.vector_store %arg27[%c0_31, %c0_32], %25 {strides = array<i32>} : memref<19x32xf32, #tpu.memory_space<vmem>>, vector<16x16xf32>,
    %c0_33 = arith.constant 0 : index
    %c0_34 = arith.constant 0 : index
    %29 = vector.load %arg27[%c0_33, %c0_34] : memref<19x32xf32, #tpu.memory_space<vmem>>, vector<16x16xf32>
    %c0_35 = arith.constant 0 : index
    %c0_36 = arith.constant 0 : index
    %30 = vector.load %arg28[%c0_35, %c0_36] : memref<16x1024xf32, #tpu.memory_space<vmem>>, vector<16x16xf32>
    tpu.vector_store %arg28[%c0_35, %c0_36], %29 {strides = array<i32>} : memref<16x1024xf32, #tpu.memory_space<vmem>>, vector<16x16xf32>,
    %c1_37 = arith.constant 1 : index
    %c0_38 = arith.constant 0 : index
    %31 = vector.load %arg27[%c1_37, %c0_38] : memref<19x32xf32, #tpu.memory_space<vmem>>, vector<16x16xf32>
    %c0_39 = arith.constant 0 : index
    %c128_40 = arith.constant 128 : index
    %32 = vector.load %arg28[%c0_39, %c128_40] : memref<16x1024xf32, #tpu.memory_space<vmem>>, vector<16x16xf32>
    tpu.vector_store %arg28[%c0_39, %c128_40], %31 {strides = array<i32>} : memref<16x1024xf32, #tpu.memory_space<vmem>>, vector<16x16xf32>,
    %c2_41 = arith.constant 2 : index
    %c0_42 = arith.constant 0 : index
    %33 = vector.load %arg27[%c2_41, %c0_42] : memref<19x32xf32, #tpu.memory_space<vmem>>, vector<16x16xf32>
    %c0_43 = arith.constant 0 : index
    %c256_44 = arith.constant 256 : index
    %34 = vector.load %arg28[%c0_43, %c256_44] : memref<16x1024xf32, #tpu.memory_space<vmem>>, vector<16x16xf32>
    tpu.vector_store %arg28[%c0_43, %c256_44], %33 {strides = array<i32>} : memref<16x1024xf32, #tpu.memory_space<vmem>>, vector<16x16xf32>,
    %c3_45 = arith.constant 3 : index
    %c0_46 = arith.constant 0 : index
    %35 = vector.load %arg27[%c3_45, %c0_46] : memref<19x32xf32, #tpu.memory_space<vmem>>, vector<16x16xf32>
    %c0_47 = arith.constant 0 : index
    %c384_48 = arith.constant 384 : index
    %36 = vector.load %arg28[%c0_47, %c384_48] : memref<16x1024xf32, #tpu.memory_space<vmem>>, vector<16x16xf32>
    tpu.vector_store %arg28[%c0_47, %c384_48], %35 {strides = array<i32>} : memref<16x1024xf32, #tpu.memory_space<vmem>>, vector<16x16xf32>,
    %c0_49 = arith.constant 0 : index
    %c0_50 = arith.constant 0 : index
    %37 = vector.load %arg28[%c0_49, %c0_50] : memref<16x1024xf32, #tpu.memory_space<vmem>>, vector<16x512xf32>
    %c0_51 = arith.constant 0 : index
    %c0_52 = arith.constant 0 : index
    %38 = vector.load %arg6[%c0_51, %c0_52] : memref<512x16xf32, #tpu.memory_space<vmem>>, vector<512x16xf32>
    %cst_53 = arith.constant dense<0.000000e+00> : vector<16x16xf32>
    %39 = tpu.matmul %37, %38, %cst_53 {dimension_numbers = #tpu.dot_dimension_numbers<[1], [0], [0], [1], [0, 0, 1, 1], [], []>} : vector<16x512xf32>, vector<512x16xf32>, vector<16x16xf32> -> vector<16x16xf32>
    %c0_54 = arith.constant 0 : index
    %c0_55 = arith.constant 0 : index
    %40 = vector.load %arg7[%c0_54, %c0_55] : memref<1x16xf32, #tpu.memory_space<vmem>>, vector<1x16xf32>
    %41 = vector.broadcast %40 : vector<1x16xf32> to vector<16x16xf32>
    %42 = arith.addf %39, %41 : vector<16x16xf32>
    %cst_56 = arith.constant 0.000000e+00 : f32
    %43 = vector.broadcast %cst_56 : f32 to vector<16x16xf32>
    %44 = arith.cmpf oge, %42, %43 : vector<16x16xf32>
    %cst_57 = arith.constant 2.000000e-01 : f32
    %45 = vector.broadcast %cst_57 : f32 to vector<16x16xf32>
    %46 = arith.mulf %45, %42 : vector<16x16xf32>
    %47 = arith.select %44, %42, %46 : vector<16x16xi1>, vector<16x16xf32>
    %c0_58 = arith.constant 0 : index
    %c0_59 = arith.constant 0 : index
    %48 = vector.load %arg27[%c0_58, %c0_59] : memref<19x32xf32, #tpu.memory_space<vmem>>, vector<16x16xf32>
    tpu.vector_store %arg27[%c0_58, %c0_59], %47 {strides = array<i32>} : memref<19x32xf32, #tpu.memory_space<vmem>>, vector<16x16xf32>,
    %c0_60 = arith.constant 0 : index
    %c0_61 = arith.constant 0 : index
    %49 = vector.load %arg27[%c0_60, %c0_61] : memref<19x32xf32, #tpu.memory_space<vmem>>, vector<1x16xf32>
    %c1_62 = arith.constant 1 : index
    %c0_63 = arith.constant 0 : index
    %50 = vector.load %arg27[%c1_62, %c0_63] : memref<19x32xf32, #tpu.memory_space<vmem>>, vector<1x16xf32>
    %51 = arith.maximumf %49, %50 : vector<1x16xf32>
    %c0_64 = arith.constant 0 : index
    %c0_65 = arith.constant 0 : index
    %52 = vector.load %arg29[%c0_64, %c0_65] : memref<16x32xf32, #tpu.memory_space<vmem>>, vector<1x16xf32>
    tpu.vector_store %arg29[%c0_64, %c0_65], %51 {strides = array<i32>} : memref<16x32xf32, #tpu.memory_space<vmem>>, vector<1x16xf32>,
    %c2_66 = arith.constant 2 : index
    %c0_67 = arith.constant 0 : index
    %53 = vector.load %arg27[%c2_66, %c0_67] : memref<19x32xf32, #tpu.memory_space<vmem>>, vector<1x16xf32>
    %c3_68 = arith.constant 3 : index
    %c0_69 = arith.constant 0 : index
    %54 = vector.load %arg27[%c3_68, %c0_69] : memref<19x32xf32, #tpu.memory_space<vmem>>, vector<1x16xf32>
    %55 = arith.maximumf %53, %54 : vector<1x16xf32>
    %c1_70 = arith.constant 1 : index
    %c0_71 = arith.constant 0 : index
    %56 = vector.load %arg29[%c1_70, %c0_71] : memref<16x32xf32, #tpu.memory_space<vmem>>, vector<1x16xf32>
    tpu.vector_store %arg29[%c1_70, %c0_71], %55 {strides = array<i32>} : memref<16x32xf32, #tpu.memory_space<vmem>>, vector<1x16xf32>,
    %c4 = arith.constant 4 : index
    %c0_72 = arith.constant 0 : index
    %57 = vector.load %arg27[%c4, %c0_72] : memref<19x32xf32, #tpu.memory_space<vmem>>, vector<1x16xf32>
    %c5 = arith.constant 5 : index
    %c0_73 = arith.constant 0 : index
    %58 = vector.load %arg27[%c5, %c0_73] : memref<19x32xf32, #tpu.memory_space<vmem>>, vector<1x16xf32>
    %59 = arith.maximumf %57, %58 : vector<1x16xf32>
    %c2_74 = arith.constant 2 : index
    %c0_75 = arith.constant 0 : index
    %60 = vector.load %arg29[%c2_74, %c0_75] : memref<16x32xf32, #tpu.memory_space<vmem>>, vector<1x16xf32>
    tpu.vector_store %arg29[%c2_74, %c0_75], %59 {strides = array<i32>} : memref<16x32xf32, #tpu.memory_space<vmem>>, vector<1x16xf32>,
    %c6 = arith.constant 6 : index
    %c0_76 = arith.constant 0 : index
    %61 = vector.load %arg27[%c6, %c0_76] : memref<19x32xf32, #tpu.memory_space<vmem>>, vector<1x16xf32>
    %c7 = arith.constant 7 : index
    %c0_77 = arith.constant 0 : index
    %62 = vector.load %arg27[%c7, %c0_77] : memref<19x32xf32, #tpu.memory_space<vmem>>, vector<1x16xf32>
    %63 = arith.maximumf %61, %62 : vector<1x16xf32>
    %c3_78 = arith.constant 3 : index
    %c0_79 = arith.constant 0 : index
    %64 = vector.load %arg29[%c3_78, %c0_79] : memref<16x32xf32, #tpu.memory_space<vmem>>, vector<1x16xf32>
    tpu.vector_store %arg29[%c3_78, %c0_79], %63 {strides = array<i32>} : memref<16x32xf32, #tpu.memory_space<vmem>>, vector<1x16xf32>,
    %c8 = arith.constant 8 : index
    %c0_80 = arith.constant 0 : index
    %65 = vector.load %arg27[%c8, %c0_80] : memref<19x32xf32, #tpu.memory_space<vmem>>, vector<1x16xf32>
    %c9 = arith.constant 9 : index
    %c0_81 = arith.constant 0 : index
    %66 = vector.load %arg27[%c9, %c0_81] : memref<19x32xf32, #tpu.memory_space<vmem>>, vector<1x16xf32>
    %67 = arith.maximumf %65, %66 : vector<1x16xf32>
    %c4_82 = arith.constant 4 : index
    %c0_83 = arith.constant 0 : index
    %68 = vector.load %arg29[%c4_82, %c0_83] : memref<16x32xf32, #tpu.memory_space<vmem>>, vector<1x16xf32>
    tpu.vector_store %arg29[%c4_82, %c0_83], %67 {strides = array<i32>} : memref<16x32xf32, #tpu.memory_space<vmem>>, vector<1x16xf32>,
    %c10 = arith.constant 10 : index
    %c0_84 = arith.constant 0 : index
    %69 = vector.load %arg27[%c10, %c0_84] : memref<19x32xf32, #tpu.memory_space<vmem>>, vector<1x16xf32>
    %c11 = arith.constant 11 : index
    %c0_85 = arith.constant 0 : index
    %70 = vector.load %arg27[%c11, %c0_85] : memref<19x32xf32, #tpu.memory_space<vmem>>, vector<1x16xf32>
    %71 = arith.maximumf %69, %70 : vector<1x16xf32>
    %c5_86 = arith.constant 5 : index
    %c0_87 = arith.constant 0 : index
    %72 = vector.load %arg29[%c5_86, %c0_87] : memref<16x32xf32, #tpu.memory_space<vmem>>, vector<1x16xf32>
    tpu.vector_store %arg29[%c5_86, %c0_87], %71 {strides = array<i32>} : memref<16x32xf32, #tpu.memory_space<vmem>>, vector<1x16xf32>,
    %c12 = arith.constant 12 : index
    %c0_88 = arith.constant 0 : index
    %73 = vector.load %arg27[%c12, %c0_88] : memref<19x32xf32, #tpu.memory_space<vmem>>, vector<1x16xf32>
    %c13 = arith.constant 13 : index
    %c0_89 = arith.constant 0 : index
    %74 = vector.load %arg27[%c13, %c0_89] : memref<19x32xf32, #tpu.memory_space<vmem>>, vector<1x16xf32>
    %75 = arith.maximumf %73, %74 : vector<1x16xf32>
    %c6_90 = arith.constant 6 : index
    %c0_91 = arith.constant 0 : index
    %76 = vector.load %arg29[%c6_90, %c0_91] : memref<16x32xf32, #tpu.memory_space<vmem>>, vector<1x16xf32>
    tpu.vector_store %arg29[%c6_90, %c0_91], %75 {strides = array<i32>} : memref<16x32xf32, #tpu.memory_space<vmem>>, vector<1x16xf32>,
    %c14 = arith.constant 14 : index
    %c0_92 = arith.constant 0 : index
    %77 = vector.load %arg27[%c14, %c0_92] : memref<19x32xf32, #tpu.memory_space<vmem>>, vector<1x16xf32>
    %c15 = arith.constant 15 : index
    %c0_93 = arith.constant 0 : index
    %78 = vector.load %arg27[%c15, %c0_93] : memref<19x32xf32, #tpu.memory_space<vmem>>, vector<1x16xf32>
    %79 = arith.maximumf %77, %78 : vector<1x16xf32>
    %c7_94 = arith.constant 7 : index
    %c0_95 = arith.constant 0 : index
    %80 = vector.load %arg29[%c7_94, %c0_95] : memref<16x32xf32, #tpu.memory_space<vmem>>, vector<1x16xf32>
    tpu.vector_store %arg29[%c7_94, %c0_95], %79 {strides = array<i32>} : memref<16x32xf32, #tpu.memory_space<vmem>>, vector<1x16xf32>,
    %c0_96 = arith.constant 0 : index
    %c0_97 = arith.constant 0 : index
    %81 = vector.load %arg29[%c0_96, %c0_97] : memref<16x32xf32, #tpu.memory_space<vmem>>, vector<8x16xf32>
    %cst_98 = arith.constant 0.000000e+00 : f32
    %82 = vector.broadcast %cst_98 : f32 to vector<19x32xf32>
    %c0_99 = arith.constant 0 : index
    %c0_100 = arith.constant 0 : index
    %83 = vector.load %arg27[%c0_99, %c0_100] : memref<19x32xf32, #tpu.memory_space<vmem>>, vector<19x32xf32>
    tpu.vector_store %arg27[%c0_99, %c0_100], %82 {strides = array<i32>} : memref<19x32xf32, #tpu.memory_space<vmem>>, vector<19x32xf32>,
    %c0_101 = arith.constant 0 : index
    %c0_102 = arith.constant 0 : index
    %84 = vector.load %arg27[%c0_101, %c0_102] : memref<19x32xf32, #tpu.memory_space<vmem>>, vector<8x16xf32>
    tpu.vector_store %arg27[%c0_101, %c0_102], %81 {strides = array<i32>} : memref<19x32xf32, #tpu.memory_space<vmem>>, vector<8x16xf32>,
    %c0_103 = arith.constant 0 : index
    %c0_104 = arith.constant 0 : index
    %85 = vector.load %arg27[%c0_103, %c0_104] : memref<19x32xf32, #tpu.memory_space<vmem>>, vector<8x16xf32>
    %c0_105 = arith.constant 0 : index
    %c0_106 = arith.constant 0 : index
    %86 = vector.load %arg28[%c0_105, %c0_106] : memref<16x1024xf32, #tpu.memory_space<vmem>>, vector<8x16xf32>
    tpu.vector_store %arg28[%c0_105, %c0_106], %85 {strides = array<i32>} : memref<16x1024xf32, #tpu.memory_space<vmem>>, vector<8x16xf32>,
    %c1_107 = arith.constant 1 : index
    %c0_108 = arith.constant 0 : index
    %87 = vector.load %arg27[%c1_107, %c0_108] : memref<19x32xf32, #tpu.memory_space<vmem>>, vector<8x16xf32>
    %c0_109 = arith.constant 0 : index
    %c128_110 = arith.constant 128 : index
    %88 = vector.load %arg28[%c0_109, %c128_110] : memref<16x1024xf32, #tpu.memory_space<vmem>>, vector<8x16xf32>
    tpu.vector_store %arg28[%c0_109, %c128_110], %87 {strides = array<i32>} : memref<16x1024xf32, #tpu.memory_space<vmem>>, vector<8x16xf32>,
    %c2_111 = arith.constant 2 : index
    %c0_112 = arith.constant 0 : index
    %89 = vector.load %arg27[%c2_111, %c0_112] : memref<19x32xf32, #tpu.memory_space<vmem>>, vector<8x16xf32>
    %c0_113 = arith.constant 0 : index
    %c256_114 = arith.constant 256 : index
    %90 = vector.load %arg28[%c0_113, %c256_114] : memref<16x1024xf32, #tpu.memory_space<vmem>>, vector<8x16xf32>
    tpu.vector_store %arg28[%c0_113, %c256_114], %89 {strides = array<i32>} : memref<16x1024xf32, #tpu.memory_space<vmem>>, vector<8x16xf32>,
    %c3_115 = arith.constant 3 : index
    %c0_116 = arith.constant 0 : index
    %91 = vector.load %arg27[%c3_115, %c0_116] : memref<19x32xf32, #tpu.memory_space<vmem>>, vector<8x16xf32>
    %c0_117 = arith.constant 0 : index
    %c384_118 = arith.constant 384 : index
    %92 = vector.load %arg28[%c0_117, %c384_118] : memref<16x1024xf32, #tpu.memory_space<vmem>>, vector<8x16xf32>
    tpu.vector_store %arg28[%c0_117, %c384_118], %91 {strides = array<i32>} : memref<16x1024xf32, #tpu.memory_space<vmem>>, vector<8x16xf32>,
    %c0_119 = arith.constant 0 : index
    %c0_120 = arith.constant 0 : index
    %93 = vector.load %arg28[%c0_119, %c0_120] : memref<16x1024xf32, #tpu.memory_space<vmem>>, vector<8x512xf32>
    %c0_121 = arith.constant 0 : index
    %c0_122 = arith.constant 0 : index
    %94 = vector.load %arg8[%c0_121, %c0_122] : memref<512x32xf32, #tpu.memory_space<vmem>>, vector<512x32xf32>
    %cst_123 = arith.constant dense<0.000000e+00> : vector<8x32xf32>
    %95 = tpu.matmul %93, %94, %cst_123 {dimension_numbers = #tpu.dot_dimension_numbers<[1], [0], [0], [1], [0, 0, 1, 1], [], []>} : vector<8x512xf32>, vector<512x32xf32>, vector<8x32xf32> -> vector<8x32xf32>
    %c0_124 = arith.constant 0 : index
    %c0_125 = arith.constant 0 : index
    %96 = vector.load %arg9[%c0_124, %c0_125] : memref<1x32xf32, #tpu.memory_space<vmem>>, vector<1x32xf32>
    %97 = vector.broadcast %96 : vector<1x32xf32> to vector<8x32xf32>
    %98 = arith.addf %95, %97 : vector<8x32xf32>
    %cst_126 = arith.constant 0.000000e+00 : f32
    %99 = vector.broadcast %cst_126 : f32 to vector<8x32xf32>
    %100 = arith.cmpf oge, %98, %99 : vector<8x32xf32>
    %cst_127 = arith.constant 2.000000e-01 : f32
    %101 = vector.broadcast %cst_127 : f32 to vector<8x32xf32>
    %102 = arith.mulf %101, %98 : vector<8x32xf32>
    %103 = arith.select %100, %98, %102 : vector<8x32xi1>, vector<8x32xf32>
    %cst_128 = arith.constant 0.000000e+00 : f32
    %104 = vector.broadcast %cst_128 : f32 to vector<19x32xf32>
    %c0_129 = arith.constant 0 : index
    %c0_130 = arith.constant 0 : index
    %105 = vector.load %arg27[%c0_129, %c0_130] : memref<19x32xf32, #tpu.memory_space<vmem>>, vector<19x32xf32>
    tpu.vector_store %arg27[%c0_129, %c0_130], %104 {strides = array<i32>} : memref<19x32xf32, #tpu.memory_space<vmem>>, vector<19x32xf32>,
    %c0_131 = arith.constant 0 : index
    %c0_132 = arith.constant 0 : index
    %106 = vector.load %arg27[%c0_131, %c0_132] : memref<19x32xf32, #tpu.memory_space<vmem>>, vector<8x32xf32>
    tpu.vector_store %arg27[%c0_131, %c0_132], %103 {strides = array<i32>} : memref<19x32xf32, #tpu.memory_space<vmem>>, vector<8x32xf32>,
    %c0_133 = arith.constant 0 : index
    %c0_134 = arith.constant 0 : index
    %107 = vector.load %arg27[%c0_133, %c0_134] : memref<19x32xf32, #tpu.memory_space<vmem>>, vector<8x32xf32>
    %c0_135 = arith.constant 0 : index
    %c0_136 = arith.constant 0 : index
    %108 = vector.load %arg28[%c0_135, %c0_136] : memref<16x1024xf32, #tpu.memory_space<vmem>>, vector<8x32xf32>
    tpu.vector_store %arg28[%c0_135, %c0_136], %107 {strides = array<i32>} : memref<16x1024xf32, #tpu.memory_space<vmem>>, vector<8x32xf32>,
    %c1_137 = arith.constant 1 : index
    %c0_138 = arith.constant 0 : index
    %109 = vector.load %arg27[%c1_137, %c0_138] : memref<19x32xf32, #tpu.memory_space<vmem>>, vector<8x32xf32>
    %c0_139 = arith.constant 0 : index
    %c128_140 = arith.constant 128 : index
    %110 = vector.load %arg28[%c0_139, %c128_140] : memref<16x1024xf32, #tpu.memory_space<vmem>>, vector<8x32xf32>
    tpu.vector_store %arg28[%c0_139, %c128_140], %109 {strides = array<i32>} : memref<16x1024xf32, #tpu.memory_space<vmem>>, vector<8x32xf32>,
    %c2_141 = arith.constant 2 : index
    %c0_142 = arith.constant 0 : index
    %111 = vector.load %arg27[%c2_141, %c0_142] : memref<19x32xf32, #tpu.memory_space<vmem>>, vector<8x32xf32>
    %c0_143 = arith.constant 0 : index
    %c256_144 = arith.constant 256 : index
    %112 = vector.load %arg28[%c0_143, %c256_144] : memref<16x1024xf32, #tpu.memory_space<vmem>>, vector<8x32xf32>
    tpu.vector_store %arg28[%c0_143, %c256_144], %111 {strides = array<i32>} : memref<16x1024xf32, #tpu.memory_space<vmem>>, vector<8x32xf32>,
    %c3_145 = arith.constant 3 : index
    %c0_146 = arith.constant 0 : index
    %113 = vector.load %arg27[%c3_145, %c0_146] : memref<19x32xf32, #tpu.memory_space<vmem>>, vector<8x32xf32>
    %c0_147 = arith.constant 0 : index
    %c384_148 = arith.constant 384 : index
    %114 = vector.load %arg28[%c0_147, %c384_148] : memref<16x1024xf32, #tpu.memory_space<vmem>>, vector<8x32xf32>
    tpu.vector_store %arg28[%c0_147, %c384_148], %113 {strides = array<i32>} : memref<16x1024xf32, #tpu.memory_space<vmem>>, vector<8x32xf32>,
    %c0_149 = arith.constant 0 : index
    %c0_150 = arith.constant 0 : index
    %115 = vector.load %arg28[%c0_149, %c0_150] : memref<16x1024xf32, #tpu.memory_space<vmem>>, vector<8x512xf32>
    %c0_151 = arith.constant 0 : index
    %c0_152 = arith.constant 0 : index
    %116 = vector.load %arg10[%c0_151, %c0_152] : memref<512x32xf32, #tpu.memory_space<vmem>>, vector<512x32xf32>
    %cst_153 = arith.constant dense<0.000000e+00> : vector<8x32xf32>
    %117 = tpu.matmul %115, %116, %cst_153 {dimension_numbers = #tpu.dot_dimension_numbers<[1], [0], [0], [1], [0, 0, 1, 1], [], []>} : vector<8x512xf32>, vector<512x32xf32>, vector<8x32xf32> -> vector<8x32xf32>
    %c0_154 = arith.constant 0 : index
    %c0_155 = arith.constant 0 : index
    %118 = vector.load %arg11[%c0_154, %c0_155] : memref<1x32xf32, #tpu.memory_space<vmem>>, vector<1x32xf32>
    %119 = vector.broadcast %118 : vector<1x32xf32> to vector<8x32xf32>
    %120 = arith.addf %117, %119 : vector<8x32xf32>
    %cst_156 = arith.constant 0.000000e+00 : f32
    %121 = vector.broadcast %cst_156 : f32 to vector<8x32xf32>
    %122 = arith.cmpf oge, %120, %121 : vector<8x32xf32>
    %cst_157 = arith.constant 2.000000e-01 : f32
    %123 = vector.broadcast %cst_157 : f32 to vector<8x32xf32>
    %124 = arith.mulf %123, %120 : vector<8x32xf32>
    %125 = arith.select %122, %120, %124 : vector<8x32xi1>, vector<8x32xf32>
    %c0_158 = arith.constant 0 : index
    %c0_159 = arith.constant 0 : index
    %126 = vector.load %arg27[%c0_158, %c0_159] : memref<19x32xf32, #tpu.memory_space<vmem>>, vector<8x32xf32>
    tpu.vector_store %arg27[%c0_158, %c0_159], %125 {strides = array<i32>} : memref<19x32xf32, #tpu.memory_space<vmem>>, vector<8x32xf32>,
    %c0_160 = arith.constant 0 : index
    %c0_161 = arith.constant 0 : index
    %127 = vector.load %arg27[%c0_160, %c0_161] : memref<19x32xf32, #tpu.memory_space<vmem>>, vector<1x32xf32>
    %c1_162 = arith.constant 1 : index
    %c0_163 = arith.constant 0 : index
    %128 = vector.load %arg27[%c1_162, %c0_163] : memref<19x32xf32, #tpu.memory_space<vmem>>, vector<1x32xf32>
    %129 = arith.maximumf %127, %128 : vector<1x32xf32>
    %c0_164 = arith.constant 0 : index
    %c0_165 = arith.constant 0 : index
    %130 = vector.load %arg29[%c0_164, %c0_165] : memref<16x32xf32, #tpu.memory_space<vmem>>, vector<1x32xf32>
    tpu.vector_store %arg29[%c0_164, %c0_165], %129 {strides = array<i32>} : memref<16x32xf32, #tpu.memory_space<vmem>>, vector<1x32xf32>,
    %c2_166 = arith.constant 2 : index
    %c0_167 = arith.constant 0 : index
    %131 = vector.load %arg27[%c2_166, %c0_167] : memref<19x32xf32, #tpu.memory_space<vmem>>, vector<1x32xf32>
    %c3_168 = arith.constant 3 : index
    %c0_169 = arith.constant 0 : index
    %132 = vector.load %arg27[%c3_168, %c0_169] : memref<19x32xf32, #tpu.memory_space<vmem>>, vector<1x32xf32>
    %133 = arith.maximumf %131, %132 : vector<1x32xf32>
    %c1_170 = arith.constant 1 : index
    %c0_171 = arith.constant 0 : index
    %134 = vector.load %arg29[%c1_170, %c0_171] : memref<16x32xf32, #tpu.memory_space<vmem>>, vector<1x32xf32>
    tpu.vector_store %arg29[%c1_170, %c0_171], %133 {strides = array<i32>} : memref<16x32xf32, #tpu.memory_space<vmem>>, vector<1x32xf32>,
    %c4_172 = arith.constant 4 : index
    %c0_173 = arith.constant 0 : index
    %135 = vector.load %arg27[%c4_172, %c0_173] : memref<19x32xf32, #tpu.memory_space<vmem>>, vector<1x32xf32>
    %c5_174 = arith.constant 5 : index
    %c0_175 = arith.constant 0 : index
    %136 = vector.load %arg27[%c5_174, %c0_175] : memref<19x32xf32, #tpu.memory_space<vmem>>, vector<1x32xf32>
    %137 = arith.maximumf %135, %136 : vector<1x32xf32>
    %c2_176 = arith.constant 2 : index
    %c0_177 = arith.constant 0 : index
    %138 = vector.load %arg29[%c2_176, %c0_177] : memref<16x32xf32, #tpu.memory_space<vmem>>, vector<1x32xf32>
    tpu.vector_store %arg29[%c2_176, %c0_177], %137 {strides = array<i32>} : memref<16x32xf32, #tpu.memory_space<vmem>>, vector<1x32xf32>,
    %c6_178 = arith.constant 6 : index
    %c0_179 = arith.constant 0 : index
    %139 = vector.load %arg27[%c6_178, %c0_179] : memref<19x32xf32, #tpu.memory_space<vmem>>, vector<1x32xf32>
    %c7_180 = arith.constant 7 : index
    %c0_181 = arith.constant 0 : index
    %140 = vector.load %arg27[%c7_180, %c0_181] : memref<19x32xf32, #tpu.memory_space<vmem>>, vector<1x32xf32>
    %141 = arith.maximumf %139, %140 : vector<1x32xf32>
    %c3_182 = arith.constant 3 : index
    %c0_183 = arith.constant 0 : index
    %142 = vector.load %arg29[%c3_182, %c0_183] : memref<16x32xf32, #tpu.memory_space<vmem>>, vector<1x32xf32>
    tpu.vector_store %arg29[%c3_182, %c0_183], %141 {strides = array<i32>} : memref<16x32xf32, #tpu.memory_space<vmem>>, vector<1x32xf32>,
    %c0_184 = arith.constant 0 : index
    %c0_185 = arith.constant 0 : index
    %143 = vector.load %arg29[%c0_184, %c0_185] : memref<16x32xf32, #tpu.memory_space<vmem>>, vector<4x32xf32>
    %c0_186 = arith.constant 0 : index
    %c0_187 = arith.constant 0 : index
    %c0_188 = arith.constant 0 : index
    %144 = vector.load %arg2[%c0_186, %c0_187, %c0_188] : memref<1x4x16xf32, #tpu.memory_space<vmem>>, vector<1x4x16xf32>
    %145 = vector.shape_cast %144 : vector<1x4x16xf32> to vector<4x16xf32>
    %c0_189 = arith.constant 0 : index
    %c0_190 = arith.constant 0 : index
    %c0_191 = arith.constant 0 : index
    %146 = vector.load %arg3[%c0_189, %c0_190, %c0_191] : memref<1x4x16xf32, #tpu.memory_space<vmem>>, vector<1x4x16xf32>
    %147 = vector.shape_cast %146 : vector<1x4x16xf32> to vector<4x16xf32>
    %cst_192 = arith.constant 0.000000e+00 : f32
    %148 = vector.broadcast %cst_192 : f32 to vector<19x32xf32>
    %c0_193 = arith.constant 0 : index
    %c0_194 = arith.constant 0 : index
    %149 = vector.load %arg27[%c0_193, %c0_194] : memref<19x32xf32, #tpu.memory_space<vmem>>, vector<19x32xf32>
    tpu.vector_store %arg27[%c0_193, %c0_194], %148 {strides = array<i32>} : memref<19x32xf32, #tpu.memory_space<vmem>>, vector<19x32xf32>,
    %c0_195 = arith.constant 0 : index
    %c0_196 = arith.constant 0 : index
    %150 = vector.load %arg27[%c0_195, %c0_196] : memref<19x32xf32, #tpu.memory_space<vmem>>, vector<4x32xf32>
    tpu.vector_store %arg27[%c0_195, %c0_196], %143 {strides = array<i32>} : memref<19x32xf32, #tpu.memory_space<vmem>>, vector<4x32xf32>,
    %c0_197 = arith.constant 0 : index
    %c0_198 = arith.constant 0 : index
    %151 = vector.load %arg27[%c0_197, %c0_198] : memref<19x32xf32, #tpu.memory_space<vmem>>, vector<4x32xf32>
    %c0_199 = arith.constant 0 : index
    %c0_200 = arith.constant 0 : index
    %152 = vector.load %arg28[%c0_199, %c0_200] : memref<16x1024xf32, #tpu.memory_space<vmem>>, vector<4x32xf32>
    tpu.vector_store %arg28[%c0_199, %c0_200], %151 {strides = array<i32>} : memref<16x1024xf32, #tpu.memory_space<vmem>>, vector<4x32xf32>,
    %c1_201 = arith.constant 1 : index
    %c0_202 = arith.constant 0 : index
    %153 = vector.load %arg27[%c1_201, %c0_202] : memref<19x32xf32, #tpu.memory_space<vmem>>, vector<4x32xf32>
    %c0_203 = arith.constant 0 : index
    %c128_204 = arith.constant 128 : index
    %154 = vector.load %arg28[%c0_203, %c128_204] : memref<16x1024xf32, #tpu.memory_space<vmem>>, vector<4x32xf32>
    tpu.vector_store %arg28[%c0_203, %c128_204], %153 {strides = array<i32>} : memref<16x1024xf32, #tpu.memory_space<vmem>>, vector<4x32xf32>,
    %c2_205 = arith.constant 2 : index
    %c0_206 = arith.constant 0 : index
    %155 = vector.load %arg27[%c2_205, %c0_206] : memref<19x32xf32, #tpu.memory_space<vmem>>, vector<4x32xf32>
    %c0_207 = arith.constant 0 : index
    %c256_208 = arith.constant 256 : index
    %156 = vector.load %arg28[%c0_207, %c256_208] : memref<16x1024xf32, #tpu.memory_space<vmem>>, vector<4x32xf32>
    tpu.vector_store %arg28[%c0_207, %c256_208], %155 {strides = array<i32>} : memref<16x1024xf32, #tpu.memory_space<vmem>>, vector<4x32xf32>,
    %c3_209 = arith.constant 3 : index
    %c0_210 = arith.constant 0 : index
    %157 = vector.load %arg27[%c3_209, %c0_210] : memref<19x32xf32, #tpu.memory_space<vmem>>, vector<4x32xf32>
    %c0_211 = arith.constant 0 : index
    %c384_212 = arith.constant 384 : index
    %158 = vector.load %arg28[%c0_211, %c384_212] : memref<16x1024xf32, #tpu.memory_space<vmem>>, vector<4x32xf32>
    tpu.vector_store %arg28[%c0_211, %c384_212], %157 {strides = array<i32>} : memref<16x1024xf32, #tpu.memory_space<vmem>>, vector<4x32xf32>,
    %cst_213 = arith.constant 0.000000e+00 : f32
    %159 = vector.broadcast %cst_213 : f32 to vector<19x32xf32>
    %c0_214 = arith.constant 0 : index
    %c0_215 = arith.constant 0 : index
    %160 = vector.load %arg27[%c0_214, %c0_215] : memref<19x32xf32, #tpu.memory_space<vmem>>, vector<19x32xf32>
    tpu.vector_store %arg27[%c0_214, %c0_215], %159 {strides = array<i32>} : memref<19x32xf32, #tpu.memory_space<vmem>>, vector<19x32xf32>,
    %c0_216 = arith.constant 0 : index
    %c0_217 = arith.constant 0 : index
    %161 = vector.load %arg27[%c0_216, %c0_217] : memref<19x32xf32, #tpu.memory_space<vmem>>, vector<4x16xf32>
    tpu.vector_store %arg27[%c0_216, %c0_217], %145 {strides = array<i32>} : memref<19x32xf32, #tpu.memory_space<vmem>>, vector<4x16xf32>,
    %c0_218 = arith.constant 0 : index
    %c0_219 = arith.constant 0 : index
    %162 = vector.load %arg27[%c0_218, %c0_219] : memref<19x32xf32, #tpu.memory_space<vmem>>, vector<4x16xf32>
    %c0_220 = arith.constant 0 : index
    %c512 = arith.constant 512 : index
    %163 = vector.load %arg28[%c0_220, %c512] : memref<16x1024xf32, #tpu.memory_space<vmem>>, vector<4x16xf32>
    tpu.vector_store %arg28[%c0_220, %c512], %162 {strides = array<i32>} : memref<16x1024xf32, #tpu.memory_space<vmem>>, vector<4x16xf32>,
    %c1_221 = arith.constant 1 : index
    %c0_222 = arith.constant 0 : index
    %164 = vector.load %arg27[%c1_221, %c0_222] : memref<19x32xf32, #tpu.memory_space<vmem>>, vector<4x16xf32>
    %c0_223 = arith.constant 0 : index
    %c640 = arith.constant 640 : index
    %165 = vector.load %arg28[%c0_223, %c640] : memref<16x1024xf32, #tpu.memory_space<vmem>>, vector<4x16xf32>
    tpu.vector_store %arg28[%c0_223, %c640], %164 {strides = array<i32>} : memref<16x1024xf32, #tpu.memory_space<vmem>>, vector<4x16xf32>,
    %c2_224 = arith.constant 2 : index
    %c0_225 = arith.constant 0 : index
    %166 = vector.load %arg27[%c2_224, %c0_225] : memref<19x32xf32, #tpu.memory_space<vmem>>, vector<4x16xf32>
    %c0_226 = arith.constant 0 : index
    %c768 = arith.constant 768 : index
    %167 = vector.load %arg28[%c0_226, %c768] : memref<16x1024xf32, #tpu.memory_space<vmem>>, vector<4x16xf32>
    tpu.vector_store %arg28[%c0_226, %c768], %166 {strides = array<i32>} : memref<16x1024xf32, #tpu.memory_space<vmem>>, vector<4x16xf32>,
    %c3_227 = arith.constant 3 : index
    %c0_228 = arith.constant 0 : index
    %168 = vector.load %arg27[%c3_227, %c0_228] : memref<19x32xf32, #tpu.memory_space<vmem>>, vector<4x16xf32>
    %c0_229 = arith.constant 0 : index
    %c896 = arith.constant 896 : index
    %169 = vector.load %arg28[%c0_229, %c896] : memref<16x1024xf32, #tpu.memory_space<vmem>>, vector<4x16xf32>
    tpu.vector_store %arg28[%c0_229, %c896], %168 {strides = array<i32>} : memref<16x1024xf32, #tpu.memory_space<vmem>>, vector<4x16xf32>,
    %c0_230 = arith.constant 0 : index
    %c0_231 = arith.constant 0 : index
    %170 = vector.load %arg28[%c0_230, %c0_231] : memref<16x1024xf32, #tpu.memory_space<vmem>>, vector<4x1024xf32>
    %c0_232 = arith.constant 0 : index
    %c0_233 = arith.constant 0 : index
    %171 = vector.load %arg12[%c0_232, %c0_233] : memref<1024x64xf32, #tpu.memory_space<vmem>>, vector<1024x64xf32>
    %cst_234 = arith.constant dense<0.000000e+00> : vector<4x64xf32>
    %172 = tpu.matmul %170, %171, %cst_234 {dimension_numbers = #tpu.dot_dimension_numbers<[1], [0], [0], [1], [0, 0, 1, 1], [], []>} : vector<4x1024xf32>, vector<1024x64xf32>, vector<4x64xf32> -> vector<4x64xf32>
    %173 = arith.negf %172 : vector<4x64xf32>
    %174 = math.exp %173 : vector<4x64xf32>
    %cst_235 = arith.constant 1.000000e+00 : f32
    %175 = vector.broadcast %cst_235 : f32 to vector<4x64xf32>
    %176 = arith.addf %175, %174 : vector<4x64xf32>
    %177 = arith.divf %175, %176 : vector<4x64xf32>
    %178 = math.tanh %172 : vector<4x64xf32>
    %179 = vector.extract_strided_slice %177 {offsets = [0, 16], sizes = [4, 16], strides = [1, 1]} : vector<4x64xf32> to vector<4x16xf32>
    %180 = arith.mulf %179, %147 : vector<4x16xf32>
    %181 = vector.extract_strided_slice %177 {offsets = [0, 0], sizes = [4, 16], strides = [1, 1]} : vector<4x64xf32> to vector<4x16xf32>
    %182 = vector.extract_strided_slice %178 {offsets = [0, 32], sizes = [4, 16], strides = [1, 1]} : vector<4x64xf32> to vector<4x16xf32>
    %183 = arith.mulf %181, %182 : vector<4x16xf32>
    %184 = arith.addf %180, %183 : vector<4x16xf32>
    %185 = vector.extract_strided_slice %177 {offsets = [0, 48], sizes = [4, 16], strides = [1, 1]} : vector<4x64xf32> to vector<4x16xf32>
    %186 = math.tanh %184 : vector<4x16xf32>
    %187 = arith.mulf %185, %186 : vector<4x16xf32>
    %c0_236 = arith.constant 0 : index
    %c0_237 = arith.constant 0 : index
    %c0_238 = arith.constant 0 : index
    %188 = vector.load %arg25[%c0_236, %c0_237, %c0_238] : memref<1x4x16xf32, #tpu.memory_space<vmem>>, vector<1x4x16xf32>
    %189 = vector.shape_cast %188 : vector<1x4x16xf32> to vector<4x16xf32>
    %190 = vector.shape_cast %187 : vector<4x16xf32> to vector<1x4x16xf32>
    tpu.vector_store %arg25[%c0_236, %c0_237, %c0_238], %190 {strides = array<i32>} : memref<1x4x16xf32, #tpu.memory_space<vmem>>, vector<1x4x16xf32>,
    %c0_239 = arith.constant 0 : index
    %c0_240 = arith.constant 0 : index
    %c0_241 = arith.constant 0 : index
    %191 = vector.load %arg26[%c0_239, %c0_240, %c0_241] : memref<1x4x16xf32, #tpu.memory_space<vmem>>, vector<1x4x16xf32>
    %192 = vector.shape_cast %191 : vector<1x4x16xf32> to vector<4x16xf32>
    %193 = vector.shape_cast %184 : vector<4x16xf32> to vector<1x4x16xf32>
    tpu.vector_store %arg26[%c0_239, %c0_240, %c0_241], %193 {strides = array<i32>} : memref<1x4x16xf32, #tpu.memory_space<vmem>>, vector<1x4x16xf32>,
    %c0_242 = arith.constant 0 : index
    %c0_243 = arith.constant 0 : index
    %194 = vector.load %arg27[%c0_242, %c0_243] : memref<19x32xf32, #tpu.memory_space<vmem>>, vector<4x16xf32>
    tpu.vector_store %arg27[%c0_242, %c0_243], %187 {strides = array<i32>} : memref<19x32xf32, #tpu.memory_space<vmem>>, vector<4x16xf32>,
    %c0_244 = arith.constant 0 : index
    %c0_245 = arith.constant 0 : index
    %195 = vector.load %arg27[%c0_244, %c0_245] : memref<19x32xf32, #tpu.memory_space<vmem>>, vector<1x16xf32>
    %c0_246 = arith.constant 0 : index
    %c0_247 = arith.constant 0 : index
    %196 = vector.load %arg29[%c0_246, %c0_247] : memref<16x32xf32, #tpu.memory_space<vmem>>, vector<1x16xf32>
    tpu.vector_store %arg29[%c0_246, %c0_247], %195 {strides = array<i32>} : memref<16x32xf32, #tpu.memory_space<vmem>>, vector<1x16xf32>,
    %c1_248 = arith.constant 1 : index
    %c0_249 = arith.constant 0 : index
    %197 = vector.load %arg29[%c1_248, %c0_249] : memref<16x32xf32, #tpu.memory_space<vmem>>, vector<1x16xf32>
    tpu.vector_store %arg29[%c1_248, %c0_249], %195 {strides = array<i32>} : memref<16x32xf32, #tpu.memory_space<vmem>>, vector<1x16xf32>,
    %c1_250 = arith.constant 1 : index
    %c0_251 = arith.constant 0 : index
    %198 = vector.load %arg27[%c1_250, %c0_251] : memref<19x32xf32, #tpu.memory_space<vmem>>, vector<1x16xf32>
    %c2_252 = arith.constant 2 : index
    %c0_253 = arith.constant 0 : index
    %199 = vector.load %arg29[%c2_252, %c0_253] : memref<16x32xf32, #tpu.memory_space<vmem>>, vector<1x16xf32>
    tpu.vector_store %arg29[%c2_252, %c0_253], %198 {strides = array<i32>} : memref<16x32xf32, #tpu.memory_space<vmem>>, vector<1x16xf32>,
    %c3_254 = arith.constant 3 : index
    %c0_255 = arith.constant 0 : index
    %200 = vector.load %arg29[%c3_254, %c0_255] : memref<16x32xf32, #tpu.memory_space<vmem>>, vector<1x16xf32>
    tpu.vector_store %arg29[%c3_254, %c0_255], %198 {strides = array<i32>} : memref<16x32xf32, #tpu.memory_space<vmem>>, vector<1x16xf32>,
    %c2_256 = arith.constant 2 : index
    %c0_257 = arith.constant 0 : index
    %201 = vector.load %arg27[%c2_256, %c0_257] : memref<19x32xf32, #tpu.memory_space<vmem>>, vector<1x16xf32>
    %c4_258 = arith.constant 4 : index
    %c0_259 = arith.constant 0 : index
    %202 = vector.load %arg29[%c4_258, %c0_259] : memref<16x32xf32, #tpu.memory_space<vmem>>, vector<1x16xf32>
    tpu.vector_store %arg29[%c4_258, %c0_259], %201 {strides = array<i32>} : memref<16x32xf32, #tpu.memory_space<vmem>>, vector<1x16xf32>,
    %c5_260 = arith.constant 5 : index
    %c0_261 = arith.constant 0 : index
    %203 = vector.load %arg29[%c5_260, %c0_261] : memref<16x32xf32, #tpu.memory_space<vmem>>, vector<1x16xf32>
    tpu.vector_store %arg29[%c5_260, %c0_261], %201 {strides = array<i32>} : memref<16x32xf32, #tpu.memory_space<vmem>>, vector<1x16xf32>,
    %c3_262 = arith.constant 3 : index
    %c0_263 = arith.constant 0 : index
    %204 = vector.load %arg27[%c3_262, %c0_263] : memref<19x32xf32, #tpu.memory_space<vmem>>, vector<1x16xf32>
    %c6_264 = arith.constant 6 : index
    %c0_265 = arith.constant 0 : index
    %205 = vector.load %arg29[%c6_264, %c0_265] : memref<16x32xf32, #tpu.memory_space<vmem>>, vector<1x16xf32>
    tpu.vector_store %arg29[%c6_264, %c0_265], %204 {strides = array<i32>} : memref<16x32xf32, #tpu.memory_space<vmem>>, vector<1x16xf32>,
    %c7_266 = arith.constant 7 : index
    %c0_267 = arith.constant 0 : index
    %206 = vector.load %arg29[%c7_266, %c0_267] : memref<16x32xf32, #tpu.memory_space<vmem>>, vector<1x16xf32>
    tpu.vector_store %arg29[%c7_266, %c0_267], %204 {strides = array<i32>} : memref<16x32xf32, #tpu.memory_space<vmem>>, vector<1x16xf32>,
    %c0_268 = arith.constant 0 : index
    %c0_269 = arith.constant 0 : index
    %207 = vector.load %arg29[%c0_268, %c0_269] : memref<16x32xf32, #tpu.memory_space<vmem>>, vector<8x16xf32>
    %cst_270 = arith.constant 0.000000e+00 : f32
    %208 = vector.broadcast %cst_270 : f32 to vector<19x32xf32>
    %c0_271 = arith.constant 0 : index
    %c0_272 = arith.constant 0 : index
    %209 = vector.load %arg27[%c0_271, %c0_272] : memref<19x32xf32, #tpu.memory_space<vmem>>, vector<19x32xf32>
    tpu.vector_store %arg27[%c0_271, %c0_272], %208 {strides = array<i32>} : memref<19x32xf32, #tpu.memory_space<vmem>>, vector<19x32xf32>,
    %c0_273 = arith.constant 0 : index
    %c0_274 = arith.constant 0 : index
    %210 = vector.load %arg27[%c0_273, %c0_274] : memref<19x32xf32, #tpu.memory_space<vmem>>, vector<8x16xf32>
    tpu.vector_store %arg27[%c0_273, %c0_274], %207 {strides = array<i32>} : memref<19x32xf32, #tpu.memory_space<vmem>>, vector<8x16xf32>,
    %c0_275 = arith.constant 0 : index
    %c0_276 = arith.constant 0 : index
    %211 = vector.load %arg27[%c0_275, %c0_276] : memref<19x32xf32, #tpu.memory_space<vmem>>, vector<8x16xf32>
    %c0_277 = arith.constant 0 : index
    %c0_278 = arith.constant 0 : index
    %212 = vector.load %arg28[%c0_277, %c0_278] : memref<16x1024xf32, #tpu.memory_space<vmem>>, vector<8x16xf32>
    tpu.vector_store %arg28[%c0_277, %c0_278], %211 {strides = array<i32>} : memref<16x1024xf32, #tpu.memory_space<vmem>>, vector<8x16xf32>,
    %c1_279 = arith.constant 1 : index
    %c0_280 = arith.constant 0 : index
    %213 = vector.load %arg27[%c1_279, %c0_280] : memref<19x32xf32, #tpu.memory_space<vmem>>, vector<8x16xf32>
    %c0_281 = arith.constant 0 : index
    %c128_282 = arith.constant 128 : index
    %214 = vector.load %arg28[%c0_281, %c128_282] : memref<16x1024xf32, #tpu.memory_space<vmem>>, vector<8x16xf32>
    tpu.vector_store %arg28[%c0_281, %c128_282], %213 {strides = array<i32>} : memref<16x1024xf32, #tpu.memory_space<vmem>>, vector<8x16xf32>,
    %c2_283 = arith.constant 2 : index
    %c0_284 = arith.constant 0 : index
    %215 = vector.load %arg27[%c2_283, %c0_284] : memref<19x32xf32, #tpu.memory_space<vmem>>, vector<8x16xf32>
    %c0_285 = arith.constant 0 : index
    %c256_286 = arith.constant 256 : index
    %216 = vector.load %arg28[%c0_285, %c256_286] : memref<16x1024xf32, #tpu.memory_space<vmem>>, vector<8x16xf32>
    tpu.vector_store %arg28[%c0_285, %c256_286], %215 {strides = array<i32>} : memref<16x1024xf32, #tpu.memory_space<vmem>>, vector<8x16xf32>,
    %c3_287 = arith.constant 3 : index
    %c0_288 = arith.constant 0 : index
    %217 = vector.load %arg27[%c3_287, %c0_288] : memref<19x32xf32, #tpu.memory_space<vmem>>, vector<8x16xf32>
    %c0_289 = arith.constant 0 : index
    %c384_290 = arith.constant 384 : index
    %218 = vector.load %arg28[%c0_289, %c384_290] : memref<16x1024xf32, #tpu.memory_space<vmem>>, vector<8x16xf32>
    tpu.vector_store %arg28[%c0_289, %c384_290], %217 {strides = array<i32>} : memref<16x1024xf32, #tpu.memory_space<vmem>>, vector<8x16xf32>,
    %c0_291 = arith.constant 0 : index
    %c0_292 = arith.constant 0 : index
    %219 = vector.load %arg28[%c0_291, %c0_292] : memref<16x1024xf32, #tpu.memory_space<vmem>>, vector<8x512xf32>
    %c0_293 = arith.constant 0 : index
    %c0_294 = arith.constant 0 : index
    %220 = vector.load %arg13[%c0_293, %c0_294] : memref<512x32xf32, #tpu.memory_space<vmem>>, vector<512x32xf32>
    %cst_295 = arith.constant dense<0.000000e+00> : vector<8x32xf32>
    %221 = tpu.matmul %219, %220, %cst_295 {dimension_numbers = #tpu.dot_dimension_numbers<[1], [0], [0], [1], [0, 0, 1, 1], [], []>} : vector<8x512xf32>, vector<512x32xf32>, vector<8x32xf32> -> vector<8x32xf32>
    %c0_296 = arith.constant 0 : index
    %c0_297 = arith.constant 0 : index
    %222 = vector.load %arg14[%c0_296, %c0_297] : memref<1x32xf32, #tpu.memory_space<vmem>>, vector<1x32xf32>
    %223 = vector.broadcast %222 : vector<1x32xf32> to vector<8x32xf32>
    %224 = arith.addf %221, %223 : vector<8x32xf32>
    %cst_298 = arith.constant 0.000000e+00 : f32
    %225 = vector.broadcast %cst_298 : f32 to vector<8x32xf32>
    %226 = arith.cmpf oge, %224, %225 : vector<8x32xf32>
    %cst_299 = arith.constant 2.000000e-01 : f32
    %227 = vector.broadcast %cst_299 : f32 to vector<8x32xf32>
    %228 = arith.mulf %227, %224 : vector<8x32xf32>
    %229 = arith.select %226, %224, %228 : vector<8x32xi1>, vector<8x32xf32>
    %cst_300 = arith.constant 0.000000e+00 : f32
    %230 = vector.broadcast %cst_300 : f32 to vector<19x32xf32>
    %c0_301 = arith.constant 0 : index
    %c0_302 = arith.constant 0 : index
    %231 = vector.load %arg27[%c0_301, %c0_302] : memref<19x32xf32, #tpu.memory_space<vmem>>, vector<19x32xf32>
    tpu.vector_store %arg27[%c0_301, %c0_302], %230 {strides = array<i32>} : memref<19x32xf32, #tpu.memory_space<vmem>>, vector<19x32xf32>,
    %c0_303 = arith.constant 0 : index
    %c0_304 = arith.constant 0 : index
    %232 = vector.load %arg27[%c0_303, %c0_304] : memref<19x32xf32, #tpu.memory_space<vmem>>, vector<8x32xf32>
    tpu.vector_store %arg27[%c0_303, %c0_304], %229 {strides = array<i32>} : memref<19x32xf32, #tpu.memory_space<vmem>>, vector<8x32xf32>,
    %c0_305 = arith.constant 0 : index
    %c0_306 = arith.constant 0 : index
    %233 = vector.load %arg27[%c0_305, %c0_306] : memref<19x32xf32, #tpu.memory_space<vmem>>, vector<8x32xf32>
    %c0_307 = arith.constant 0 : index
    %c0_308 = arith.constant 0 : index
    %234 = vector.load %arg28[%c0_307, %c0_308] : memref<16x1024xf32, #tpu.memory_space<vmem>>, vector<8x32xf32>
    tpu.vector_store %arg28[%c0_307, %c0_308], %233 {strides = array<i32>} : memref<16x1024xf32, #tpu.memory_space<vmem>>, vector<8x32xf32>,
    %c1_309 = arith.constant 1 : index
    %c0_310 = arith.constant 0 : index
    %235 = vector.load %arg27[%c1_309, %c0_310] : memref<19x32xf32, #tpu.memory_space<vmem>>, vector<8x32xf32>
    %c0_311 = arith.constant 0 : index
    %c128_312 = arith.constant 128 : index
    %236 = vector.load %arg28[%c0_311, %c128_312] : memref<16x1024xf32, #tpu.memory_space<vmem>>, vector<8x32xf32>
    tpu.vector_store %arg28[%c0_311, %c128_312], %235 {strides = array<i32>} : memref<16x1024xf32, #tpu.memory_space<vmem>>, vector<8x32xf32>,
    %c2_313 = arith.constant 2 : index
    %c0_314 = arith.constant 0 : index
    %237 = vector.load %arg27[%c2_313, %c0_314] : memref<19x32xf32, #tpu.memory_space<vmem>>, vector<8x32xf32>
    %c0_315 = arith.constant 0 : index
    %c256_316 = arith.constant 256 : index
    %238 = vector.load %arg28[%c0_315, %c256_316] : memref<16x1024xf32, #tpu.memory_space<vmem>>, vector<8x32xf32>
    tpu.vector_store %arg28[%c0_315, %c256_316], %237 {strides = array<i32>} : memref<16x1024xf32, #tpu.memory_space<vmem>>, vector<8x32xf32>,
    %c3_317 = arith.constant 3 : index
    %c0_318 = arith.constant 0 : index
    %239 = vector.load %arg27[%c3_317, %c0_318] : memref<19x32xf32, #tpu.memory_space<vmem>>, vector<8x32xf32>
    %c0_319 = arith.constant 0 : index
    %c384_320 = arith.constant 384 : index
    %240 = vector.load %arg28[%c0_319, %c384_320] : memref<16x1024xf32, #tpu.memory_space<vmem>>, vector<8x32xf32>
    tpu.vector_store %arg28[%c0_319, %c384_320], %239 {strides = array<i32>} : memref<16x1024xf32, #tpu.memory_space<vmem>>, vector<8x32xf32>,
    %c0_321 = arith.constant 0 : index
    %c0_322 = arith.constant 0 : index
    %241 = vector.load %arg28[%c0_321, %c0_322] : memref<16x1024xf32, #tpu.memory_space<vmem>>, vector<8x512xf32>
    %c0_323 = arith.constant 0 : index
    %c0_324 = arith.constant 0 : index
    %242 = vector.load %arg15[%c0_323, %c0_324] : memref<512x32xf32, #tpu.memory_space<vmem>>, vector<512x32xf32>
    %cst_325 = arith.constant dense<0.000000e+00> : vector<8x32xf32>
    %243 = tpu.matmul %241, %242, %cst_325 {dimension_numbers = #tpu.dot_dimension_numbers<[1], [0], [0], [1], [0, 0, 1, 1], [], []>} : vector<8x512xf32>, vector<512x32xf32>, vector<8x32xf32> -> vector<8x32xf32>
    %c0_326 = arith.constant 0 : index
    %c0_327 = arith.constant 0 : index
    %244 = vector.load %arg16[%c0_326, %c0_327] : memref<1x32xf32, #tpu.memory_space<vmem>>, vector<1x32xf32>
    %245 = vector.broadcast %244 : vector<1x32xf32> to vector<8x32xf32>
    %246 = arith.addf %243, %245 : vector<8x32xf32>
    %cst_328 = arith.constant 0.000000e+00 : f32
    %247 = vector.broadcast %cst_328 : f32 to vector<8x32xf32>
    %248 = arith.cmpf oge, %246, %247 : vector<8x32xf32>
    %cst_329 = arith.constant 2.000000e-01 : f32
    %249 = vector.broadcast %cst_329 : f32 to vector<8x32xf32>
    %250 = arith.mulf %249, %246 : vector<8x32xf32>
    %251 = arith.select %248, %246, %250 : vector<8x32xi1>, vector<8x32xf32>
    %252 = arith.addf %251, %125 : vector<8x32xf32>
    %c0_330 = arith.constant 0 : index
    %c0_331 = arith.constant 0 : index
    %253 = vector.load %arg27[%c0_330, %c0_331] : memref<19x32xf32, #tpu.memory_space<vmem>>, vector<8x32xf32>
    tpu.vector_store %arg27[%c0_330, %c0_331], %252 {strides = array<i32>} : memref<19x32xf32, #tpu.memory_space<vmem>>, vector<8x32xf32>,
    %c0_332 = arith.constant 0 : index
    %c0_333 = arith.constant 0 : index
    %254 = vector.load %arg27[%c0_332, %c0_333] : memref<19x32xf32, #tpu.memory_space<vmem>>, vector<1x32xf32>
    %c0_334 = arith.constant 0 : index
    %c0_335 = arith.constant 0 : index
    %255 = vector.load %arg29[%c0_334, %c0_335] : memref<16x32xf32, #tpu.memory_space<vmem>>, vector<1x32xf32>
    tpu.vector_store %arg29[%c0_334, %c0_335], %254 {strides = array<i32>} : memref<16x32xf32, #tpu.memory_space<vmem>>, vector<1x32xf32>,
    %c1_336 = arith.constant 1 : index
    %c0_337 = arith.constant 0 : index
    %256 = vector.load %arg29[%c1_336, %c0_337] : memref<16x32xf32, #tpu.memory_space<vmem>>, vector<1x32xf32>
    tpu.vector_store %arg29[%c1_336, %c0_337], %254 {strides = array<i32>} : memref<16x32xf32, #tpu.memory_space<vmem>>, vector<1x32xf32>,
    %c1_338 = arith.constant 1 : index
    %c0_339 = arith.constant 0 : index
    %257 = vector.load %arg27[%c1_338, %c0_339] : memref<19x32xf32, #tpu.memory_space<vmem>>, vector<1x32xf32>
    %c2_340 = arith.constant 2 : index
    %c0_341 = arith.constant 0 : index
    %258 = vector.load %arg29[%c2_340, %c0_341] : memref<16x32xf32, #tpu.memory_space<vmem>>, vector<1x32xf32>
    tpu.vector_store %arg29[%c2_340, %c0_341], %257 {strides = array<i32>} : memref<16x32xf32, #tpu.memory_space<vmem>>, vector<1x32xf32>,
    %c3_342 = arith.constant 3 : index
    %c0_343 = arith.constant 0 : index
    %259 = vector.load %arg29[%c3_342, %c0_343] : memref<16x32xf32, #tpu.memory_space<vmem>>, vector<1x32xf32>
    tpu.vector_store %arg29[%c3_342, %c0_343], %257 {strides = array<i32>} : memref<16x32xf32, #tpu.memory_space<vmem>>, vector<1x32xf32>,
    %c2_344 = arith.constant 2 : index
    %c0_345 = arith.constant 0 : index
    %260 = vector.load %arg27[%c2_344, %c0_345] : memref<19x32xf32, #tpu.memory_space<vmem>>, vector<1x32xf32>
    %c4_346 = arith.constant 4 : index
    %c0_347 = arith.constant 0 : index
    %261 = vector.load %arg29[%c4_346, %c0_347] : memref<16x32xf32, #tpu.memory_space<vmem>>, vector<1x32xf32>
    tpu.vector_store %arg29[%c4_346, %c0_347], %260 {strides = array<i32>} : memref<16x32xf32, #tpu.memory_space<vmem>>, vector<1x32xf32>,
    %c5_348 = arith.constant 5 : index
    %c0_349 = arith.constant 0 : index
    %262 = vector.load %arg29[%c5_348, %c0_349] : memref<16x32xf32, #tpu.memory_space<vmem>>, vector<1x32xf32>
    tpu.vector_store %arg29[%c5_348, %c0_349], %260 {strides = array<i32>} : memref<16x32xf32, #tpu.memory_space<vmem>>, vector<1x32xf32>,
    %c3_350 = arith.constant 3 : index
    %c0_351 = arith.constant 0 : index
    %263 = vector.load %arg27[%c3_350, %c0_351] : memref<19x32xf32, #tpu.memory_space<vmem>>, vector<1x32xf32>
    %c6_352 = arith.constant 6 : index
    %c0_353 = arith.constant 0 : index
    %264 = vector.load %arg29[%c6_352, %c0_353] : memref<16x32xf32, #tpu.memory_space<vmem>>, vector<1x32xf32>
    tpu.vector_store %arg29[%c6_352, %c0_353], %263 {strides = array<i32>} : memref<16x32xf32, #tpu.memory_space<vmem>>, vector<1x32xf32>,
    %c7_354 = arith.constant 7 : index
    %c0_355 = arith.constant 0 : index
    %265 = vector.load %arg29[%c7_354, %c0_355] : memref<16x32xf32, #tpu.memory_space<vmem>>, vector<1x32xf32>
    tpu.vector_store %arg29[%c7_354, %c0_355], %263 {strides = array<i32>} : memref<16x32xf32, #tpu.memory_space<vmem>>, vector<1x32xf32>,
    %c4_356 = arith.constant 4 : index
    %c0_357 = arith.constant 0 : index
    %266 = vector.load %arg27[%c4_356, %c0_357] : memref<19x32xf32, #tpu.memory_space<vmem>>, vector<1x32xf32>
    %c8_358 = arith.constant 8 : index
    %c0_359 = arith.constant 0 : index
    %267 = vector.load %arg29[%c8_358, %c0_359] : memref<16x32xf32, #tpu.memory_space<vmem>>, vector<1x32xf32>
    tpu.vector_store %arg29[%c8_358, %c0_359], %266 {strides = array<i32>} : memref<16x32xf32, #tpu.memory_space<vmem>>, vector<1x32xf32>,
    %c9_360 = arith.constant 9 : index
    %c0_361 = arith.constant 0 : index
    %268 = vector.load %arg29[%c9_360, %c0_361] : memref<16x32xf32, #tpu.memory_space<vmem>>, vector<1x32xf32>
    tpu.vector_store %arg29[%c9_360, %c0_361], %266 {strides = array<i32>} : memref<16x32xf32, #tpu.memory_space<vmem>>, vector<1x32xf32>,
    %c5_362 = arith.constant 5 : index
    %c0_363 = arith.constant 0 : index
    %269 = vector.load %arg27[%c5_362, %c0_363] : memref<19x32xf32, #tpu.memory_space<vmem>>, vector<1x32xf32>
    %c10_364 = arith.constant 10 : index
    %c0_365 = arith.constant 0 : index
    %270 = vector.load %arg29[%c10_364, %c0_365] : memref<16x32xf32, #tpu.memory_space<vmem>>, vector<1x32xf32>
    tpu.vector_store %arg29[%c10_364, %c0_365], %269 {strides = array<i32>} : memref<16x32xf32, #tpu.memory_space<vmem>>, vector<1x32xf32>,
    %c11_366 = arith.constant 11 : index
    %c0_367 = arith.constant 0 : index
    %271 = vector.load %arg29[%c11_366, %c0_367] : memref<16x32xf32, #tpu.memory_space<vmem>>, vector<1x32xf32>
    tpu.vector_store %arg29[%c11_366, %c0_367], %269 {strides = array<i32>} : memref<16x32xf32, #tpu.memory_space<vmem>>, vector<1x32xf32>,
    %c6_368 = arith.constant 6 : index
    %c0_369 = arith.constant 0 : index
    %272 = vector.load %arg27[%c6_368, %c0_369] : memref<19x32xf32, #tpu.memory_space<vmem>>, vector<1x32xf32>
    %c12_370 = arith.constant 12 : index
    %c0_371 = arith.constant 0 : index
    %273 = vector.load %arg29[%c12_370, %c0_371] : memref<16x32xf32, #tpu.memory_space<vmem>>, vector<1x32xf32>
    tpu.vector_store %arg29[%c12_370, %c0_371], %272 {strides = array<i32>} : memref<16x32xf32, #tpu.memory_space<vmem>>, vector<1x32xf32>,
    %c13_372 = arith.constant 13 : index
    %c0_373 = arith.constant 0 : index
    %274 = vector.load %arg29[%c13_372, %c0_373] : memref<16x32xf32, #tpu.memory_space<vmem>>, vector<1x32xf32>
    tpu.vector_store %arg29[%c13_372, %c0_373], %272 {strides = array<i32>} : memref<16x32xf32, #tpu.memory_space<vmem>>, vector<1x32xf32>,
    %c7_374 = arith.constant 7 : index
    %c0_375 = arith.constant 0 : index
    %275 = vector.load %arg27[%c7_374, %c0_375] : memref<19x32xf32, #tpu.memory_space<vmem>>, vector<1x32xf32>
    %c14_376 = arith.constant 14 : index
    %c0_377 = arith.constant 0 : index
    %276 = vector.load %arg29[%c14_376, %c0_377] : memref<16x32xf32, #tpu.memory_space<vmem>>, vector<1x32xf32>
    tpu.vector_store %arg29[%c14_376, %c0_377], %275 {strides = array<i32>} : memref<16x32xf32, #tpu.memory_space<vmem>>, vector<1x32xf32>,
    %c15_378 = arith.constant 15 : index
    %c0_379 = arith.constant 0 : index
    %277 = vector.load %arg29[%c15_378, %c0_379] : memref<16x32xf32, #tpu.memory_space<vmem>>, vector<1x32xf32>
    tpu.vector_store %arg29[%c15_378, %c0_379], %275 {strides = array<i32>} : memref<16x32xf32, #tpu.memory_space<vmem>>, vector<1x32xf32>,
    %c0_380 = arith.constant 0 : index
    %c0_381 = arith.constant 0 : index
    %278 = vector.load %arg29[%c0_380, %c0_381] : memref<16x32xf32, #tpu.memory_space<vmem>>, vector<16x32xf32>
    %cst_382 = arith.constant 0.000000e+00 : f32
    %279 = vector.broadcast %cst_382 : f32 to vector<19x32xf32>
    %c0_383 = arith.constant 0 : index
    %c0_384 = arith.constant 0 : index
    %280 = vector.load %arg27[%c0_383, %c0_384] : memref<19x32xf32, #tpu.memory_space<vmem>>, vector<19x32xf32>
    tpu.vector_store %arg27[%c0_383, %c0_384], %279 {strides = array<i32>} : memref<19x32xf32, #tpu.memory_space<vmem>>, vector<19x32xf32>,
    %c0_385 = arith.constant 0 : index
    %c0_386 = arith.constant 0 : index
    %281 = vector.load %arg27[%c0_385, %c0_386] : memref<19x32xf32, #tpu.memory_space<vmem>>, vector<16x32xf32>
    tpu.vector_store %arg27[%c0_385, %c0_386], %278 {strides = array<i32>} : memref<19x32xf32, #tpu.memory_space<vmem>>, vector<16x32xf32>,
    %c0_387 = arith.constant 0 : index
    %c0_388 = arith.constant 0 : index
    %282 = vector.load %arg27[%c0_387, %c0_388] : memref<19x32xf32, #tpu.memory_space<vmem>>, vector<16x32xf32>
    %c0_389 = arith.constant 0 : index
    %c0_390 = arith.constant 0 : index
    %283 = vector.load %arg28[%c0_389, %c0_390] : memref<16x1024xf32, #tpu.memory_space<vmem>>, vector<16x32xf32>
    tpu.vector_store %arg28[%c0_389, %c0_390], %282 {strides = array<i32>} : memref<16x1024xf32, #tpu.memory_space<vmem>>, vector<16x32xf32>,
    %c1_391 = arith.constant 1 : index
    %c0_392 = arith.constant 0 : index
    %284 = vector.load %arg27[%c1_391, %c0_392] : memref<19x32xf32, #tpu.memory_space<vmem>>, vector<16x32xf32>
    %c0_393 = arith.constant 0 : index
    %c128_394 = arith.constant 128 : index
    %285 = vector.load %arg28[%c0_393, %c128_394] : memref<16x1024xf32, #tpu.memory_space<vmem>>, vector<16x32xf32>
    tpu.vector_store %arg28[%c0_393, %c128_394], %284 {strides = array<i32>} : memref<16x1024xf32, #tpu.memory_space<vmem>>, vector<16x32xf32>,
    %c2_395 = arith.constant 2 : index
    %c0_396 = arith.constant 0 : index
    %286 = vector.load %arg27[%c2_395, %c0_396] : memref<19x32xf32, #tpu.memory_space<vmem>>, vector<16x32xf32>
    %c0_397 = arith.constant 0 : index
    %c256_398 = arith.constant 256 : index
    %287 = vector.load %arg28[%c0_397, %c256_398] : memref<16x1024xf32, #tpu.memory_space<vmem>>, vector<16x32xf32>
    tpu.vector_store %arg28[%c0_397, %c256_398], %286 {strides = array<i32>} : memref<16x1024xf32, #tpu.memory_space<vmem>>, vector<16x32xf32>,
    %c3_399 = arith.constant 3 : index
    %c0_400 = arith.constant 0 : index
    %288 = vector.load %arg27[%c3_399, %c0_400] : memref<19x32xf32, #tpu.memory_space<vmem>>, vector<16x32xf32>
    %c0_401 = arith.constant 0 : index
    %c384_402 = arith.constant 384 : index
    %289 = vector.load %arg28[%c0_401, %c384_402] : memref<16x1024xf32, #tpu.memory_space<vmem>>, vector<16x32xf32>
    tpu.vector_store %arg28[%c0_401, %c384_402], %288 {strides = array<i32>} : memref<16x1024xf32, #tpu.memory_space<vmem>>, vector<16x32xf32>,
    %c0_403 = arith.constant 0 : index
    %c0_404 = arith.constant 0 : index
    %290 = vector.load %arg28[%c0_403, %c0_404] : memref<16x1024xf32, #tpu.memory_space<vmem>>, vector<16x512xf32>
    %c0_405 = arith.constant 0 : index
    %c0_406 = arith.constant 0 : index
    %291 = vector.load %arg17[%c0_405, %c0_406] : memref<512x16xf32, #tpu.memory_space<vmem>>, vector<512x16xf32>
    %cst_407 = arith.constant dense<0.000000e+00> : vector<16x16xf32>
    %292 = tpu.matmul %290, %291, %cst_407 {dimension_numbers = #tpu.dot_dimension_numbers<[1], [0], [0], [1], [0, 0, 1, 1], [], []>} : vector<16x512xf32>, vector<512x16xf32>, vector<16x16xf32> -> vector<16x16xf32>
    %c0_408 = arith.constant 0 : index
    %c0_409 = arith.constant 0 : index
    %293 = vector.load %arg18[%c0_408, %c0_409] : memref<1x16xf32, #tpu.memory_space<vmem>>, vector<1x16xf32>
    %294 = vector.broadcast %293 : vector<1x16xf32> to vector<16x16xf32>
    %295 = arith.addf %292, %294 : vector<16x16xf32>
    %cst_410 = arith.constant 0.000000e+00 : f32
    %296 = vector.broadcast %cst_410 : f32 to vector<16x16xf32>
    %297 = arith.cmpf oge, %295, %296 : vector<16x16xf32>
    %cst_411 = arith.constant 2.000000e-01 : f32
    %298 = vector.broadcast %cst_411 : f32 to vector<16x16xf32>
    %299 = arith.mulf %298, %295 : vector<16x16xf32>
    %300 = arith.select %297, %295, %299 : vector<16x16xi1>, vector<16x16xf32>
    %cst_412 = arith.constant 0.000000e+00 : f32
    %301 = vector.broadcast %cst_412 : f32 to vector<19x32xf32>
    %c0_413 = arith.constant 0 : index
    %c0_414 = arith.constant 0 : index
    %302 = vector.load %arg27[%c0_413, %c0_414] : memref<19x32xf32, #tpu.memory_space<vmem>>, vector<19x32xf32>
    tpu.vector_store %arg27[%c0_413, %c0_414], %301 {strides = array<i32>} : memref<19x32xf32, #tpu.memory_space<vmem>>, vector<19x32xf32>,
    %c0_415 = arith.constant 0 : index
    %c0_416 = arith.constant 0 : index
    %303 = vector.load %arg27[%c0_415, %c0_416] : memref<19x32xf32, #tpu.memory_space<vmem>>, vector<16x16xf32>
    tpu.vector_store %arg27[%c0_415, %c0_416], %300 {strides = array<i32>} : memref<19x32xf32, #tpu.memory_space<vmem>>, vector<16x16xf32>,
    %c0_417 = arith.constant 0 : index
    %c0_418 = arith.constant 0 : index
    %304 = vector.load %arg27[%c0_417, %c0_418] : memref<19x32xf32, #tpu.memory_space<vmem>>, vector<16x16xf32>
    %c0_419 = arith.constant 0 : index
    %c0_420 = arith.constant 0 : index
    %305 = vector.load %arg28[%c0_419, %c0_420] : memref<16x1024xf32, #tpu.memory_space<vmem>>, vector<16x16xf32>
    tpu.vector_store %arg28[%c0_419, %c0_420], %304 {strides = array<i32>} : memref<16x1024xf32, #tpu.memory_space<vmem>>, vector<16x16xf32>,
    %c1_421 = arith.constant 1 : index
    %c0_422 = arith.constant 0 : index
    %306 = vector.load %arg27[%c1_421, %c0_422] : memref<19x32xf32, #tpu.memory_space<vmem>>, vector<16x16xf32>
    %c0_423 = arith.constant 0 : index
    %c128_424 = arith.constant 128 : index
    %307 = vector.load %arg28[%c0_423, %c128_424] : memref<16x1024xf32, #tpu.memory_space<vmem>>, vector<16x16xf32>
    tpu.vector_store %arg28[%c0_423, %c128_424], %306 {strides = array<i32>} : memref<16x1024xf32, #tpu.memory_space<vmem>>, vector<16x16xf32>,
    %c2_425 = arith.constant 2 : index
    %c0_426 = arith.constant 0 : index
    %308 = vector.load %arg27[%c2_425, %c0_426] : memref<19x32xf32, #tpu.memory_space<vmem>>, vector<16x16xf32>
    %c0_427 = arith.constant 0 : index
    %c256_428 = arith.constant 256 : index
    %309 = vector.load %arg28[%c0_427, %c256_428] : memref<16x1024xf32, #tpu.memory_space<vmem>>, vector<16x16xf32>
    tpu.vector_store %arg28[%c0_427, %c256_428], %308 {strides = array<i32>} : memref<16x1024xf32, #tpu.memory_space<vmem>>, vector<16x16xf32>,
    %c3_429 = arith.constant 3 : index
    %c0_430 = arith.constant 0 : index
    %310 = vector.load %arg27[%c3_429, %c0_430] : memref<19x32xf32, #tpu.memory_space<vmem>>, vector<16x16xf32>
    %c0_431 = arith.constant 0 : index
    %c384_432 = arith.constant 384 : index
    %311 = vector.load %arg28[%c0_431, %c384_432] : memref<16x1024xf32, #tpu.memory_space<vmem>>, vector<16x16xf32>
    tpu.vector_store %arg28[%c0_431, %c384_432], %310 {strides = array<i32>} : memref<16x1024xf32, #tpu.memory_space<vmem>>, vector<16x16xf32>,
    %c0_433 = arith.constant 0 : index
    %c0_434 = arith.constant 0 : index
    %312 = vector.load %arg28[%c0_433, %c0_434] : memref<16x1024xf32, #tpu.memory_space<vmem>>, vector<16x512xf32>
    %c0_435 = arith.constant 0 : index
    %c0_436 = arith.constant 0 : index
    %313 = vector.load %arg19[%c0_435, %c0_436] : memref<512x16xf32, #tpu.memory_space<vmem>>, vector<512x16xf32>
    %cst_437 = arith.constant dense<0.000000e+00> : vector<16x16xf32>
    %314 = tpu.matmul %312, %313, %cst_437 {dimension_numbers = #tpu.dot_dimension_numbers<[1], [0], [0], [1], [0, 0, 1, 1], [], []>} : vector<16x512xf32>, vector<512x16xf32>, vector<16x16xf32> -> vector<16x16xf32>
    %c0_438 = arith.constant 0 : index
    %c0_439 = arith.constant 0 : index
    %315 = vector.load %arg20[%c0_438, %c0_439] : memref<1x16xf32, #tpu.memory_space<vmem>>, vector<1x16xf32>
    %316 = vector.broadcast %315 : vector<1x16xf32> to vector<16x16xf32>
    %317 = arith.addf %314, %316 : vector<16x16xf32>
    %cst_440 = arith.constant 0.000000e+00 : f32
    %318 = vector.broadcast %cst_440 : f32 to vector<16x16xf32>
    %319 = arith.cmpf oge, %317, %318 : vector<16x16xf32>
    %cst_441 = arith.constant 2.000000e-01 : f32
    %320 = vector.broadcast %cst_441 : f32 to vector<16x16xf32>
    %321 = arith.mulf %320, %317 : vector<16x16xf32>
    %322 = arith.select %319, %317, %321 : vector<16x16xi1>, vector<16x16xf32>
    %323 = arith.addf %322, %47 : vector<16x16xf32>
    %cst_442 = arith.constant 0.000000e+00 : f32
    %324 = vector.broadcast %cst_442 : f32 to vector<19x32xf32>
    %c0_443 = arith.constant 0 : index
    %c0_444 = arith.constant 0 : index
    %325 = vector.load %arg27[%c0_443, %c0_444] : memref<19x32xf32, #tpu.memory_space<vmem>>, vector<19x32xf32>
    tpu.vector_store %arg27[%c0_443, %c0_444], %324 {strides = array<i32>} : memref<19x32xf32, #tpu.memory_space<vmem>>, vector<19x32xf32>,
    %c0_445 = arith.constant 0 : index
    %c0_446 = arith.constant 0 : index
    %326 = vector.load %arg27[%c0_445, %c0_446] : memref<19x32xf32, #tpu.memory_space<vmem>>, vector<16x16xf32>
    tpu.vector_store %arg27[%c0_445, %c0_446], %323 {strides = array<i32>} : memref<19x32xf32, #tpu.memory_space<vmem>>, vector<16x16xf32>,
    %c0_447 = arith.constant 0 : index
    %c0_448 = arith.constant 0 : index
    %327 = vector.load %arg27[%c0_447, %c0_448] : memref<19x32xf32, #tpu.memory_space<vmem>>, vector<16x16xf32>
    %c0_449 = arith.constant 0 : index
    %c0_450 = arith.constant 0 : index
    %328 = vector.load %arg28[%c0_449, %c0_450] : memref<16x1024xf32, #tpu.memory_space<vmem>>, vector<16x16xf32>
    tpu.vector_store %arg28[%c0_449, %c0_450], %327 {strides = array<i32>} : memref<16x1024xf32, #tpu.memory_space<vmem>>, vector<16x16xf32>,
    %c1_451 = arith.constant 1 : index
    %c0_452 = arith.constant 0 : index
    %329 = vector.load %arg27[%c1_451, %c0_452] : memref<19x32xf32, #tpu.memory_space<vmem>>, vector<16x16xf32>
    %c0_453 = arith.constant 0 : index
    %c128_454 = arith.constant 128 : index
    %330 = vector.load %arg28[%c0_453, %c128_454] : memref<16x1024xf32, #tpu.memory_space<vmem>>, vector<16x16xf32>
    tpu.vector_store %arg28[%c0_453, %c128_454], %329 {strides = array<i32>} : memref<16x1024xf32, #tpu.memory_space<vmem>>, vector<16x16xf32>,
    %c2_455 = arith.constant 2 : index
    %c0_456 = arith.constant 0 : index
    %331 = vector.load %arg27[%c2_455, %c0_456] : memref<19x32xf32, #tpu.memory_space<vmem>>, vector<16x16xf32>
    %c0_457 = arith.constant 0 : index
    %c256_458 = arith.constant 256 : index
    %332 = vector.load %arg28[%c0_457, %c256_458] : memref<16x1024xf32, #tpu.memory_space<vmem>>, vector<16x16xf32>
    tpu.vector_store %arg28[%c0_457, %c256_458], %331 {strides = array<i32>} : memref<16x1024xf32, #tpu.memory_space<vmem>>, vector<16x16xf32>,
    %c3_459 = arith.constant 3 : index
    %c0_460 = arith.constant 0 : index
    %333 = vector.load %arg27[%c3_459, %c0_460] : memref<19x32xf32, #tpu.memory_space<vmem>>, vector<16x16xf32>
    %c0_461 = arith.constant 0 : index
    %c384_462 = arith.constant 384 : index
    %334 = vector.load %arg28[%c0_461, %c384_462] : memref<16x1024xf32, #tpu.memory_space<vmem>>, vector<16x16xf32>
    tpu.vector_store %arg28[%c0_461, %c384_462], %333 {strides = array<i32>} : memref<16x1024xf32, #tpu.memory_space<vmem>>, vector<16x16xf32>,
    %c0_463 = arith.constant 0 : index
    %c0_464 = arith.constant 0 : index
    %335 = vector.load %arg28[%c0_463, %c0_464] : memref<16x1024xf32, #tpu.memory_space<vmem>>, vector<16x512xf32>
    %c0_465 = arith.constant 0 : index
    %c0_466 = arith.constant 0 : index
    %336 = vector.load %arg21[%c0_465, %c0_466] : memref<512x2xf32, #tpu.memory_space<vmem>>, vector<512x2xf32>
    %cst_467 = arith.constant dense<0.000000e+00> : vector<16x2xf32>
    %337 = tpu.matmul %335, %336, %cst_467 {dimension_numbers = #tpu.dot_dimension_numbers<[1], [0], [0], [1], [0, 0, 1, 1], [], []>} : vector<16x512xf32>, vector<512x2xf32>, vector<16x2xf32> -> vector<16x2xf32>
    %c0_468 = arith.constant 0 : index
    %c0_469 = arith.constant 0 : index
    %338 = vector.load %arg22[%c0_468, %c0_469] : memref<1x2xf32, #tpu.memory_space<vmem>>, vector<1x2xf32>
    %339 = vector.broadcast %338 : vector<1x2xf32> to vector<16x2xf32>
    %340 = arith.addf %337, %339 : vector<16x2xf32>
    %341 = vector.extract_strided_slice %340 {offsets = [0, 0], sizes = [13, 2], strides = [1, 1]} : vector<16x2xf32> to vector<13x2xf32>
    %342 = vector.extract_strided_slice %3 {offsets = [0, 2], sizes = [13, 1], strides = [1, 1]} : vector<13x4xf32> to vector<13x1xf32>
    %343 = vector.extract_strided_slice %3 {offsets = [0, 3], sizes = [13, 1], strides = [1, 1]} : vector<13x4xf32> to vector<13x1xf32>
    %344 = vector.extract_strided_slice %3 {offsets = [0, 1], sizes = [13, 1], strides = [1, 1]} : vector<13x4xf32> to vector<13x1xf32>
    %345 = vector.extract_strided_slice %341 {offsets = [0, 0], sizes = [13, 1], strides = [1, 1]} : vector<13x2xf32> to vector<13x1xf32>
    %346 = arith.mulf %345, %345 : vector<13x1xf32>
    %347 = arith.mulf %344, %344 : vector<13x1xf32>
    %348 = arith.addf %346, %347 : vector<13x1xf32>
    %349 = math.sqrt %348 : vector<13x1xf32>
    %cst_470 = arith.constant 0.000000e+00 : f32
    %350 = vector.broadcast %cst_470 : f32 to vector<13x1xf32>
    %351 = arith.cmpf ogt, %349, %350 : vector<13x1xf32>
    %352 = math.tanh %349 : vector<13x1xf32>
    %353 = arith.divf %352, %349 : vector<13x1xf32>
    %cst_471 = arith.constant 1.000000e+00 : f32
    %354 = vector.broadcast %cst_471 : f32 to vector<13x1xf32>
    %355 = arith.select %351, %353, %354 : vector<13x1xi1>, vector<13x1xf32>
    %356 = arith.mulf %345, %342 : vector<13x1xf32>
    %357 = arith.mulf %344, %343 : vector<13x1xf32>
    %358 = arith.subf %356, %357 : vector<13x1xf32>
    %359 = arith.mulf %355, %358 : vector<13x1xf32>
    %c0_472 = arith.constant 0 : index
    %c0_473 = arith.constant 0 : index
    %c0_474 = arith.constant 0 : index
    %360 = vector.load %arg23[%c0_472, %c0_473, %c0_474] : memref<1x13x1xf32, #tpu.memory_space<vmem>>, vector<1x13x1xf32>
    %361 = vector.shape_cast %360 : vector<1x13x1xf32> to vector<13x1xf32>
    %362 = vector.shape_cast %359 : vector<13x1xf32> to vector<1x13x1xf32>
    tpu.vector_store %arg23[%c0_472, %c0_473, %c0_474], %362 {strides = array<i32>} : memref<1x13x1xf32, #tpu.memory_space<vmem>>, vector<1x13x1xf32>,
    %363 = arith.mulf %344, %342 : vector<13x1xf32>
    %364 = arith.mulf %345, %343 : vector<13x1xf32>
    %365 = arith.addf %363, %364 : vector<13x1xf32>
    %366 = arith.mulf %355, %365 : vector<13x1xf32>
    %c0_475 = arith.constant 0 : index
    %c0_476 = arith.constant 0 : index
    %c0_477 = arith.constant 0 : index
    %367 = vector.load %arg24[%c0_475, %c0_476, %c0_477] : memref<1x13x1xf32, #tpu.memory_space<vmem>>, vector<1x13x1xf32>
    %368 = vector.shape_cast %367 : vector<1x13x1xf32> to vector<13x1xf32>
    %369 = vector.shape_cast %366 : vector<13x1xf32> to vector<1x13x1xf32>
    tpu.vector_store %arg24[%c0_475, %c0_476, %c0_477], %369 {strides = array<i32>} : memref<1x13x1xf32, #tpu.memory_space<vmem>>, vector<1x13x1xf32>,
    return
  }
  func.func @transform_0(%arg0: i32) -> (i32, i32, i32) {
    %c0_i32 = arith.constant 0 : i32
    %c0_i32_0 = arith.constant 0 : i32
    %c0_i32_1 = arith.constant 0 : i32
    return %arg0, %c0_i32, %c0_i32_0 : i32, i32, i32
  }
  func.func @transform_1(%arg0: i32) -> (i32, i32, i32) {
    %c0_i32 = arith.constant 0 : i32
    %c0_i32_0 = arith.constant 0 : i32
    %c0_i32_1 = arith.constant 0 : i32
    return %arg0, %c0_i32, %c0_i32_0 : i32, i32, i32
  }
  func.func @transform_2(%arg0: i32) -> (i32, i32, i32) {
    %c0_i32 = arith.constant 0 : i32
    %c0_i32_0 = arith.constant 0 : i32
    %c0_i32_1 = arith.constant 0 : i32
    return %arg0, %c0_i32, %c0_i32_0 : i32, i32, i32
  }
  func.func @transform_3(%arg0: i32) -> (i32, i32) {
    %c0_i32 = arith.constant 0 : i32
    %c0_i32_0 = arith.constant 0 : i32
    %c0_i32_1 = arith.constant 0 : i32
    return %c0_i32, %c0_i32_0 : i32, i32
  }
  func.func @transform_4(%arg0: i32) -> (i32, i32) {
    %c0_i32 = arith.constant 0 : i32
    %c0_i32_0 = arith.constant 0 : i32
    %c0_i32_1 = arith.constant 0 : i32
    return %c0_i32, %c0_i32_0 : i32, i32
  }
  func.func @transform_5(%arg0: i32) -> (i32, i32) {
    %c0_i32 = arith.constant 0 : i32
    %c0_i32_0 = arith.constant 0 : i32
    %c0_i32_1 = arith.constant 0 : i32
    return %c0_i32, %c0_i32_0 : i32, i32
  }
  func.func @transform_6(%arg0: i32) -> (i32, i32) {
    %c0_i32 = arith.constant 0 : i32
    %c0_i32_0 = arith.constant 0 : i32
    %c0_i32_1 = arith.constant 0 : i32
    return %c0_i32, %c0_i32_0 : i32, i32
  }
  func.func @transform_7(%arg0: i32) -> (i32, i32) {
    %c0_i32 = arith.constant 0 : i32
    %c0_i32_0 = arith.constant 0 : i32
    %c0_i32_1 = arith.constant 0 : i32
    return %c0_i32, %c0_i32_0 : i32, i32
  }
  func.func @transform_8(%arg0: i32) -> (i32, i32) {
    %c0_i32 = arith.constant 0 : i32
    %c0_i32_0 = arith.constant 0 : i32
    %c0_i32_1 = arith.constant 0 : i32
    return %c0_i32, %c0_i32_0 : i32, i32
  }
  func.func @transform_9(%arg0: i32) -> (i32, i32) {
    %c0_i32 = arith.constant 0 : i32
    %c0_i32_0 = arith.constant 0 : i32
    %c0_i32_1 = arith.constant 0 : i32
    return %c0_i32, %c0_i32_0 : i32, i32
  }
  func.func @transform_10(%arg0: i32) -> (i32, i32) {
    %c0_i32 = arith.constant 0 : i32
    %c0_i32_0 = arith.constant 0 : i32
    %c0_i32_1 = arith.constant 0 : i32
    return %c0_i32, %c0_i32_0 : i32, i32
  }
  func.func @transform_11(%arg0: i32) -> (i32, i32) {
    %c0_i32 = arith.constant 0 : i32
    %c0_i32_0 = arith.constant 0 : i32
    %c0_i32_1 = arith.constant 0 : i32
    return %c0_i32, %c0_i32_0 : i32, i32
  }
  func.func @transform_12(%arg0: i32) -> (i32, i32) {
    %c0_i32 = arith.constant 0 : i32
    %c0_i32_0 = arith.constant 0 : i32
    %c0_i32_1 = arith.constant 0 : i32
    return %c0_i32, %c0_i32_0 : i32, i32
  }
  func.func @transform_13(%arg0: i32) -> (i32, i32) {
    %c0_i32 = arith.constant 0 : i32
    %c0_i32_0 = arith.constant 0 : i32
    %c0_i32_1 = arith.constant 0 : i32
    return %c0_i32, %c0_i32_0 : i32, i32
  }
  func.func @transform_14(%arg0: i32) -> (i32, i32) {
    %c0_i32 = arith.constant 0 : i32
    %c0_i32_0 = arith.constant 0 : i32
    %c0_i32_1 = arith.constant 0 : i32
    return %c0_i32, %c0_i32_0 : i32, i32
  }
  func.func @transform_15(%arg0: i32) -> (i32, i32) {
    %c0_i32 = arith.constant 0 : i32
    %c0_i32_0 = arith.constant 0 : i32
    %c0_i32_1 = arith.constant 0 : i32
    return %c0_i32, %c0_i32_0 : i32, i32
  }
  func.func @transform_16(%arg0: i32) -> (i32, i32) {
    %c0_i32 = arith.constant 0 : i32
    %c0_i32_0 = arith.constant 0 : i32
    %c0_i32_1 = arith.constant 0 : i32
    return %c0_i32, %c0_i32_0 : i32, i32
  }
  func.func @transform_17(%arg0: i32) -> (i32, i32) {
    %c0_i32 = arith.constant 0 : i32
    %c0_i32_0 = arith.constant 0 : i32
    %c0_i32_1 = arith.constant 0 : i32
    return %c0_i32, %c0_i32_0 : i32, i32
  }
  func.func @transform_18(%arg0: i32) -> (i32, i32) {
    %c0_i32 = arith.constant 0 : i32
    %c0_i32_0 = arith.constant 0 : i32
    %c0_i32_1 = arith.constant 0 : i32
    return %c0_i32, %c0_i32_0 : i32, i32
  }
  func.func @transform_19(%arg0: i32) -> (i32, i32) {
    %c0_i32 = arith.constant 0 : i32
    %c0_i32_0 = arith.constant 0 : i32
    %c0_i32_1 = arith.constant 0 : i32
    return %c0_i32, %c0_i32_0 : i32, i32
  }
  func.func @transform_20(%arg0: i32) -> (i32, i32) {
    %c0_i32 = arith.constant 0 : i32
    %c0_i32_0 = arith.constant 0 : i32
    %c0_i32_1 = arith.constant 0 : i32
    return %c0_i32, %c0_i32_0 : i32, i32
  }
  func.func @transform_21(%arg0: i32) -> (i32, i32) {
    %c0_i32 = arith.constant 0 : i32
    %c0_i32_0 = arith.constant 0 : i32
    %c0_i32_1 = arith.constant 0 : i32
    return %c0_i32, %c0_i32_0 : i32, i32
  }
  func.func @transform_22(%arg0: i32) -> (i32, i32, i32) {
    %c0_i32 = arith.constant 0 : i32
    %c0_i32_0 = arith.constant 0 : i32
    %c0_i32_1 = arith.constant 0 : i32
    return %arg0, %c0_i32, %c0_i32_0 : i32, i32, i32
  }
  func.func @transform_23(%arg0: i32) -> (i32, i32, i32) {
    %c0_i32 = arith.constant 0 : i32
    %c0_i32_0 = arith.constant 0 : i32
    %c0_i32_1 = arith.constant 0 : i32
    return %arg0, %c0_i32, %c0_i32_0 : i32, i32, i32
  }
  func.func @transform_24(%arg0: i32) -> (i32, i32, i32) {
    %c0_i32 = arith.constant 0 : i32
    %c0_i32_0 = arith.constant 0 : i32
    %c0_i32_1 = arith.constant 0 : i32
    return %arg0, %c0_i32, %c0_i32_0 : i32, i32, i32
  }
  func.func @transform_25(%arg0: i32) -> (i32, i32, i32) {
    %c0_i32 = arith.constant 0 : i32
    %c0_i32_0 = arith.constant 0 : i32
    %c0_i32_1 = arith.constant 0 : i32
    return %arg0, %c0_i32, %c0_i32_0 : i32, i32, i32
  }
}

</mosaic_0001>

<llo_original>
// kernel: fcrn_forward.1
$region0: #{fcrn_forward.1}
  #allocation0 [shape = 'u32[]', space=smem, size = 0x4, offset = 0x4, fixed_abs, tag = 'smem constant byte address 0x4 - core index']
  #allocation1 [shape = 'u32[72,128]{1,0:T(1,128)}', space=vmem, size = 0x9000, scoped, tag = 'internal scratch']
  #allocation2 [shape = 'f32[19,32]{1,0:T(8,128)}', space=vmem, size = 0x3000, scoped, tag = 'scratch operand']
  #allocation3 [shape = 'f32[16,1024]{1,0:T(8,128)}', space=vmem, size = 0x10000, scoped, tag = 'scratch operand']
  #allocation4 [shape = 'f32[16,32]{1,0:T(8,128)}', space=vmem, size = 0x2000, scoped, tag = 'scratch operand']
  %s0 = inlined_call_operand.vmem [shape: f32[2,13,4], index: 0, kind: input, shape index: {}]
  %s1 = inlined_call_operand.vmem [shape: f32[2,4,16], index: 1, kind: input, shape index: {}, may-alias: {1,2}]
  %s2 = inlined_call_operand.vmem [shape: f32[2,4,16], index: 2, kind: input, shape index: {}, may-alias: {1,2}]
  %s3 = inlined_call_operand.vmem [shape: f32[512,16], index: 3, kind: input, shape index: {}]
  %s4 = inlined_call_operand.vmem [shape: f32[1,16], index: 4, kind: input, shape index: {}]
  %s5 = inlined_call_operand.vmem [shape: f32[512,16], index: 5, kind: input, shape index: {}]
  %s6 = inlined_call_operand.vmem [shape: f32[1,16], index: 6, kind: input, shape index: {}]
  %s7 = inlined_call_operand.vmem [shape: f32[512,32], index: 7, kind: input, shape index: {}]
  %s8 = inlined_call_operand.vmem [shape: f32[1,32], index: 8, kind: input, shape index: {}]
  %s9 = inlined_call_operand.vmem [shape: f32[512,32], index: 9, kind: input, shape index: {}]
  %s10 = inlined_call_operand.vmem [shape: f32[1,32], index: 10, kind: input, shape index: {}]
  %s11 = inlined_call_operand.vmem [shape: f32[1024,64], index: 11, kind: input, shape index: {}]
  %s12 = inlined_call_operand.vmem [shape: f32[512,32], index: 12, kind: input, shape index: {}]
  %s13 = inlined_call_operand.vmem [shape: f32[1,32], index: 13, kind: input, shape index: {}]
  %s14 = inlined_call_operand.vmem [shape: f32[512,32], index: 14, kind: input, shape index: {}]
  %s15 = inlined_call_operand.vmem [shape: f32[1,32], index: 15, kind: input, shape index: {}]
  %s16 = inlined_call_operand.vmem [shape: f32[512,16], index: 16, kind: input, shape index: {}]
  %s17 = inlined_call_operand.vmem [shape: f32[1,16], index: 17, kind: input, shape index: {}]
  %s18 = inlined_call_operand.vmem [shape: f32[512,16], index: 18, kind: input, shape index: {}]
  %s19 = inlined_call_operand.vmem [shape: f32[1,16], index: 19, kind: input, shape index: {}]
  %s20 = inlined_call_operand.vmem [shape: f32[512,2], index: 20, kind: input, shape index: {}]
  %s21 = inlined_call_operand.vmem [shape: f32[1,2], index: 21, kind: input, shape index: {}]
  %s22 = inlined_call_operand.vmem [shape: f32[2,13,1], index: 22, kind: output, shape index: {0}]
  %s23 = inlined_call_operand.vmem [shape: f32[2,13,1], index: 23, kind: output, shape index: {1}]
  %s24 = inlined_call_operand.hbm [shape: f32[2,4,16], index: 24, kind: output, shape index: {2}]
  %s25 = inlined_call_operand.hbm [shape: f32[2,4,16], index: 25, kind: output, shape index: {3}]
  %26 = xla_tuple %s22, %s23, %s24, %s25
  %s27 = sld [smem:[#allocation0]]
  $region145: #{fcrn_forward.1} parent=0
    _
  %s29 = ssub.s32 1, %s27
  %s30 = scalar_select 0, %s29, %s27
  $region1: #{fcrn_forward.1} parent=0
    #allocation5 [shape = 'u8[4096]{0}', space=vmem, size = 0x1000, scoped, tag = 'output window, operand 2']
    #allocation6 [shape = 's32[2]{0}', space=sflag, size = 0x8, scoped, tag = 'scoped memory for fcrn_forward.1']
    #allocation7 [shape = 'u8[4096]{0}', space=vmem, size = 0x1000, scoped, tag = 'output window, operand 3']
    #allocation8 [shape = 's32[2]{0}', space=sflag, size = 0x8, scoped, tag = 'scoped memory for fcrn_forward.1']
    %31 = vsyncpa [#allocation6], 0
    %s32 = scalar_lea.sflag [#allocation6], 1
    %33 = vsyncpa %s32, 0
    %34 = vsyncpa [#allocation8], 0
    %s35 = scalar_lea.sflag [#allocation8], 1
    %36 = vsyncpa %s35, 0
    loop: start=0, step=1, limit=4
    $region2: #{fcrn_forward.1} parent=1 // loop_pre_header
      _
    $region3: #{fcrn_forward.1} parent=1 // loop_header
      %s38 = sphi 0, %s42
      %p39 = scmp.ge.s32.totalorder %s38, 4
      %s48 = sphi 0, %s50
      %s51 = sphi 0, %s48
      %s52 = sphi 0, %s51
      %s68 = sphi 0, %s52
      %s74 = sphi 0, %s76
      %s77 = sphi 0, %s74
      %s78 = sphi 0, %s77
      %s94 = sphi 0, %s78
      %s100 = sphi 0, %s102
      %s103 = sphi 0, %s100
      %s104 = sphi 0, %s103
      %s120 = sphi 0, %s104
      %s124 = sphi 0, %s124
      %s126 = sphi 0, %s124
      %s127 = sphi 0, %s126
      %s141 = sphi 0, %s127
      %s145 = sphi 0, %s145
      %s147 = sphi 0, %s145
      %s148 = sphi 0, %s147
      %s162 = sphi 0, %s148
      %s166 = sphi 0, %s166
      %s168 = sphi 0, %s166
      %s169 = sphi 0, %s168
      %s183 = sphi 0, %s169
      %s187 = sphi 0, %s187
      %s189 = sphi 0, %s187
      %s190 = sphi 0, %s189
      %s204 = sphi 0, %s190
      %s208 = sphi 0, %s208
      %s210 = sphi 0, %s208
      %s211 = sphi 0, %s210
      %s225 = sphi 0, %s211
      %s229 = sphi 0, %s229
      %s231 = sphi 0, %s229
      %s232 = sphi 0, %s231
      %s246 = sphi 0, %s232
      %s250 = sphi 0, %s250
      %s252 = sphi 0, %s250
      %s253 = sphi 0, %s252
      %s267 = sphi 0, %s253
      %s271 = sphi 0, %s271
      %s273 = sphi 0, %s271
      %s274 = sphi 0, %s273
      %s288 = sphi 0, %s274
      %s292 = sphi 0, %s292
      %s294 = sphi 0, %s292
      %s295 = sphi 0, %s294
      %s309 = sphi 0, %s295
      %s313 = sphi 0, %s313
      %s315 = sphi 0, %s313
      %s316 = sphi 0, %s315
      %s330 = sphi 0, %s316
      %s334 = sphi 0, %s334
      %s336 = sphi 0, %s334
      %s337 = sphi 0, %s336
      %s351 = sphi 0, %s337
      %s355 = sphi 0, %s355
      %s357 = sphi 0, %s355
      %s358 = sphi 0, %s357
      %s372 = sphi 0, %s358
      %s376 = sphi 0, %s376
      %s378 = sphi 0, %s376
      %s379 = sphi 0, %s378
      %s393 = sphi 0, %s379
      %s397 = sphi 0, %s397
      %s399 = sphi 0, %s397
      %s400 = sphi 0, %s399
      %s414 = sphi 0, %s400
      %s418 = sphi 0, %s418
      %s420 = sphi 0, %s418
      %s421 = sphi 0, %s420
      %s435 = sphi 0, %s421
      %s439 = sphi 0, %s439
      %s441 = sphi 0, %s439
      %s442 = sphi 0, %s441
      %s456 = sphi 0, %s442
      %s460 = sphi 0, %s460
      %s462 = sphi 0, %s460
      %s463 = sphi 0, %s462
      %s477 = sphi 0, %s463
      %s481 = sphi 0, %s481
      %s483 = sphi 0, %s481
      %s484 = sphi 0, %s483
      %s498 = sphi 0, %s484
      %s502 = sphi 0, %s502
      %s504 = sphi 0, %s502
      %s505 = sphi 0, %s504
      %s519 = sphi 0, %s505
      %s525 = sphi 0, %s527
      %s528 = sphi 0, %s525
      %s529 = sphi 0, %s528
      %s545 = sphi 0, %s529
      %s551 = sphi 0, %s553
      %s554 = sphi 0, %s551
      %s555 = sphi 0, %s554
      %s571 = sphi 0, %s555
      %s577 = sphi 0, %s579
      %s580 = sphi 0, %s577
      %s581 = sphi 0, %s580
      %s597 = sphi 0, %s581
      %s603 = sphi 0, %s605
      %s606 = sphi 0, %s603
      %s607 = sphi 0, %s606
      %s623 = sphi 0, %s607
    $region4: #{fcrn_forward.1} parent=1 // loop_header_branch
      %41 = sbr.rel (%p39) target = $region8
    $region5: #{fcrn_forward.1} parent=1 // loop_body
      %s43 = ssub.s32 %s38, 1
      %s44 = ssub.s32 %s38, 2
      %s45 = sadd.s32 %s38, 1
      %s46 = ssub.s32 %s38, %s45
      %p47 = scmp.eq.s32.totalorder %s46, 0
      %s49 = sadd.s32 %s48, 1
      %s50 = scalar_select %p47, %s48, %s49
      %p53 = pneg %p47
      %p54 = scmp.eq.s32.totalorder %s38, 1
      %p55 = por %p53, %p54
      %p56 = scmp.ne.s32.totalorder %s48, %s51
      %p57 = scmp.eq.s32.totalorder %s38, 0
      %p58 = por %p56, %p57
      %p59 = scmp.ne.s32.totalorder %s48, %s51
      %p60 = scmp.eq.s32.totalorder %s43, 1
      %p61 = por %p59, %p60
      %p62 = scmp.ne.s32.totalorder %s51, %s52
      %p63 = scmp.eq.s32.totalorder %s43, 0
      %p64 = por %p62, %p63
      %p65 = scmp.ne.s32.totalorder %s51, %s52
      %p66 = scmp.eq.s32.totalorder %s44, 1
      %p67 = por %p65, %p66
      %p69 = scmp.ne.s32.totalorder %s52, %s68
      %p70 = scmp.eq.s32.totalorder %s44, 0
      %p71 = por %p69, %p70
      %s72 = ssub.s32 %s38, %s45
      %p73 = scmp.eq.s32.totalorder %s72, 0
      %s75 = sadd.s32 %s74, 1
      %s76 = scalar_select %p73, %s74, %s75
      %p79 = pneg %p73
      %p80 = scmp.eq.s32.totalorder %s38, 1
      %p81 = por %p79, %p80
      %p82 = scmp.ne.s32.totalorder %s74, %s77
      %p83 = scmp.eq.s32.totalorder %s38, 0
      %p84 = por %p82, %p83
      %p85 = scmp.ne.s32.totalorder %s74, %s77
      %p86 = scmp.eq.s32.totalorder %s43, 1
      %p87 = por %p85, %p86
      %p88 = scmp.ne.s32.totalorder %s77, %s78
      %p89 = scmp.eq.s32.totalorder %s43, 0
      %p90 = por %p88, %p89
      %p91 = scmp.ne.s32.totalorder %s77, %s78
      %p92 = scmp.eq.s32.totalorder %s44, 1
      %p93 = por %p91, %p92
      %p95 = scmp.ne.s32.totalorder %s78, %s94
      %p96 = scmp.eq.s32.totalorder %s44, 0
      %p97 = por %p95, %p96
      %s98 = ssub.s32 %s38, %s45
      %p99 = scmp.eq.s32.totalorder %s98, 0
      %s101 = sadd.s32 %s100, 1
      %s102 = scalar_select %p99, %s100, %s101
      %p105 = pneg %p99
      %p106 = scmp.eq.s32.totalorder %s38, 1
      %p107 = por %p105, %p106
      %p108 = scmp.ne.s32.totalorder %s100, %s103
      %p109 = scmp.eq.s32.totalorder %s38, 0
      %p110 = por %p108, %p109
      %p111 = scmp.ne.s32.totalorder %s100, %s103
      %p112 = scmp.eq.s32.totalorder %s43, 1
      %p113 = por %p111, %p112
      %p114 = scmp.ne.s32.totalorder %s103, %s104
      %p115 = scmp.eq.s32.totalorder %s43, 0
      %p116 = por %p114, %p115
      %p117 = scmp.ne.s32.totalorder %s103, %s104
      %p118 = scmp.eq.s32.totalorder %s44, 1
      %p119 = por %p117, %p118
      %p121 = scmp.ne.s32.totalorder %s104, %s120
      %p122 = scmp.eq.s32.totalorder %s44, 0
      %p123 = por %p121, %p122
      %s125 = sadd.s32 %s124, 1
      %p128 = scmp.eq.s32.totalorder %s38, 1
      %p129 = scmp.ne.s32.totalorder %s124, %s126
      %p130 = scmp.eq.s32.totalorder %s38, 0
      %p131 = por %p129, %p130
      %p132 = scmp.ne.s32.totalorder %s124, %s126
      %p133 = scmp.eq.s32.totalorder %s43, 1
      %p134 = por %p132, %p133
      %p135 = scmp.ne.s32.totalorder %s126, %s127
      %p136 = scmp.eq.s32.totalorder %s43, 0
      %p137 = por %p135, %p136
      %p138 = scmp.ne.s32.totalorder %s126, %s127
      %p139 = scmp.eq.s32.totalorder %s44, 1
      %p140 = por %p138, %p139
      %p142 = scmp.ne.s32.totalorder %s127, %s141
      %p143 = scmp.eq.s32.totalorder %s44, 0
      %p144 = por %p142, %p143
      %s146 = sadd.s32 %s145, 1
      %p149 = scmp.eq.s32.totalorder %s38, 1
      %p150 = scmp.ne.s32.totalorder %s145, %s147
      %p151 = scmp.eq.s32.totalorder %s38, 0
      %p152 = por %p150, %p151
      %p153 = scmp.ne.s32.totalorder %s145, %s147
      %p154 = scmp.eq.s32.totalorder %s43, 1
      %p155 = por %p153, %p154
      %p156 = scmp.ne.s32.totalorder %s147, %s148
      %p157 = scmp.eq.s32.totalorder %s43, 0
      %p158 = por %p156, %p157
      %p159 = scmp.ne.s32.totalorder %s147, %s148
      %p160 = scmp.eq.s32.totalorder %s44, 1
      %p161 = por %p159, %p160
      %p163 = scmp.ne.s32.totalorder %s148, %s162
      %p164 = scmp.eq.s32.totalorder %s44, 0
      %p165 = por %p163, %p164
      %s167 = sadd.s32 %s166, 1
      %p170 = scmp.eq.s32.totalorder %s38, 1
      %p171 = scmp.ne.s32.totalorder %s166, %s168
      %p172 = scmp.eq.s32.totalorder %s38, 0
      %p173 = por %p171, %p172
      %p174 = scmp.ne.s32.totalorder %s166, %s168
      %p175 = scmp.eq.s32.totalorder %s43, 1
      %p176 = por %p174, %p175
      %p177 = scmp.ne.s32.totalorder %s168, %s169
      %p178 = scmp.eq.s32.totalorder %s43, 0
      %p179 = por %p177, %p178
      %p180 = scmp.ne.s32.totalorder %s168, %s169
      %p181 = scmp.eq.s32.totalorder %s44, 1
      %p182 = por %p180, %p181
      %p184 = scmp.ne.s32.totalorder %s169, %s183
      %p185 = scmp.eq.s32.totalorder %s44, 0
      %p186 = por %p184, %p185
      %s188 = sadd.s32 %s187, 1
      %p191 = scmp.eq.s32.totalorder %s38, 1
      %p192 = scmp.ne.s32.totalorder %s187, %s189
      %p193 = scmp.eq.s32.totalorder %s38, 0
      %p194 = por %p192, %p193
      %p195 = scmp.ne.s32.totalorder %s187, %s189
      %p196 = scmp.eq.s32.totalorder %s43, 1
      %p197 = por %p195, %p196
      %p198 = scmp.ne.s32.totalorder %s189, %s190
      %p199 = scmp.eq.s32.totalorder %s43, 0
      %p200 = por %p198, %p199
      %p201 = scmp.ne.s32.totalorder %s189, %s190
      %p202 = scmp.eq.s32.totalorder %s44, 1
      %p203 = por %p201, %p202
      %p205 = scmp.ne.s32.totalorder %s190, %s204
      %p206 = scmp.eq.s32.totalorder %s44, 0
      %p207 = por %p205, %p206
      %s209 = sadd.s32 %s208, 1
      %p212 = scmp.eq.s32.totalorder %s38, 1
      %p213 = scmp.ne.s32.totalorder %s208, %s210
      %p214 = scmp.eq.s32.totalorder %s38, 0
      %p215 = por %p213, %p214
      %p216 = scmp.ne.s32.totalorder %s208, %s210
      %p217 = scmp.eq.s32.totalorder %s43, 1
      %p218 = por %p216, %p217
      %p219 = scmp.ne.s32.totalorder %s210, %s211
      %p220 = scmp.eq.s32.totalorder %s43, 0
      %p221 = por %p219, %p220
      %p222 = scmp.ne.s32.totalorder %s210, %s211
      %p223 = scmp.eq.s32.totalorder %s44, 1
      %p224 = por %p222, %p223
      %p226 = scmp.ne.s32.totalorder %s211, %s225
      %p227 = scmp.eq.s32.totalorder %s44, 0
      %p228 = por %p226, %p227
      %s230 = sadd.s32 %s229, 1
      %p233 = scmp.eq.s32.totalorder %s38, 1
      %p234 = scmp.ne.s32.totalorder %s229, %s231
      %p235 = scmp.eq.s32.totalorder %s38, 0
      %p236 = por %p234, %p235
      %p237 = scmp.ne.s32.totalorder %s229, %s231
      %p238 = scmp.eq.s32.totalorder %s43, 1
      %p239 = por %p237, %p238
      %p240 = scmp.ne.s32.totalorder %s231, %s232
      %p241 = scmp.eq.s32.totalorder %s43, 0
      %p242 = por %p240, %p241
      %p243 = scmp.ne.s32.totalorder %s231, %s232
      %p244 = scmp.eq.s32.totalorder %s44, 1
      %p245 = por %p243, %p244
      %p247 = scmp.ne.s32.totalorder %s232, %s246
      %p248 = scmp.eq.s32.totalorder %s44, 0
      %p249 = por %p247, %p248
      %s251 = sadd.s32 %s250, 1
      %p254 = scmp.eq.s32.totalorder %s38, 1
      %p255 = scmp.ne.s32.totalorder %s250, %s252
      %p256 = scmp.eq.s32.totalorder %s38, 0
      %p257 = por %p255, %p256
      %p258 = scmp.ne.s32.totalorder %s250, %s252
      %p259 = scmp.eq.s32.totalorder %s43, 1
      %p260 = por %p258, %p259
      %p261 = scmp.ne.s32.totalorder %s252, %s253
      %p262 = scmp.eq.s32.totalorder %s43, 0
      %p263 = por %p261, %p262
      %p264 = scmp.ne.s32.totalorder %s252, %s253
      %p265 = scmp.eq.s32.totalorder %s44, 1
      %p266 = por %p264, %p265
      %p268 = scmp.ne.s32.totalorder %s253, %s267
      %p269 = scmp.eq.s32.totalorder %s44, 0
      %p270 = por %p268, %p269
      %s272 = sadd.s32 %s271, 1
      %p275 = scmp.eq.s32.totalorder %s38, 1
      %p276 = scmp.ne.s32.totalorder %s271, %s273
      %p277 = scmp.eq.s32.totalorder %s38, 0
      %p278 = por %p276, %p277
      %p279 = scmp.ne.s32.totalorder %s271, %s273
      %p280 = scmp.eq.s32.totalorder %s43, 1
      %p281 = por %p279, %p280
      %p282 = scmp.ne.s32.totalorder %s273, %s274
      %p283 = scmp.eq.s32.totalorder %s43, 0
      %p284 = por %p282, %p283
      %p285 = scmp.ne.s32.totalorder %s273, %s274
      %p286 = scmp.eq.s32.totalorder %s44, 1
      %p287 = por %p285, %p286
      %p289 = scmp.ne.s32.totalorder %s274, %s288
      %p290 = scmp.eq.s32.totalorder %s44, 0
      %p291 = por %p289, %p290
      %s293 = sadd.s32 %s292, 1
      %p296 = scmp.eq.s32.totalorder %s38, 1
      %p297 = scmp.ne.s32.totalorder %s292, %s294
      %p298 = scmp.eq.s32.totalorder %s38, 0
      %p299 = por %p297, %p298
      %p300 = scmp.ne.s32.totalorder %s292, %s294
      %p301 = scmp.eq.s32.totalorder %s43, 1
      %p302 = por %p300, %p301
      %p303 = scmp.ne.s32.totalorder %s294, %s295
      %p304 = scmp.eq.s32.totalorder %s43, 0
      %p305 = por %p303, %p304
      %p306 = scmp.ne.s32.totalorder %s294, %s295
      %p307 = scmp.eq.s32.totalorder %s44, 1
      %p308 = por %p306, %p307
      %p310 = scmp.ne.s32.totalorder %s295, %s309
      %p311 = scmp.eq.s32.totalorder %s44, 0
      %p312 = por %p310, %p311
      %s314 = sadd.s32 %s313, 1
      %p317 = scmp.eq.s32.totalorder %s38, 1
      %p318 = scmp.ne.s32.totalorder %s313, %s315
      %p319 = scmp.eq.s32.totalorder %s38, 0
      %p320 = por %p318, %p319
      %p321 = scmp.ne.s32.totalorder %s313, %s315
      %p322 = scmp.eq.s32.totalorder %s43, 1
      %p323 = por %p321, %p322
      %p324 = scmp.ne.s32.totalorder %s315, %s316
      %p325 = scmp.eq.s32.totalorder %s43, 0
      %p326 = por %p324, %p325
      %p327 = scmp.ne.s32.totalorder %s315, %s316
      %p328 = scmp.eq.s32.totalorder %s44, 1
      %p329 = por %p327, %p328
      %p331 = scmp.ne.s32.totalorder %s316, %s330
      %p332 = scmp.eq.s32.totalorder %s44, 0
      %p333 = por %p331, %p332
      %s335 = sadd.s32 %s334, 1
      %p338 = scmp.eq.s32.totalorder %s38, 1
      %p339 = scmp.ne.s32.totalorder %s334, %s336
      %p340 = scmp.eq.s32.totalorder %s38, 0
      %p341 = por %p339, %p340
      %p342 = scmp.ne.s32.totalorder %s334, %s336
      %p343 = scmp.eq.s32.totalorder %s43, 1
      %p344 = por %p342, %p343
      %p345 = scmp.ne.s32.totalorder %s336, %s337
      %p346 = scmp.eq.s32.totalorder %s43, 0
      %p347 = por %p345, %p346
      %p348 = scmp.ne.s32.totalorder %s336, %s337
      %p349 = scmp.eq.s32.totalorder %s44, 1
      %p350 = por %p348, %p349
      %p352 = scmp.ne.s32.totalorder %s337, %s351
      %p353 = scmp.eq.s32.totalorder %s44, 0
      %p354 = por %p352, %p353
      %s356 = sadd.s32 %s355, 1
      %p359 = scmp.eq.s32.totalorder %s38, 1
      %p360 = scmp.ne.s32.totalorder %s355, %s357
      %p361 = scmp.eq.s32.totalorder %s38, 0
      %p362 = por %p360, %p361
      %p363 = scmp.ne.s32.totalorder %s355, %s357
      %p364 = scmp.eq.s32.totalorder %s43, 1
      %p365 = por %p363, %p364
      %p366 = scmp.ne.s32.totalorder %s357, %s358
      %p367 = scmp.eq.s32.totalorder %s43, 0
      %p368 = por %p366, %p367
      %p369 = scmp.ne.s32.totalorder %s357, %s358
      %p370 = scmp.eq.s32.totalorder %s44, 1
      %p371 = por %p369, %p370
      %p373 = scmp.ne.s32.totalorder %s358, %s372
      %p374 = scmp.eq.s32.totalorder %s44, 0
      %p375 = por %p373, %p374
      %s377 = sadd.s32 %s376, 1
      %p380 = scmp.eq.s32.totalorder %s38, 1
      %p381 = scmp.ne.s32.totalorder %s376, %s378
      %p382 = scmp.eq.s32.totalorder %s38, 0
      %p383 = por %p381, %p382
      %p384 = scmp.ne.s32.totalorder %s376, %s378
      %p385 = scmp.eq.s32.totalorder %s43, 1
      %p386 = por %p384, %p385
      %p387 = scmp.ne.s32.totalorder %s378, %s379
      %p388 = scmp.eq.s32.totalorder %s43, 0
      %p389 = por %p387, %p388
      %p390 = scmp.ne.s32.totalorder %s378, %s379
      %p391 = scmp.eq.s32.totalorder %s44, 1
      %p392 = por %p390, %p391
      %p394 = scmp.ne.s32.totalorder %s379, %s393
      %p395 = scmp.eq.s32.totalorder %s44, 0
      %p396 = por %p394, %p395
      %s398 = sadd.s32 %s397, 1
      %p401 = scmp.eq.s32.totalorder %s38, 1
      %p402 = scmp.ne.s32.totalorder %s397, %s399
      %p403 = scmp.eq.s32.totalorder %s38, 0
      %p404 = por %p402, %p403
      %p405 = scmp.ne.s32.totalorder %s397, %s399
      %p406 = scmp.eq.s32.totalorder %s43, 1
      %p407 = por %p405, %p406
      %p408 = scmp.ne.s32.totalorder %s399, %s400
      %p409 = scmp.eq.s32.totalorder %s43, 0
      %p410 = por %p408, %p409
      %p411 = scmp.ne.s32.totalorder %s399, %s400
      %p412 = scmp.eq.s32.totalorder %s44, 1
      %p413 = por %p411, %p412
      %p415 = scmp.ne.s32.totalorder %s400, %s414
      %p416 = scmp.eq.s32.totalorder %s44, 0
      %p417 = por %p415, %p416
      %s419 = sadd.s32 %s418, 1
      %p422 = scmp.eq.s32.totalorder %s38, 1
      %p423 = scmp.ne.s32.totalorder %s418, %s420
      %p424 = scmp.eq.s32.totalorder %s38, 0
      %p425 = por %p423, %p424
      %p426 = scmp.ne.s32.totalorder %s418, %s420
      %p427 = scmp.eq.s32.totalorder %s43, 1
      %p428 = por %p426, %p427
      %p429 = scmp.ne.s32.totalorder %s420, %s421
      %p430 = scmp.eq.s32.totalorder %s43, 0
      %p431 = por %p429, %p430
      %p432 = scmp.ne.s32.totalorder %s420, %s421
      %p433 = scmp.eq.s32.totalorder %s44, 1
      %p434 = por %p432, %p433
      %p436 = scmp.ne.s32.totalorder %s421, %s435
      %p437 = scmp.eq.s32.totalorder %s44, 0
      %p438 = por %p436, %p437
      %s440 = sadd.s32 %s439, 1
      %p443 = scmp.eq.s32.totalorder %s38, 1
      %p444 = scmp.ne.s32.totalorder %s439, %s441
      %p445 = scmp.eq.s32.totalorder %s38, 0
      %p446 = por %p444, %p445
      %p447 = scmp.ne.s32.totalorder %s439, %s441
      %p448 = scmp.eq.s32.totalorder %s43, 1
      %p449 = por %p447, %p448
      %p450 = scmp.ne.s32.totalorder %s441, %s442
      %p451 = scmp.eq.s32.totalorder %s43, 0
      %p452 = por %p450, %p451
      %p453 = scmp.ne.s32.totalorder %s441, %s442
      %p454 = scmp.eq.s32.totalorder %s44, 1
      %p455 = por %p453, %p454
      %p457 = scmp.ne.s32.totalorder %s442, %s456
      %p458 = scmp.eq.s32.totalorder %s44, 0
      %p459 = por %p457, %p458
      %s461 = sadd.s32 %s460, 1
      %p464 = scmp.eq.s32.totalorder %s38, 1
      %p465 = scmp.ne.s32.totalorder %s460, %s462
      %p466 = scmp.eq.s32.totalorder %s38, 0
      %p467 = por %p465, %p466
      %p468 = scmp.ne.s32.totalorder %s460, %s462
      %p469 = scmp.eq.s32.totalorder %s43, 1
      %p470 = por %p468, %p469
      %p471 = scmp.ne.s32.totalorder %s462, %s463
      %p472 = scmp.eq.s32.totalorder %s43, 0
      %p473 = por %p471, %p472
      %p474 = scmp.ne.s32.totalorder %s462, %s463
      %p475 = scmp.eq.s32.totalorder %s44, 1
      %p476 = por %p474, %p475
      %p478 = scmp.ne.s32.totalorder %s463, %s477
      %p479 = scmp.eq.s32.totalorder %s44, 0
      %p480 = por %p478, %p479
      %s482 = sadd.s32 %s481, 1
      %p485 = scmp.eq.s32.totalorder %s38, 1
      %p486 = scmp.ne.s32.totalorder %s481, %s483
      %p487 = scmp.eq.s32.totalorder %s38, 0
      %p488 = por %p486, %p487
      %p489 = scmp.ne.s32.totalorder %s481, %s483
      %p490 = scmp.eq.s32.totalorder %s43, 1
      %p491 = por %p489, %p490
      %p492 = scmp.ne.s32.totalorder %s483, %s484
      %p493 = scmp.eq.s32.totalorder %s43, 0
      %p494 = por %p492, %p493
      %p495 = scmp.ne.s32.totalorder %s483, %s484
      %p496 = scmp.eq.s32.totalorder %s44, 1
      %p497 = por %p495, %p496
      %p499 = scmp.ne.s32.totalorder %s484, %s498
      %p500 = scmp.eq.s32.totalorder %s44, 0
      %p501 = por %p499, %p500
      %s503 = sadd.s32 %s502, 1
      %p506 = scmp.eq.s32.totalorder %s38, 1
      %p507 = scmp.ne.s32.totalorder %s502, %s504
      %p508 = scmp.eq.s32.totalorder %s38, 0
      %p509 = por %p507, %p508
      %p510 = scmp.ne.s32.totalorder %s502, %s504
      %p511 = scmp.eq.s32.totalorder %s43, 1
      %p512 = por %p510, %p511
      %p513 = scmp.ne.s32.totalorder %s504, %s505
      %p514 = scmp.eq.s32.totalorder %s43, 0
      %p515 = por %p513, %p514
      %p516 = scmp.ne.s32.totalorder %s504, %s505
      %p517 = scmp.eq.s32.totalorder %s44, 1
      %p518 = por %p516, %p517
      %p520 = scmp.ne.s32.totalorder %s505, %s519
      %p521 = scmp.eq.s32.totalorder %s44, 0
      %p522 = por %p520, %p521
      %s523 = ssub.s32 %s38, %s45
      %p524 = scmp.eq.s32.totalorder %s523, 0
      %s526 = sadd.s32 %s525, 1
      %s527 = scalar_select %p524, %s525, %s526
      %p530 = pneg %p524
      %p531 = scmp.eq.s32.totalorder %s38, 1
      %p532 = por %p530, %p531
      %p533 = scmp.ne.s32.totalorder %s525, %s528
      %p534 = scmp.eq.s32.totalorder %s38, 0
      %p535 = por %p533, %p534
      %p536 = scmp.ne.s32.totalorder %s525, %s528
      %p537 = scmp.eq.s32.totalorder %s43, 1
      %p538 = por %p536, %p537
      %p539 = scmp.ne.s32.totalorder %s528, %s529
      %p540 = scmp.eq.s32.totalorder %s43, 0
      %p541 = por %p539, %p540
      %p542 = scmp.ne.s32.totalorder %s528, %s529
      %p543 = scmp.eq.s32.totalorder %s44, 1
      %p544 = por %p542, %p543
      %p546 = scmp.ne.s32.totalorder %s529, %s545
      %p547 = scmp.eq.s32.totalorder %s44, 0
      %p548 = por %p546, %p547
      %s549 = ssub.s32 %s38, %s45
      %p550 = scmp.eq.s32.totalorder %s549, 0
      %s552 = sadd.s32 %s551, 1
      %s553 = scalar_select %p550, %s551, %s552
      %p556 = pneg %p550
      %p557 = scmp.eq.s32.totalorder %s38, 1
      %p558 = por %p556, %p557
      %p559 = scmp.ne.s32.totalorder %s551, %s554
      %p560 = scmp.eq.s32.totalorder %s38, 0
      %p561 = por %p559, %p560
      %p562 = scmp.ne.s32.totalorder %s551, %s554
      %p563 = scmp.eq.s32.totalorder %s43, 1
      %p564 = por %p562, %p563
      %p565 = scmp.ne.s32.totalorder %s554, %s555
      %p566 = scmp.eq.s32.totalorder %s43, 0
      %p567 = por %p565, %p566
      %p568 = scmp.ne.s32.totalorder %s554, %s555
      %p569 = scmp.eq.s32.totalorder %s44, 1
      %p570 = por %p568, %p569
      %p572 = scmp.ne.s32.totalorder %s555, %s571
      %p573 = scmp.eq.s32.totalorder %s44, 0
      %p574 = por %p572, %p573
      %s575 = ssub.s32 %s38, %s45
      %p576 = scmp.eq.s32.totalorder %s575, 0
      %s578 = sadd.s32 %s577, 1
      %s579 = scalar_select %p576, %s577, %s578
      %p582 = pneg %p576
      %p583 = scmp.eq.s32.totalorder %s38, 1
      %p584 = por %p582, %p583
      %p585 = scmp.ne.s32.totalorder %s577, %s580
      %p586 = scmp.eq.s32.totalorder %s38, 0
      %p587 = por %p585, %p586
      %p588 = scmp.ne.s32.totalorder %s577, %s580
      %p589 = scmp.eq.s32.totalorder %s43, 1
      %p590 = por %p588, %p589
      %p591 = scmp.ne.s32.totalorder %s580, %s581
      %p592 = scmp.eq.s32.totalorder %s43, 0
      %p593 = por %p591, %p592
      %p594 = scmp.ne.s32.totalorder %s580, %s581
      %p595 = scmp.eq.s32.totalorder %s44, 1
      %p596 = por %p594, %p595
      %p598 = scmp.ne.s32.totalorder %s581, %s597
      %p599 = scmp.eq.s32.totalorder %s44, 0
      %p600 = por %p598, %p599
      %s601 = ssub.s32 %s38, %s45
      %p602 = scmp.eq.s32.totalorder %s601, 0
      %s604 = sadd.s32 %s603, 1
      %s605 = scalar_select %p602, %s603, %s604
      %p608 = pneg %p602
      %p609 = scmp.eq.s32.totalorder %s38, 1
      %p610 = por %p608, %p609
      %p611 = scmp.ne.s32.totalorder %s603, %s606
      %p612 = scmp.eq.s32.totalorder %s38, 0
      %p613 = por %p611, %p612
      %p614 = scmp.ne.s32.totalorder %s603, %s606
      %p615 = scmp.eq.s32.totalorder %s43, 1
      %p616 = por %p614, %p615
      %p617 = scmp.ne.s32.totalorder %s606, %s607
      %p618 = scmp.eq.s32.totalorder %s43, 0
      %p619 = por %p617, %p618
      %p620 = scmp.ne.s32.totalorder %s606, %s607
      %p621 = scmp.eq.s32.totalorder %s44, 1
      %p622 = por %p620, %p621
      %p624 = scmp.ne.s32.totalorder %s607, %s623
      %p625 = scmp.eq.s32.totalorder %s44, 0
      %p626 = por %p624, %p625
      %p627 = scmp.le.s32.totalorder 1, %s38
      %p628 = scmp.lt.s32.totalorder %s38, 3
      %p629 = pnand %p627, %p628
      %p630 = pneg %p629
      // Predicated region
      $region9: #{fcrn_forward.1} parent=5 // pred_check
        _
      $region10: #{fcrn_forward.1} parent=5 // pred_check_branch
        %632 = sbr.rel (%p629) target = $region12
      $region11: #{fcrn_forward.1} parent=5 // pred_region
        %s633 = ssub.s32 %s38, 1
        // Predicated region
        $region13: #{fcrn_forward.1} parent=11 // pred_check
          %p634 = pneg %p137
        $region14: #{fcrn_forward.1} parent=11 // pred_check_branch
          %636 = sbr.rel (%p634) target = $region16
        $region15: #{fcrn_forward.1} parent=11 // pred_region
          _
        $region16: #{fcrn_forward.1} parent=11 // pred_fallthru
          _
        // Predicated region
        $region17: #{fcrn_forward.1} parent=11 // pred_check
          %p637 = pneg %p158
        $region18: #{fcrn_forward.1} parent=11 // pred_check_branch
          %639 = sbr.rel (%p637) target = $region20
        $region19: #{fcrn_forward.1} parent=11 // pred_region
          _
        $region20: #{fcrn_forward.1} parent=11 // pred_fallthru
          _
        // Predicated region
        $region21: #{fcrn_forward.1} parent=11 // pred_check
          %p640 = pneg %p179
        $region22: #{fcrn_forward.1} parent=11 // pred_check_branch
          %642 = sbr.rel (%p640) target = $region24
        $region23: #{fcrn_forward.1} parent=11 // pred_region
          _
        $region24: #{fcrn_forward.1} parent=11 // pred_fallthru
          _
        // Predicated region
        $region25: #{fcrn_forward.1} parent=11 // pred_check
          %p643 = pneg %p200
        $region26: #{fcrn_forward.1} parent=11 // pred_check_branch
          %645 = sbr.rel (%p643) target = $region28
        $region27: #{fcrn_forward.1} parent=11 // pred_region
          _
        $region28: #{fcrn_forward.1} parent=11 // pred_fallthru
          _
        // Predicated region
        $region29: #{fcrn_forward.1} parent=11 // pred_check
          %p646 = pneg %p221
        $region30: #{fcrn_forward.1} parent=11 // pred_check_branch
          %648 = sbr.rel (%p646) target = $region32
        $region31: #{fcrn_forward.1} parent=11 // pred_region
          _
        $region32: #{fcrn_forward.1} parent=11 // pred_fallthru
          _
        // Predicated region
        $region33: #{fcrn_forward.1} parent=11 // pred_check
          %p649 = pneg %p242
        $region34: #{fcrn_forward.1} parent=11 // pred_check_branch
          %651 = sbr.rel (%p649) target = $region36
        $region35: #{fcrn_forward.1} parent=11 // pred_region
          _
        $region36: #{fcrn_forward.1} parent=11 // pred_fallthru
          _
        // Predicated region
        $region37: #{fcrn_forward.1} parent=11 // pred_check
          %p652 = pneg %p263
        $region38: #{fcrn_forward.1} parent=11 // pred_check_branch
          %654 = sbr.rel (%p652) target = $region40
        $region39: #{fcrn_forward.1} parent=11 // pred_region
          _
        $region40: #{fcrn_forward.1} parent=11 // pred_fallthru
          _
        // Predicated region
        $region41: #{fcrn_forward.1} parent=11 // pred_check
          %p655 = pneg %p284
        $region42: #{fcrn_forward.1} parent=11 // pred_check_branch
          %657 = sbr.rel (%p655) target = $region44
        $region43: #{fcrn_forward.1} parent=11 // pred_region
          _
        $region44: #{fcrn_forward.1} parent=11 // pred_fallthru
          _
        // Predicated region
        $region45: #{fcrn_forward.1} parent=11 // pred_check
          %p658 = pneg %p305
        $region46: #{fcrn_forward.1} parent=11 // pred_check_branch
          %660 = sbr.rel (%p658) target = $region48
        $region47: #{fcrn_forward.1} parent=11 // pred_region
          _
        $region48: #{fcrn_forward.1} parent=11 // pred_fallthru
          _
        // Predicated region
        $region49: #{fcrn_forward.1} parent=11 // pred_check
          %p661 = pneg %p326
        $region50: #{fcrn_forward.1} parent=11 // pred_check_branch
          %663 = sbr.rel (%p661) target = $region52
        $region51: #{fcrn_forward.1} parent=11 // pred_region
          _
        $region52: #{fcrn_forward.1} parent=11 // pred_fallthru
          _
        // Predicated region
        $region53: #{fcrn_forward.1} parent=11 // pred_check
          %p664 = pneg %p347
        $region54: #{fcrn_forward.1} parent=11 // pred_check_branch
          %666 = sbr.rel (%p664) target = $region56
        $region55: #{fcrn_forward.1} parent=11 // pred_region
          _
        $region56: #{fcrn_forward.1} parent=11 // pred_fallthru
          _
        // Predicated region
        $region57: #{fcrn_forward.1} parent=11 // pred_check
          %p667 = pneg %p368
        $region58: #{fcrn_forward.1} parent=11 // pred_check_branch
          %669 = sbr.rel (%p667) target = $region60
        $region59: #{fcrn_forward.1} parent=11 // pred_region
          _
        $region60: #{fcrn_forward.1} parent=11 // pred_fallthru
          _
        // Predicated region
        $region61: #{fcrn_forward.1} parent=11 // pred_check
          %p670 = pneg %p389
        $region62: #{fcrn_forward.1} parent=11 // pred_check_branch
          %672 = sbr.rel (%p670) target = $region64
        $region63: #{fcrn_forward.1} parent=11 // pred_region
          _
        $region64: #{fcrn_forward.1} parent=11 // pred_fallthru
          _
        // Predicated region
        $region65: #{fcrn_forward.1} parent=11 // pred_check
          %p673 = pneg %p410
        $region66: #{fcrn_forward.1} parent=11 // pred_check_branch
          %675 = sbr.rel (%p673) target = $region68
        $region67: #{fcrn_forward.1} parent=11 // pred_region
          _
        $region68: #{fcrn_forward.1} parent=11 // pred_fallthru
          _
        // Predicated region
        $region69: #{fcrn_forward.1} parent=11 // pred_check
          %p676 = pneg %p431
        $region70: #{fcrn_forward.1} parent=11 // pred_check_branch
          %678 = sbr.rel (%p676) target = $region72
        $region71: #{fcrn_forward.1} parent=11 // pred_region
          _
        $region72: #{fcrn_forward.1} parent=11 // pred_fallthru
          _
        // Predicated region
        $region73: #{fcrn_forward.1} parent=11 // pred_check
          %p679 = pneg %p452
        $region74: #{fcrn_forward.1} parent=11 // pred_check_branch
          %681 = sbr.rel (%p679) target = $region76
        $region75: #{fcrn_forward.1} parent=11 // pred_region
          _
        $region76: #{fcrn_forward.1} parent=11 // pred_fallthru
          _
        // Predicated region
        $region77: #{fcrn_forward.1} parent=11 // pred_check
          %p682 = pneg %p473
        $region78: #{fcrn_forward.1} parent=11 // pred_check_branch
          %684 = sbr.rel (%p682) target = $region80
        $region79: #{fcrn_forward.1} parent=11 // pred_region
          _
        $region80: #{fcrn_forward.1} parent=11 // pred_fallthru
          _
        // Predicated region
        $region81: #{fcrn_forward.1} parent=11 // pred_check
          %p685 = pneg %p494
        $region82: #{fcrn_forward.1} parent=11 // pred_check_branch
          %687 = sbr.rel (%p685) target = $region84
        $region83: #{fcrn_forward.1} parent=11 // pred_region
          _
        $region84: #{fcrn_forward.1} parent=11 // pred_fallthru
          _
        // Predicated region
        $region85: #{fcrn_forward.1} parent=11 // pred_check
          %p688 = pneg %p515
        $region86: #{fcrn_forward.1} parent=11 // pred_check_branch
          %690 = sbr.rel (%p688) target = $region88
        $region87: #{fcrn_forward.1} parent=11 // pred_region
          _
        $region88: #{fcrn_forward.1} parent=11 // pred_fallthru
          _
      $region12: #{fcrn_forward.1} parent=5 // pred_fallthru
        _
      %p691 = scmp.lt.s32.totalorder %s38, 2
      // Predicated region
      $region89: #{fcrn_forward.1} parent=5 // pred_check
        %p692 = pneg %p691
      $region90: #{fcrn_forward.1} parent=5 // pred_check_branch
        %694 = sbr.rel (%p692) target = $region92
      $region91: #{fcrn_forward.1} parent=5 // pred_region
        // Predicated region
        $region93: #{fcrn_forward.1} parent=91 // pred_check
          %p695 = pneg %p58
        $region94: #{fcrn_forward.1} parent=91 // pred_check_branch
          %697 = sbr.rel (%p695) target = $region96
        $region95: #{fcrn_forward.1} parent=91 // pred_region
          %p698 = scmp.lt.s32.totalorder %s38, 1
          %s699 = scalar_select %p698, %s38, 1
          %s700 = smul.addr %s699, 2
          %s701 = smul.addr %s700, 8
          %s702 = scalar_lea.vmem %s0, %s701
        $region96: #{fcrn_forward.1} parent=91 // pred_fallthru
          _
        // Predicated region
        $region97: #{fcrn_forward.1} parent=91 // pred_check
          %p703 = pneg %p84
        $region98: #{fcrn_forward.1} parent=91 // pred_check_branch
          %705 = sbr.rel (%p703) target = $region100
        $region99: #{fcrn_forward.1} parent=91 // pred_region
          %p706 = scmp.lt.s32.totalorder %s38, 1
          %s707 = scalar_select %p706, %s38, 1
          %s708 = smul.addr %s707, 4
          %s709 = scalar_lea.vmem %s1, %s708
        $region100: #{fcrn_forward.1} parent=91 // pred_fallthru
          _
        // Predicated region
        $region101: #{fcrn_forward.1} parent=91 // pred_check
          %p710 = pneg %p110
        $region102: #{fcrn_forward.1} parent=91 // pred_check_branch
          %712 = sbr.rel (%p710) target = $region104
        $region103: #{fcrn_forward.1} parent=91 // pred_region
          %p713 = scmp.lt.s32.totalorder %s38, 1
          %s714 = scalar_select %p713, %s38, 1
          %s715 = smul.addr %s714, 4
          %s716 = scalar_lea.vmem %s2, %s715
        $region104: #{fcrn_forward.1} parent=91 // pred_fallthru
          _
      $region92: #{fcrn_forward.1} parent=5 // pred_fallthru
        _
      %p717 = scmp.le.s32.totalorder 1, %s38
      %p718 = scmp.lt.s32.totalorder %s38, 3
      %p719 = pnand %p717, %p718
      %p720 = pneg %p719
      // Predicated region
      $region105: #{fcrn_forward.1} parent=5 // pred_check
        _
      $region106: #{fcrn_forward.1} parent=5 // pred_check_branch
        %722 = sbr.rel (%p719) target = $region108
      $region107: #{fcrn_forward.1} parent=5 // pred_region
        %s723 = ssub.s32 %s38, 1
        %p724 = scmp.lt.s32.totalorder %s43, 1
        %s725 = scalar_select %p724, %s43, 1
        %s726 = smul.addr %s725, 2
        %s727 = smul.addr %s726, 8
        %s728 = scalar_lea.vmem %s0, %s727
        %p729 = pneg %p64
        %p730 = pneg %p61
        %p731 = scmp.lt.s32.totalorder %s43, 1
        %s732 = scalar_select %p731, %s43, 1
        %s733 = smul.addr %s732, 4
        %s734 = scalar_lea.vmem %s1, %s733
        %p735 = pneg %p90
        %p736 = pneg %p87
        %p737 = scmp.lt.s32.totalorder %s43, 1
        %s738 = scalar_select %p737, %s43, 1
        %s739 = smul.addr %s738, 4
        %s740 = scalar_lea.vmem %s2, %s739
        %p741 = pneg %p116
        %p742 = pneg %p113
        %p743 = pneg %p137
        %p744 = pneg %p134
        %p745 = pneg %p158
        %p746 = pneg %p155
        %p747 = pneg %p179
        %p748 = pneg %p176
        %p749 = pneg %p200
        %p750 = pneg %p197
        %p751 = pneg %p221
        %p752 = pneg %p218
        %p753 = pneg %p242
        %p754 = pneg %p239
        %p755 = pneg %p263
        %p756 = pneg %p260
        %p757 = pneg %p284
        %p758 = pneg %p281
        %p759 = pneg %p305
        %p760 = pneg %p302
        %p761 = pneg %p326
        %p762 = pneg %p323
        %p763 = pneg %p347
        %p764 = pneg %p344
        %p765 = pneg %p368
        %p766 = pneg %p365
        %p767 = pneg %p389
        %p768 = pneg %p386
        %p769 = pneg %p410
        %p770 = pneg %p407
        %p771 = pneg %p431
        %p772 = pneg %p428
        %p773 = pneg %p452
        %p774 = pneg %p449
        %p775 = pneg %p473
        %p776 = pneg %p470
        %p777 = pneg %p494
        %p778 = pneg %p491
        %p779 = pneg %p515
        %p780 = pneg %p512
        %p781 = pneg %p541
        %p782 = pneg %p538
        %p783 = scmp.lt.s32.totalorder %s43, 1
        %s784 = scalar_select %p783, %s43, 1
        %s785 = smul.addr %s784, 2
        %s786 = smul.addr %s785, 8
        %s787 = scalar_lea.vmem %s22, %s786
        %p788 = pneg %p567
        %p789 = pneg %p564
        %p790 = scmp.lt.s32.totalorder %s43, 1
        %s791 = scalar_select %p790, %s43, 1
        %s792 = smul.addr %s791, 2
        %s793 = smul.addr %s792, 8
        %s794 = scalar_lea.vmem %s23, %s793
        %p795 = pneg %p593
        %p796 = pneg %p590
        %s797 = sand.u32 %s580, 1
        %s798 = scalar_lea.sflag [#allocation6], %s797
        %s799 = sand.u32 %s580, 1
        %s800 = smul.addr %s799, 4
        %s801 = scalar_lea.vmem [#allocation5], %s800
        %p802 = pneg %p619
        %p803 = pneg %p616
        %s804 = sand.u32 %s606, 1
        %s805 = scalar_lea.sflag [#allocation8], %s804
        %s806 = sand.u32 %s606, 1
        %s807 = smul.addr %s806, 4
        %s808 = scalar_lea.vmem [#allocation7], %s807
        %p809 = scmp.lt.s32.totalorder %s43, 1
        %s810 = scalar_select %p809, %s43, 1
        %s811 = smul.addr %s810, 2
        %s812 = smul.addr %s811, 8
        %s813 = scalar_lea.vmem %s0, %s812
        %p814 = scmp.lt.s32.totalorder %s43, 1
        %s815 = scalar_select %p814, %s43, 1
        %s816 = smul.addr %s815, 4
        %s817 = scalar_lea.vmem %s1, %s816
        %p818 = scmp.lt.s32.totalorder %s43, 1
        %s819 = scalar_select %p818, %s43, 1
        %s820 = smul.addr %s819, 4
        %s821 = scalar_lea.vmem %s2, %s820
        %p822 = scmp.lt.s32.totalorder %s43, 1
        %s823 = scalar_select %p822, %s43, 1
        %s824 = smul.addr %s823, 2
        %s825 = smul.addr %s824, 8
        %s826 = scalar_lea.vmem %s22, %s825
        %p827 = scmp.lt.s32.totalorder %s43, 1
        %s828 = scalar_select %p827, %s43, 1
        %s829 = smul.addr %s828, 2
        %s830 = smul.addr %s829, 8
        %s831 = scalar_lea.vmem %s23, %s830
        %832 = vst [vmem:[#allocation3] sm:$0xff] 0.0
        %833 = vst [vmem:[#allocation3 + $0x8] sm:$0xff] 0.0
        %834 = vst [vmem:[#allocation3 + $0x10] sm:$0xff] 0.0
        %835 = vst [vmem:[#allocation3 + $0x18] sm:$0xff] 0.0
        %836 = vst [vmem:[#allocation3 + $0x20] sm:$0xff] 0.0
        %837 = vst [vmem:[#allocation3 + $0x28] sm:$0xff] 0.0
        %838 = vst [vmem:[#allocation3 + $0x30] sm:$0xff] 0.0
        %839 = vst [vmem:[#allocation3 + $0x38] sm:$0xff] 0.0
        %840 = vst [vmem:[#allocation3 + $0x40] sm:$0xff] 0.0
        %841 = vst [vmem:[#allocation3 + $0x48] sm:$0xff] 0.0
        %842 = vst [vmem:[#allocation3 + $0x50] sm:$0xff] 0.0
        %843 = vst [vmem:[#allocation3 + $0x58] sm:$0xff] 0.0
        %844 = vst [vmem:[#allocation3 + $0x60] sm:$0xff] 0.0
        %845 = vst [vmem:[#allocation3 + $0x68] sm:$0xff] 0.0
        %846 = vst [vmem:[#allocation3 + $0x70] sm:$0xff] 0.0
        %847 = vst [vmem:[#allocation3 + $0x78] sm:$0xff] 0.0
        %v848 = vld [vmem:[%s813] sm:$0xff]
        %v849 = vld [vmem:[%s813 + $0x8] sm:$0x1f]
        %vm850 = vcmask 261120
        %851 = vst.msk [vmem:[#allocation2] sm:$0xff] %vm850, 0.0
        %852 = vst.msk [vmem:[#allocation2 + $0x8] sm:$0xff] %vm850, 0.0
        %vm853 = vcmask 256000
        %854 = vst.msk [vmem:[#allocation2 + $0x10] sm:$0x7] %vm853, 0.0
        %vm855 = vcmask 31744
        %856 = vst.msk [vmem:[#allocation2] sm:$0xff] %vm855, %v848
        %vm857 = vcmask 28672
        %858 = vst.msk [vmem:[#allocation2 + $0x8] sm:$0x1f] %vm857, %v849
        %v859 = vld [vmem:[#allocation2] sm:$0xff]
        %v860 = vld [vmem:[#allocation2 + $0x8] sm:$0xff]
        %861 = vst.msk [vmem:[#allocation3] sm:$0xff] %vm855, %v859
        %862 = vst.msk [vmem:[#allocation3 + $0x40] sm:$0xff] %vm855, %v860
        %v863 = vld [vmem:[#allocation2 + $0x1] sm:$0xff]
        %v864 = vld [vmem:[#allocation2 + $0x9] sm:$0xff]
        %865 = vst.msk [vmem:[#allocation3 + $0x8] sm:$0xff] %vm855, %v863
        %866 = vst.msk [vmem:[#allocation3 + $0x48] sm:$0xff] %vm855, %v864
        %v867 = vld [vmem:[#allocation2 + $0x2] sm:$0xff]
        %v868 = vld [vmem:[#allocation2 + $0xa] sm:$0xff]
        %869 = vst.msk [vmem:[#allocation3 + $0x10] sm:$0xff] %vm855, %v867
        %870 = vst.msk [vmem:[#allocation3 + $0x50] sm:$0xff] %vm855, %v868
        %v871 = vld [vmem:[#allocation2 + $0x3] sm:$0xff]
        %v872 = vld [vmem:[#allocation2 + $0xb] sm:$0xff]
        %873 = vst.msk [vmem:[#allocation3 + $0x18] sm:$0xff] %vm855, %v871
        %874 = vst.msk [vmem:[#allocation3 + $0x58] sm:$0xff] %vm855, %v872
        %v875 = vld [vmem:[#allocation3] sm:$0xff]
        %v876 = vld [vmem:[#allocation3 + $0x8] sm:$0xff]
        %v877 = vld [vmem:[#allocation3 + $0x10] sm:$0xff]
        %v878 = vld [vmem:[#allocation3 + $0x18] sm:$0xff]
        %v879 = vld [vmem:[#allocation3 + $0x40] sm:$0xff]
        %v880 = vld [vmem:[#allocation3 + $0x48] sm:$0xff]
        %v881 = vld [vmem:[#allocation3 + $0x50] sm:$0xff]
        %v882 = vld [vmem:[#allocation3 + $0x58] sm:$0xff]
        %v883 = vld [vmem:[%s3] sm:$0xff]
        %v884 = vld [vmem:[%s3 + $0x8] sm:$0xff]
        %v885 = vld [vmem:[%s3 + $0x10] sm:$0xff]
        %v886 = vld [vmem:[%s3 + $0x18] sm:$0xff]
        %v887 = vld [vmem:[%s3 + $0x20] sm:$0xff]
        %v888 = vld [vmem:[%s3 + $0x28] sm:$0xff]
        %v889 = vld [vmem:[%s3 + $0x30] sm:$0xff]
        %v890 = vld [vmem:[%s3 + $0x38] sm:$0xff]
        %v891 = vld [vmem:[%s3 + $0x40] sm:$0xff]
        %v892 = vld [vmem:[%s3 + $0x48] sm:$0xff]
        %v893 = vld [vmem:[%s3 + $0x50] sm:$0xff]
        %v894 = vld [vmem:[%s3 + $0x58] sm:$0xff]
        %v895 = vld [vmem:[%s3 + $0x60] sm:$0xff]
        %v896 = vld [vmem:[%s3 + $0x68] sm:$0xff]
        %v897 = vld [vmem:[%s3 + $0x70] sm:$0xff]
        %v898 = vld [vmem:[%s3 + $0x78] sm:$0xff]
        %v899 = vld [vmem:[%s3 + $0x80] sm:$0xff]
        %v900 = vld [vmem:[%s3 + $0x88] sm:$0xff]
        %v901 = vld [vmem:[%s3 + $0x90] sm:$0xff]
        %v902 = vld [vmem:[%s3 + $0x98] sm:$0xff]
        %v903 = vld [vmem:[%s3 + $0xa0] sm:$0xff]
        %v904 = vld [vmem:[%s3 + $0xa8] sm:$0xff]
        %v905 = vld [vmem:[%s3 + $0xb0] sm:$0xff]
        %v906 = vld [vmem:[%s3 + $0xb8] sm:$0xff]
        %v907 = vld [vmem:[%s3 + $0xc0] sm:$0xff]
        %v908 = vld [vmem:[%s3 + $0xc8] sm:$0xff]
        %v909 = vld [vmem:[%s3 + $0xd0] sm:$0xff]
        %v910 = vld [vmem:[%s3 + $0xd8] sm:$0xff]
        %v911 = vld [vmem:[%s3 + $0xe0] sm:$0xff]
        %v912 = vld [vmem:[%s3 + $0xe8] sm:$0xff]
        %v913 = vld [vmem:[%s3 + $0xf0] sm:$0xff]
        %v914 = vld [vmem:[%s3 + $0xf8] sm:$0xff]
        %v915 = vld [vmem:[%s3 + $0x100] sm:$0xff]
        %v916 = vld [vmem:[%s3 + $0x108] sm:$0xff]
        %v917 = vld [vmem:[%s3 + $0x110] sm:$0xff]
        %v918 = vld [vmem:[%s3 + $0x118] sm:$0xff]
        %v919 = vld [vmem:[%s3 + $0x120] sm:$0xff]
        %v920 = vld [vmem:[%s3 + $0x128] sm:$0xff]
        %v921 = vld [vmem:[%s3 + $0x130] sm:$0xff]
        %v922 = vld [vmem:[%s3 + $0x138] sm:$0xff]
        %v923 = vld [vmem:[%s3 + $0x140] sm:$0xff]
        %v924 = vld [vmem:[%s3 + $0x148] sm:$0xff]
        %v925 = vld [vmem:[%s3 + $0x150] sm:$0xff]
        %v926 = vld [vmem:[%s3 + $0x158] sm:$0xff]
        %v927 = vld [vmem:[%s3 + $0x160] sm:$0xff]
        %v928 = vld [vmem:[%s3 + $0x168] sm:$0xff]
        %v929 = vld [vmem:[%s3 + $0x170] sm:$0xff]
        %v930 = vld [vmem:[%s3 + $0x178] sm:$0xff]
        %v931 = vld [vmem:[%s3 + $0x180] sm:$0xff]
        %v932 = vld [vmem:[%s3 + $0x188] sm:$0xff]
        %v933 = vld [vmem:[%s3 + $0x190] sm:$0xff]
        %v934 = vld [vmem:[%s3 + $0x198] sm:$0xff]
        %v935 = vld [vmem:[%s3 + $0x1a0] sm:$0xff]
        %v936 = vld [vmem:[%s3 + $0x1a8] sm:$0xff]
        %v937 = vld [vmem:[%s3 + $0x1b0] sm:$0xff]
        %v938 = vld [vmem:[%s3 + $0x1b8] sm:$0xff]
        %v939 = vld [vmem:[%s3 + $0x1c0] sm:$0xff]
        %v940 = vld [vmem:[%s3 + $0x1c8] sm:$0xff]
        %v941 = vld [vmem:[%s3 + $0x1d0] sm:$0xff]
        %v942 = vld [vmem:[%s3 + $0x1d8] sm:$0xff]
        %v943 = vld [vmem:[%s3 + $0x1e0] sm:$0xff]
        %v944 = vld [vmem:[%s3 + $0x1e8] sm:$0xff]
        %v945 = vld [vmem:[%s3 + $0x1f0] sm:$0xff]
        %v946 = vld [vmem:[%s3 + $0x1f8] sm:$0xff]
        %v947 = vld [vmem:[%s4] sm:$0x1]
        %v949 = vperm.slane %v947, 0
        %951 = vmatpush.msra.mxu0 %v898
        %952 = vmatpush.msra.mxu0 %v897
        %953 = vmatpush.msra.mxu0 %v896
        %954 = vmatpush.msra.mxu0 %v895
        %955 = vmatpush.msra.mxu0 %v894
        %956 = vmatpush.msra.mxu0 %v893
        %957 = vmatpush.msra.mxu0 %v892
        %958 = vmatpush.msra.mxu0 %v891
        %959 = vmatpush.msra.mxu0 %v890
        %960 = vmatpush.msra.mxu0 %v889
        %961 = vmatpush.msra.mxu0 %v888
        %962 = vmatpush.msra.mxu0 %v887
        %963 = vmatpush.msra.mxu0 %v886
        %964 = vmatpush.msra.mxu0 %v885
        %965 = vmatpush.msra.mxu0 %v884
        %966 = vmatpush.msra.mxu0 %v883
        %967 = vmatmul.f32.gmra.mxu0 %v875
        %v968 = vpop.f32.mrf.mxu0
        %v969 = vadd.f32 %v949, %v968
        %970 = vmatmul.f32.gmra.mxu0 %v879
        %v971 = vpop.f32.mrf.mxu0
        %v972 = vadd.f32 %v949, %v971
        %973 = vdwg.mxu0
        %974 = vmatpush.msra.mxu0 %v914
        %975 = vmatpush.msra.mxu0 %v913
        %976 = vmatpush.msra.mxu0 %v912
        %977 = vmatpush.msra.mxu0 %v911
        %978 = vmatpush.msra.mxu0 %v910
        %979 = vmatpush.msra.mxu0 %v909
        %980 = vmatpush.msra.mxu0 %v908
        %981 = vmatpush.msra.mxu0 %v907
        %982 = vmatpush.msra.mxu0 %v906
        %983 = vmatpush.msra.mxu0 %v905
        %984 = vmatpush.msra.mxu0 %v904
        %985 = vmatpush.msra.mxu0 %v903
        %986 = vmatpush.msra.mxu0 %v902
        %987 = vmatpush.msra.mxu0 %v901
        %988 = vmatpush.msra.mxu0 %v900
        %989 = vmatpush.msra.mxu0 %v899
        %990 = vmatmul.f32.gmra.mxu0 %v876
        %v991 = vpop.f32.mrf.mxu0
        %v992 = vadd.f32 %v969, %v991
        %993 = vmatmul.f32.gmra.mxu0 %v880
        %v994 = vpop.f32.mrf.mxu0
        %v995 = vadd.f32 %v972, %v994
        %996 = vdwg.mxu0
        %997 = vmatpush.msra.mxu0 %v930
        %998 = vmatpush.msra.mxu0 %v929
        %999 = vmatpush.msra.mxu0 %v928
        %1000 = vmatpush.msra.mxu0 %v927
        %1001 = vmatpush.msra.mxu0 %v926
        %1002 = vmatpush.msra.mxu0 %v925
        %1003 = vmatpush.msra.mxu0 %v924
        %1004 = vmatpush.msra.mxu0 %v923
        %1005 = vmatpush.msra.mxu0 %v922
        %1006 = vmatpush.msra.mxu0 %v921
        %1007 = vmatpush.msra.mxu0 %v920
        %1008 = vmatpush.msra.mxu0 %v919
        %1009 = vmatpush.msra.mxu0 %v918
        %1010 = vmatpush.msra.mxu0 %v917
        %1011 = vmatpush.msra.mxu0 %v916
        %1012 = vmatpush.msra.mxu0 %v915
        %1013 = vmatmul.f32.gmra.mxu0 %v877
        %v1014 = vpop.f32.mrf.mxu0
        %v1015 = vadd.f32 %v992, %v1014
        %1016 = vmatmul.f32.gmra.mxu0 %v881
        %v1017 = vpop.f32.mrf.mxu0
        %v1018 = vadd.f32 %v995, %v1017
        %1019 = vdwg.mxu0
        %1020 = vmatpush.msra.mxu0 %v946
        %1021 = vmatpush.msra.mxu0 %v945
        %1022 = vmatpush.msra.mxu0 %v944
        %1023 = vmatpush.msra.mxu0 %v943
        %1024 = vmatpush.msra.mxu0 %v942
        %1025 = vmatpush.msra.mxu0 %v941
        %1026 = vmatpush.msra.mxu0 %v940
        %1027 = vmatpush.msra.mxu0 %v939
        %1028 = vmatpush.msra.mxu0 %v938
        %1029 = vmatpush.msra.mxu0 %v937
        %1030 = vmatpush.msra.mxu0 %v936
        %1031 = vmatpush.msra.mxu0 %v935
        %1032 = vmatpush.msra.mxu0 %v934
        %1033 = vmatpush.msra.mxu0 %v933
        %1034 = vmatpush.msra.mxu0 %v932
        %1035 = vmatpush.msra.mxu0 %v931
        %1036 = vmatmul.f32.gmra.mxu0 %v878
        %v1037 = vpop.f32.mrf.mxu0
        %v1038 = vadd.f32 %v1015, %v1037
        %1039 = vmatmul.f32.gmra.mxu0 %v882
        %v1040 = vpop.f32.mrf.mxu0
        %v1041 = vadd.f32 %v1018, %v1040
        %1042 = vdwg.mxu0
        %vm1043 = vcmp.ge.f32.partialorder %v1038, 0.0
        %vm1044 = vcmp.ge.f32.partialorder %v1041, 0.0
        %v1045 = vmul.f32 %v1038, 0.2
        %v1046 = vmul.f32 %v1041, 0.2
        %v1047 = vsel %vm1043, %v1038, %v1045
        %v1048 = vsel %vm1044, %v1041, %v1046
        %1049 = vst.msk [vmem:[#allocation2] sm:$0xff] %vm850, 0.0
        %1050 = vst.msk [vmem:[#allocation2 + $0x8] sm:$0xff] %vm850, 0.0
        %1051 = vst.msk [vmem:[#allocation2 + $0x10] sm:$0x7] %vm853, 0.0
        %vm1052 = vcmask 130048
        %1053 = vst.msk [vmem:[#allocation2] sm:$0xff] %vm1052, %v1047
        %1054 = vst.msk [vmem:[#allocation2 + $0x8] sm:$0xff] %vm1052, %v1048
        %v1055 = vld [vmem:[#allocation2] sm:$0xff]
        %v1056 = vld [vmem:[#allocation2 + $0x8] sm:$0xff]
        %1057 = vst.msk [vmem:[#allocation3] sm:$0xff] %vm1052, %v1055
        %1058 = vst.msk [vmem:[#allocation3 + $0x40] sm:$0xff] %vm1052, %v1056
        %v1059 = vld [vmem:[#allocation2 + $0x1] sm:$0xff]
        %v1060 = vld [vmem:[#allocation2 + $0x9] sm:$0xff]
        %1061 = vst.msk [vmem:[#allocation3 + $0x8] sm:$0xff] %vm1052, %v1059
        %1062 = vst.msk [vmem:[#allocation3 + $0x48] sm:$0xff] %vm1052, %v1060
        %v1063 = vld [vmem:[#allocation2 + $0x2] sm:$0xff]
        %v1064 = vld [vmem:[#allocation2 + $0xa] sm:$0xff]
        %1065 = vst.msk [vmem:[#allocation3 + $0x10] sm:$0xff] %vm1052, %v1063
        %1066 = vst.msk [vmem:[#allocation3 + $0x50] sm:$0xff] %vm1052, %v1064
        %v1067 = vld [vmem:[#allocation2 + $0x3] sm:$0xff]
        %v1068 = vld [vmem:[#allocation2 + $0xb] sm:$0xff]
        %1069 = vst.msk [vmem:[#allocation3 + $0x18] sm:$0xff] %vm1052, %v1067
        %1070 = vst.msk [vmem:[#allocation3 + $0x58] sm:$0xff] %vm1052, %v1068
        %v1071 = vld [vmem:[#allocation3] sm:$0xff]
        %v1072 = vld [vmem:[#allocation3 + $0x8] sm:$0xff]
        %v1073 = vld [vmem:[#allocation3 + $0x10] sm:$0xff]
        %v1074 = vld [vmem:[#allocation3 + $0x18] sm:$0xff]
        %v1075 = vld [vmem:[#allocation3 + $0x40] sm:$0xff]
        %v1076 = vld [vmem:[#allocation3 + $0x48] sm:$0xff]
        %v1077 = vld [vmem:[#allocation3 + $0x50] sm:$0xff]
        %v1078 = vld [vmem:[#allocation3 + $0x58] sm:$0xff]
        %v1079 = vld [vmem:[%s5] sm:$0xff]
        %v1080 = vld [vmem:[%s5 + $0x8] sm:$0xff]
        %v1081 = vld [vmem:[%s5 + $0x10] sm:$0xff]
        %v1082 = vld [vmem:[%s5 + $0x18] sm:$0xff]
        %v1083 = vld [vmem:[%s5 + $0x20] sm:$0xff]
        %v1084 = vld [vmem:[%s5 + $0x28] sm:$0xff]
        %v1085 = vld [vmem:[%s5 + $0x30] sm:$0xff]
        %v1086 = vld [vmem:[%s5 + $0x38] sm:$0xff]
        %v1087 = vld [vmem:[%s5 + $0x40] sm:$0xff]
        %v1088 = vld [vmem:[%s5 + $0x48] sm:$0xff]
        %v1089 = vld [vmem:[%s5 + $0x50] sm:$0xff]
        %v1090 = vld [vmem:[%s5 + $0x58] sm:$0xff]
        %v1091 = vld [vmem:[%s5 + $0x60] sm:$0xff]
        %v1092 = vld [vmem:[%s5 + $0x68] sm:$0xff]
        %v1093 = vld [vmem:[%s5 + $0x70] sm:$0xff]
        %v1094 = vld [vmem:[%s5 + $0x78] sm:$0xff]
        %v1095 = vld [vmem:[%s5 + $0x80] sm:$0xff]
        %v1096 = vld [vmem:[%s5 + $0x88] sm:$0xff]
        %v1097 = vld [vmem:[%s5 + $0x90] sm:$0xff]
        %v1098 = vld [vmem:[%s5 + $0x98] sm:$0xff]
        %v1099 = vld [vmem:[%s5 + $0xa0] sm:$0xff]
        %v1100 = vld [vmem:[%s5 + $0xa8] sm:$0xff]
        %v1101 = vld [vmem:[%s5 + $0xb0] sm:$0xff]
        %v1102 = vld [vmem:[%s5 + $0xb8] sm:$0xff]
        %v1103 = vld [vmem:[%s5 + $0xc0] sm:$0xff]
        %v1104 = vld [vmem:[%s5 + $0xc8] sm:$0xff]
        %v1105 = vld [vmem:[%s5 + $0xd0] sm:$0xff]
        %v1106 = vld [vmem:[%s5 + $0xd8] sm:$0xff]
        %v1107 = vld [vmem:[%s5 + $0xe0] sm:$0xff]
        %v1108 = vld [vmem:[%s5 + $0xe8] sm:$0xff]
        %v1109 = vld [vmem:[%s5 + $0xf0] sm:$0xff]
        %v1110 = vld [vmem:[%s5 + $0xf8] sm:$0xff]
        %v1111 = vld [vmem:[%s5 + $0x100] sm:$0xff]
        %v1112 = vld [vmem:[%s5 + $0x108] sm:$0xff]
        %v1113 = vld [vmem:[%s5 + $0x110] sm:$0xff]
        %v1114 = vld [vmem:[%s5 + $0x118] sm:$0xff]
        %v1115 = vld [vmem:[%s5 + $0x120] sm:$0xff]
        %v1116 = vld [vmem:[%s5 + $0x128] sm:$0xff]
        %v1117 = vld [vmem:[%s5 + $0x130] sm:$0xff]
        %v1118 = vld [vmem:[%s5 + $0x138] sm:$0xff]
        %v1119 = vld [vmem:[%s5 + $0x140] sm:$0xff]
        %v1120 = vld [vmem:[%s5 + $0x148] sm:$0xff]
        %v1121 = vld [vmem:[%s5 + $0x150] sm:$0xff]
        %v1122 = vld [vmem:[%s5 + $0x158] sm:$0xff]
        %v1123 = vld [vmem:[%s5 + $0x160] sm:$0xff]
        %v1124 = vld [vmem:[%s5 + $0x168] sm:$0xff]
        %v1125 = vld [vmem:[%s5 + $0x170] sm:$0xff]
        %v1126 = vld [vmem:[%s5 + $0x178] sm:$0xff]
        %v1127 = vld [vmem:[%s5 + $0x180] sm:$0xff]
        %v1128 = vld [vmem:[%s5 + $0x188] sm:$0xff]
        %v1129 = vld [vmem:[%s5 + $0x190] sm:$0xff]
        %v1130 = vld [vmem:[%s5 + $0x198] sm:$0xff]
        %v1131 = vld [vmem:[%s5 + $0x1a0] sm:$0xff]
        %v1132 = vld [vmem:[%s5 + $0x1a8] sm:$0xff]
        %v1133 = vld [vmem:[%s5 + $0x1b0] sm:$0xff]
        %v1134 = vld [vmem:[%s5 + $0x1b8] sm:$0xff]
        %v1135 = vld [vmem:[%s5 + $0x1c0] sm:$0xff]
        %v1136 = vld [vmem:[%s5 + $0x1c8] sm:$0xff]
        %v1137 = vld [vmem:[%s5 + $0x1d0] sm:$0xff]
        %v1138 = vld [vmem:[%s5 + $0x1d8] sm:$0xff]
        %v1139 = vld [vmem:[%s5 + $0x1e0] sm:$0xff]
        %v1140 = vld [vmem:[%s5 + $0x1e8] sm:$0xff]
        %v1141 = vld [vmem:[%s5 + $0x1f0] sm:$0xff]
        %v1142 = vld [vmem:[%s5 + $0x1f8] sm:$0xff]
        %v1143 = vld [vmem:[%s6] sm:$0x1]
        %v1145 = vperm.slane %v1143, 0
        %1147 = vmatpush.msra.mxu0 %v1094
        %1148 = vmatpush.msra.mxu0 %v1093
        %1149 = vmatpush.msra.mxu0 %v1092
        %1150 = vmatpush.msra.mxu0 %v1091
        %1151 = vmatpush.msra.mxu0 %v1090
        %1152 = vmatpush.msra.mxu0 %v1089
        %1153 = vmatpush.msra.mxu0 %v1088
        %1154 = vmatpush.msra.mxu0 %v1087
        %1155 = vmatpush.msra.mxu0 %v1086
        %1156 = vmatpush.msra.mxu0 %v1085
        %1157 = vmatpush.msra.mxu0 %v1084
        %1158 = vmatpush.msra.mxu0 %v1083
        %1159 = vmatpush.msra.mxu0 %v1082
        %1160 = vmatpush.msra.mxu0 %v1081
        %1161 = vmatpush.msra.mxu0 %v1080
        %1162 = vmatpush.msra.mxu0 %v1079
        %1163 = vmatmul.f32.gmra.mxu0 %v1071
        %v1164 = vpop.f32.mrf.mxu0
        %v1165 = vadd.f32 %v1145, %v1164
        %1166 = vmatmul.f32.gmra.mxu0 %v1075
        %v1167 = vpop.f32.mrf.mxu0
        %v1168 = vadd.f32 %v1145, %v1167
        %1169 = vdwg.mxu0
        %1170 = vmatpush.msra.mxu0 %v1110
        %1171 = vmatpush.msra.mxu0 %v1109
        %1172 = vmatpush.msra.mxu0 %v1108
        %1173 = vmatpush.msra.mxu0 %v1107
        %1174 = vmatpush.msra.mxu0 %v1106
        %1175 = vmatpush.msra.mxu0 %v1105
        %1176 = vmatpush.msra.mxu0 %v1104
        %1177 = vmatpush.msra.mxu0 %v1103
        %1178 = vmatpush.msra.mxu0 %v1102
        %1179 = vmatpush.msra.mxu0 %v1101
        %1180 = vmatpush.msra.mxu0 %v1100
        %1181 = vmatpush.msra.mxu0 %v1099
        %1182 = vmatpush.msra.mxu0 %v1098
        %1183 = vmatpush.msra.mxu0 %v1097
        %1184 = vmatpush.msra.mxu0 %v1096
        %1185 = vmatpush.msra.mxu0 %v1095
        %1186 = vmatmul.f32.gmra.mxu0 %v1072
        %v1187 = vpop.f32.mrf.mxu0
        %v1188 = vadd.f32 %v1165, %v1187
        %1189 = vmatmul.f32.gmra.mxu0 %v1076
        %v1190 = vpop.f32.mrf.mxu0
        %v1191 = vadd.f32 %v1168, %v1190
        %1192 = vdwg.mxu0
        %1193 = vmatpush.msra.mxu0 %v1126
        %1194 = vmatpush.msra.mxu0 %v1125
        %1195 = vmatpush.msra.mxu0 %v1124
        %1196 = vmatpush.msra.mxu0 %v1123
        %1197 = vmatpush.msra.mxu0 %v1122
        %1198 = vmatpush.msra.mxu0 %v1121
        %1199 = vmatpush.msra.mxu0 %v1120
        %1200 = vmatpush.msra.mxu0 %v1119
        %1201 = vmatpush.msra.mxu0 %v1118
        %1202 = vmatpush.msra.mxu0 %v1117
        %1203 = vmatpush.msra.mxu0 %v1116
        %1204 = vmatpush.msra.mxu0 %v1115
        %1205 = vmatpush.msra.mxu0 %v1114
        %1206 = vmatpush.msra.mxu0 %v1113
        %1207 = vmatpush.msra.mxu0 %v1112
        %1208 = vmatpush.msra.mxu0 %v1111
        %1209 = vmatmul.f32.gmra.mxu0 %v1073
        %v1210 = vpop.f32.mrf.mxu0
        %v1211 = vadd.f32 %v1188, %v1210
        %1212 = vmatmul.f32.gmra.mxu0 %v1077
        %v1213 = vpop.f32.mrf.mxu0
        %v1214 = vadd.f32 %v1191, %v1213
        %1215 = vdwg.mxu0
        %1216 = vmatpush.msra.mxu0 %v1142
        %1217 = vmatpush.msra.mxu0 %v1141
        %1218 = vmatpush.msra.mxu0 %v1140
        %1219 = vmatpush.msra.mxu0 %v1139
        %1220 = vmatpush.msra.mxu0 %v1138
        %1221 = vmatpush.msra.mxu0 %v1137
        %1222 = vmatpush.msra.mxu0 %v1136
        %1223 = vmatpush.msra.mxu0 %v1135
        %1224 = vmatpush.msra.mxu0 %v1134
        %1225 = vmatpush.msra.mxu0 %v1133
        %1226 = vmatpush.msra.mxu0 %v1132
        %1227 = vmatpush.msra.mxu0 %v1131
        %1228 = vmatpush.msra.mxu0 %v1130
        %1229 = vmatpush.msra.mxu0 %v1129
        %1230 = vmatpush.msra.mxu0 %v1128
        %1231 = vmatpush.msra.mxu0 %v1127
        %1232 = vmatmul.f32.gmra.mxu0 %v1074
        %v1233 = vpop.f32.mrf.mxu0
        %v1234 = vadd.f32 %v1211, %v1233
        %1235 = vmatmul.f32.gmra.mxu0 %v1078
        %v1236 = vpop.f32.mrf.mxu0
        %v1237 = vadd.f32 %v1214, %v1236
        %1238 = vdwg.mxu0
        %vm1239 = vcmp.ge.f32.partialorder %v1234, 0.0
        %vm1240 = vcmp.ge.f32.partialorder %v1237, 0.0
        %v1241 = vmul.f32 %v1234, 0.2
        %v1242 = vmul.f32 %v1237, 0.2
        %v1243 = vsel %vm1239, %v1234, %v1241
        %v1244 = vsel %vm1240, %v1237, %v1242
        %1245 = vst.msk [vmem:[#allocation2] sm:$0xff] %vm1052, %v1243
        %1246 = vst.msk [vmem:[#allocation2 + $0x8] sm:$0xff] %vm1052, %v1244
        %v1247 = vld [vmem:[#allocation2] sm:$0x1]
        %v1248 = vld [vmem:[#allocation2 + $0x1] sm:$0x1]
        %v1249 = vmax.f32 %v1247, %v1248
        %vm1250 = vcmask 122880
        %1251 = vst.msk [vmem:[#allocation4] sm:$0x1] %vm1250, %v1249
        %v1252 = vld [vmem:[#allocation2 + $0x2] sm:$0x1]
        %v1253 = vld [vmem:[#allocation2 + $0x3] sm:$0x1]
        %v1254 = vmax.f32 %v1252, %v1253
        %1255 = vst.msk [vmem:[#allocation4 + $0x1] sm:$0x1] %vm1250, %v1254
        %v1256 = vld [vmem:[#allocation2 + $0x4] sm:$0x1]
        %v1257 = vld [vmem:[#allocation2 + $0x5] sm:$0x1]
        %v1258 = vmax.f32 %v1256, %v1257
        %1259 = vst.msk [vmem:[#allocation4 + $0x2] sm:$0x1] %vm1250, %v1258
        %v1260 = vld [vmem:[#allocation2 + $0x6] sm:$0x1]
        %v1261 = vld [vmem:[#allocation2 + $0x7] sm:$0x1]
        %v1262 = vmax.f32 %v1260, %v1261
        %1263 = vst.msk [vmem:[#allocation4 + $0x3] sm:$0x1] %vm1250, %v1262
        %v1264 = vld [vmem:[#allocation2 + $0x8] sm:$0x1]
        %v1265 = vld [vmem:[#allocation2 + $0x9] sm:$0x1]
        %v1266 = vmax.f32 %v1264, %v1265
        %1267 = vst.msk [vmem:[#allocation4 + $0x4] sm:$0x1] %vm1250, %v1266
        %v1268 = vld [vmem:[#allocation2 + $0xa] sm:$0x1]
        %v1269 = vld [vmem:[#allocation2 + $0xb] sm:$0x1]
        %v1270 = vmax.f32 %v1268, %v1269
        %1271 = vst.msk [vmem:[#allocation4 + $0x5] sm:$0x1] %vm1250, %v1270
        %v1272 = vld [vmem:[#allocation2 + $0xc] sm:$0x1]
        %v1273 = vld [vmem:[#allocation2 + $0xd] sm:$0x1]
        %v1274 = vmax.f32 %v1272, %v1273
        %1275 = vst.msk [vmem:[#allocation4 + $0x6] sm:$0x1] %vm1250, %v1274
        %v1276 = vld [vmem:[#allocation2 + $0xe] sm:$0x1]
        %v1277 = vld [vmem:[#allocation2 + $0xf] sm:$0x1]
        %v1278 = vmax.f32 %v1276, %v1277
        %1279 = vst.msk [vmem:[#allocation4 + $0x7] sm:$0x1] %vm1250, %v1278
        %v1280 = vld [vmem:[#allocation4] sm:$0xff]
        %1281 = vst.msk [vmem:[#allocation2] sm:$0xff] %vm850, 0.0
        %1282 = vst.msk [vmem:[#allocation2 + $0x8] sm:$0xff] %vm850, 0.0
        %1283 = vst.msk [vmem:[#allocation2 + $0x10] sm:$0x7] %vm853, 0.0
        %1284 = vst.msk [vmem:[#allocation2] sm:$0xff] %vm1052, %v1280
        %v1285 = vld [vmem:[#allocation2] sm:$0xff]
        %1286 = vst.msk [vmem:[#allocation3] sm:$0xff] %vm1052, %v1285
        %v1287 = vld [vmem:[#allocation2 + $0x1] sm:$0xff]
        %1288 = vst.msk [vmem:[#allocation3 + $0x8] sm:$0xff] %vm1052, %v1287
        %v1289 = vld [vmem:[#allocation2 + $0x2] sm:$0xff]
        %1290 = vst.msk [vmem:[#allocation3 + $0x10] sm:$0xff] %vm1052, %v1289
        %v1291 = vld [vmem:[#allocation2 + $0x3] sm:$0xff]
        %1292 = vst.msk [vmem:[#allocation3 + $0x18] sm:$0xff] %vm1052, %v1291
        %v1293 = vld [vmem:[#allocation3] sm:$0xff]
        %v1294 = vld [vmem:[#allocation3 + $0x8] sm:$0xff]
        %v1295 = vld [vmem:[#allocation3 + $0x10] sm:$0xff]
        %v1296 = vld [vmem:[#allocation3 + $0x18] sm:$0xff]
        %v1297 = vld [vmem:[%s7] sm:$0xff]
        %v1298 = vld [vmem:[%s7 + $0x8] sm:$0xff]
        %v1299 = vld [vmem:[%s7 + $0x10] sm:$0xff]
        %v1300 = vld [vmem:[%s7 + $0x18] sm:$0xff]
        %v1301 = vld [vmem:[%s7 + $0x20] sm:$0xff]
        %v1302 = vld [vmem:[%s7 + $0x28] sm:$0xff]
        %v1303 = vld [vmem:[%s7 + $0x30] sm:$0xff]
        %v1304 = vld [vmem:[%s7 + $0x38] sm:$0xff]
        %v1305 = vld [vmem:[%s7 + $0x40] sm:$0xff]
        %v1306 = vld [vmem:[%s7 + $0x48] sm:$0xff]
        %v1307 = vld [vmem:[%s7 + $0x50] sm:$0xff]
        %v1308 = vld [vmem:[%s7 + $0x58] sm:$0xff]
        %v1309 = vld [vmem:[%s7 + $0x60] sm:$0xff]
        %v1310 = vld [vmem:[%s7 + $0x68] sm:$0xff]
        %v1311 = vld [vmem:[%s7 + $0x70] sm:$0xff]
        %v1312 = vld [vmem:[%s7 + $0x78] sm:$0xff]
        %v1313 = vld [vmem:[%s7 + $0x80] sm:$0xff]
        %v1314 = vld [vmem:[%s7 + $0x88] sm:$0xff]
        %v1315 = vld [vmem:[%s7 + $0x90] sm:$0xff]
        %v1316 = vld [vmem:[%s7 + $0x98] sm:$0xff]
        %v1317 = vld [vmem:[%s7 + $0xa0] sm:$0xff]
        %v1318 = vld [vmem:[%s7 + $0xa8] sm:$0xff]
        %v1319 = vld [vmem:[%s7 + $0xb0] sm:$0xff]
        %v1320 = vld [vmem:[%s7 + $0xb8] sm:$0xff]
        %v1321 = vld [vmem:[%s7 + $0xc0] sm:$0xff]
        %v1322 = vld [vmem:[%s7 + $0xc8] sm:$0xff]
        %v1323 = vld [vmem:[%s7 + $0xd0] sm:$0xff]
        %v1324 = vld [vmem:[%s7 + $0xd8] sm:$0xff]
        %v1325 = vld [vmem:[%s7 + $0xe0] sm:$0xff]
        %v1326 = vld [vmem:[%s7 + $0xe8] sm:$0xff]
        %v1327 = vld [vmem:[%s7 + $0xf0] sm:$0xff]
        %v1328 = vld [vmem:[%s7 + $0xf8] sm:$0xff]
        %v1329 = vld [vmem:[%s7 + $0x100] sm:$0xff]
        %v1330 = vld [vmem:[%s7 + $0x108] sm:$0xff]
        %v1331 = vld [vmem:[%s7 + $0x110] sm:$0xff]
        %v1332 = vld [vmem:[%s7 + $0x118] sm:$0xff]
        %v1333 = vld [vmem:[%s7 + $0x120] sm:$0xff]
        %v1334 = vld [vmem:[%s7 + $0x128] sm:$0xff]
        %v1335 = vld [vmem:[%s7 + $0x130] sm:$0xff]
        %v1336 = vld [vmem:[%s7 + $0x138] sm:$0xff]
        %v1337 = vld [vmem:[%s7 + $0x140] sm:$0xff]
        %v1338 = vld [vmem:[%s7 + $0x148] sm:$0xff]
        %v1339 = vld [vmem:[%s7 + $0x150] sm:$0xff]
        %v1340 = vld [vmem:[%s7 + $0x158] sm:$0xff]
        %v1341 = vld [vmem:[%s7 + $0x160] sm:$0xff]
        %v1342 = vld [vmem:[%s7 + $0x168] sm:$0xff]
        %v1343 = vld [vmem:[%s7 + $0x170] sm:$0xff]
        %v1344 = vld [vmem:[%s7 + $0x178] sm:$0xff]
        %v1345 = vld [vmem:[%s7 + $0x180] sm:$0xff]
        %v1346 = vld [vmem:[%s7 + $0x188] sm:$0xff]
        %v1347 = vld [vmem:[%s7 + $0x190] sm:$0xff]
        %v1348 = vld [vmem:[%s7 + $0x198] sm:$0xff]
        %v1349 = vld [vmem:[%s7 + $0x1a0] sm:$0xff]
        %v1350 = vld [vmem:[%s7 + $0x1a8] sm:$0xff]
        %v1351 = vld [vmem:[%s7 + $0x1b0] sm:$0xff]
        %v1352 = vld [vmem:[%s7 + $0x1b8] sm:$0xff]
        %v1353 = vld [vmem:[%s7 + $0x1c0] sm:$0xff]
        %v1354 = vld [vmem:[%s7 + $0x1c8] sm:$0xff]
        %v1355 = vld [vmem:[%s7 + $0x1d0] sm:$0xff]
        %v1356 = vld [vmem:[%s7 + $0x1d8] sm:$0xff]
        %v1357 = vld [vmem:[%s7 + $0x1e0] sm:$0xff]
        %v1358 = vld [vmem:[%s7 + $0x1e8] sm:$0xff]
        %v1359 = vld [vmem:[%s7 + $0x1f0] sm:$0xff]
        %v1360 = vld [vmem:[%s7 + $0x1f8] sm:$0xff]
        %v1361 = vld [vmem:[%s8] sm:$0x1]
        %v1363 = vperm.slane %v1361, 0
        %1365 = vmatpush.msra.mxu0 %v1312
        %1366 = vmatpush.msra.mxu0 %v1311
        %1367 = vmatpush.msra.mxu0 %v1310
        %1368 = vmatpush.msra.mxu0 %v1309
        %1369 = vmatpush.msra.mxu0 %v1308
        %1370 = vmatpush.msra.mxu0 %v1307
        %1371 = vmatpush.msra.mxu0 %v1306
        %1372 = vmatpush.msra.mxu0 %v1305
        %1373 = vmatpush.msra.mxu0 %v1304
        %1374 = vmatpush.msra.mxu0 %v1303
        %1375 = vmatpush.msra.mxu0 %v1302
        %1376 = vmatpush.msra.mxu0 %v1301
        %1377 = vmatpush.msra.mxu0 %v1300
        %1378 = vmatpush.msra.mxu0 %v1299
        %1379 = vmatpush.msra.mxu0 %v1298
        %1380 = vmatpush.msra.mxu0 %v1297
        %1381 = vmatmul.f32.gmra.mxu0 %v1293
        %v1382 = vpop.f32.mrf.mxu0
        %v1383 = vadd.f32 %v1363, %v1382
        %1384 = vdwg.mxu0
        %1385 = vmatpush.msra.mxu0 %v1328
        %1386 = vmatpush.msra.mxu0 %v1327
        %1387 = vmatpush.msra.mxu0 %v1326
        %1388 = vmatpush.msra.mxu0 %v1325
        %1389 = vmatpush.msra.mxu0 %v1324
        %1390 = vmatpush.msra.mxu0 %v1323
        %1391 = vmatpush.msra.mxu0 %v1322
        %1392 = vmatpush.msra.mxu0 %v1321
        %1393 = vmatpush.msra.mxu0 %v1320
        %1394 = vmatpush.msra.mxu0 %v1319
        %1395 = vmatpush.msra.mxu0 %v1318
        %1396 = vmatpush.msra.mxu0 %v1317
        %1397 = vmatpush.msra.mxu0 %v1316
        %1398 = vmatpush.msra.mxu0 %v1315
        %1399 = vmatpush.msra.mxu0 %v1314
        %1400 = vmatpush.msra.mxu0 %v1313
        %1401 = vmatmul.f32.gmra.mxu0 %v1294
        %v1402 = vpop.f32.mrf.mxu0
        %v1403 = vadd.f32 %v1383, %v1402
        %1404 = vdwg.mxu0
        %1405 = vmatpush.msra.mxu0 %v1344
        %1406 = vmatpush.msra.mxu0 %v1343
        %1407 = vmatpush.msra.mxu0 %v1342
        %1408 = vmatpush.msra.mxu0 %v1341
        %1409 = vmatpush.msra.mxu0 %v1340
        %1410 = vmatpush.msra.mxu0 %v1339
        %1411 = vmatpush.msra.mxu0 %v1338
        %1412 = vmatpush.msra.mxu0 %v1337
        %1413 = vmatpush.msra.mxu0 %v1336
        %1414 = vmatpush.msra.mxu0 %v1335
        %1415 = vmatpush.msra.mxu0 %v1334
        %1416 = vmatpush.msra.mxu0 %v1333
        %1417 = vmatpush.msra.mxu0 %v1332
        %1418 = vmatpush.msra.mxu0 %v1331
        %1419 = vmatpush.msra.mxu0 %v1330
        %1420 = vmatpush.msra.mxu0 %v1329
        %1421 = vmatmul.f32.gmra.mxu0 %v1295
        %v1422 = vpop.f32.mrf.mxu0
        %v1423 = vadd.f32 %v1403, %v1422
        %1424 = vdwg.mxu0
        %1425 = vmatpush.msra.mxu0 %v1360
        %1426 = vmatpush.msra.mxu0 %v1359
        %1427 = vmatpush.msra.mxu0 %v1358
        %1428 = vmatpush.msra.mxu0 %v1357
        %1429 = vmatpush.msra.mxu0 %v1356
        %1430 = vmatpush.msra.mxu0 %v1355
        %1431 = vmatpush.msra.mxu0 %v1354
        %1432 = vmatpush.msra.mxu0 %v1353
        %1433 = vmatpush.msra.mxu0 %v1352
        %1434 = vmatpush.msra.mxu0 %v1351
        %1435 = vmatpush.msra.mxu0 %v1350
        %1436 = vmatpush.msra.mxu0 %v1349
        %1437 = vmatpush.msra.mxu0 %v1348
        %1438 = vmatpush.msra.mxu0 %v1347
        %1439 = vmatpush.msra.mxu0 %v1346
        %1440 = vmatpush.msra.mxu0 %v1345
        %1441 = vmatmul.f32.gmra.mxu0 %v1296
        %v1442 = vpop.f32.mrf.mxu0
        %v1443 = vadd.f32 %v1423, %v1442
        %1444 = vdwg.mxu0
        %vm1445 = vcmp.ge.f32.partialorder %v1443, 0.0
        %v1446 = vmul.f32 %v1443, 0.2
        %v1447 = vsel %vm1445, %v1443, %v1446
        %1448 = vst.msk [vmem:[#allocation2] sm:$0xff] %vm850, 0.0
        %1449 = vst.msk [vmem:[#allocation2 + $0x8] sm:$0xff] %vm850, 0.0
        %1450 = vst.msk [vmem:[#allocation2 + $0x10] sm:$0x7] %vm853, 0.0
        %1451 = vst.msk [vmem:[#allocation2] sm:$0xff] %vm850, %v1447
        %v1452 = vld [vmem:[#allocation2] sm:$0xff]
        %1453 = vst.msk [vmem:[#allocation3] sm:$0xff] %vm850, %v1452
        %v1454 = vld [vmem:[#allocation2 + $0x1] sm:$0xff]
        %1455 = vst.msk [vmem:[#allocation3 + $0x8] sm:$0xff] %vm850, %v1454
        %v1456 = vld [vmem:[#allocation2 + $0x2] sm:$0xff]
        %1457 = vst.msk [vmem:[#allocation3 + $0x10] sm:$0xff] %vm850, %v1456
        %v1458 = vld [vmem:[#allocation2 + $0x3] sm:$0xff]
        %1459 = vst.msk [vmem:[#allocation3 + $0x18] sm:$0xff] %vm850, %v1458
        %v1460 = vld [vmem:[#allocation3] sm:$0xff]
        %v1461 = vld [vmem:[#allocation3 + $0x8] sm:$0xff]
        %v1462 = vld [vmem:[#allocation3 + $0x10] sm:$0xff]
        %v1463 = vld [vmem:[#allocation3 + $0x18] sm:$0xff]
        %v1464 = vld [vmem:[%s9] sm:$0xff]
        %v1465 = vld [vmem:[%s9 + $0x8] sm:$0xff]
        %v1466 = vld [vmem:[%s9 + $0x10] sm:$0xff]
        %v1467 = vld [vmem:[%s9 + $0x18] sm:$0xff]
        %v1468 = vld [vmem:[%s9 + $0x20] sm:$0xff]
        %v1469 = vld [vmem:[%s9 + $0x28] sm:$0xff]
        %v1470 = vld [vmem:[%s9 + $0x30] sm:$0xff]
        %v1471 = vld [vmem:[%s9 + $0x38] sm:$0xff]
        %v1472 = vld [vmem:[%s9 + $0x40] sm:$0xff]
        %v1473 = vld [vmem:[%s9 + $0x48] sm:$0xff]
        %v1474 = vld [vmem:[%s9 + $0x50] sm:$0xff]
        %v1475 = vld [vmem:[%s9 + $0x58] sm:$0xff]
        %v1476 = vld [vmem:[%s9 + $0x60] sm:$0xff]
        %v1477 = vld [vmem:[%s9 + $0x68] sm:$0xff]
        %v1478 = vld [vmem:[%s9 + $0x70] sm:$0xff]
        %v1479 = vld [vmem:[%s9 + $0x78] sm:$0xff]
        %v1480 = vld [vmem:[%s9 + $0x80] sm:$0xff]
        %v1481 = vld [vmem:[%s9 + $0x88] sm:$0xff]
        %v1482 = vld [vmem:[%s9 + $0x90] sm:$0xff]
        %v1483 = vld [vmem:[%s9 + $0x98] sm:$0xff]
        %v1484 = vld [vmem:[%s9 + $0xa0] sm:$0xff]
        %v1485 = vld [vmem:[%s9 + $0xa8] sm:$0xff]
        %v1486 = vld [vmem:[%s9 + $0xb0] sm:$0xff]
        %v1487 = vld [vmem:[%s9 + $0xb8] sm:$0xff]
        %v1488 = vld [vmem:[%s9 + $0xc0] sm:$0xff]
        %v1489 = vld [vmem:[%s9 + $0xc8] sm:$0xff]
        %v1490 = vld [vmem:[%s9 + $0xd0] sm:$0xff]
        %v1491 = vld [vmem:[%s9 + $0xd8] sm:$0xff]
        %v1492 = vld [vmem:[%s9 + $0xe0] sm:$0xff]
        %v1493 = vld [vmem:[%s9 + $0xe8] sm:$0xff]
        %v1494 = vld [vmem:[%s9 + $0xf0] sm:$0xff]
        %v1495 = vld [vmem:[%s9 + $0xf8] sm:$0xff]
        %v1496 = vld [vmem:[%s9 + $0x100] sm:$0xff]
        %v1497 = vld [vmem:[%s9 + $0x108] sm:$0xff]
        %v1498 = vld [vmem:[%s9 + $0x110] sm:$0xff]
        %v1499 = vld [vmem:[%s9 + $0x118] sm:$0xff]
        %v1500 = vld [vmem:[%s9 + $0x120] sm:$0xff]
        %v1501 = vld [vmem:[%s9 + $0x128] sm:$0xff]
        %v1502 = vld [vmem:[%s9 + $0x130] sm:$0xff]
        %v1503 = vld [vmem:[%s9 + $0x138] sm:$0xff]
        %v1504 = vld [vmem:[%s9 + $0x140] sm:$0xff]
        %v1505 = vld [vmem:[%s9 + $0x148] sm:$0xff]
        %v1506 = vld [vmem:[%s9 + $0x150] sm:$0xff]
        %v1507 = vld [vmem:[%s9 + $0x158] sm:$0xff]
        %v1508 = vld [vmem:[%s9 + $0x160] sm:$0xff]
        %v1509 = vld [vmem:[%s9 + $0x168] sm:$0xff]
        %v1510 = vld [vmem:[%s9 + $0x170] sm:$0xff]
        %v1511 = vld [vmem:[%s9 + $0x178] sm:$0xff]
        %v1512 = vld [vmem:[%s9 + $0x180] sm:$0xff]
        %v1513 = vld [vmem:[%s9 + $0x188] sm:$0xff]
        %v1514 = vld [vmem:[%s9 + $0x190] sm:$0xff]
        %v1515 = vld [vmem:[%s9 + $0x198] sm:$0xff]
        %v1516 = vld [vmem:[%s9 + $0x1a0] sm:$0xff]
        %v1517 = vld [vmem:[%s9 + $0x1a8] sm:$0xff]
        %v1518 = vld [vmem:[%s9 + $0x1b0] sm:$0xff]
        %v1519 = vld [vmem:[%s9 + $0x1b8] sm:$0xff]
        %v1520 = vld [vmem:[%s9 + $0x1c0] sm:$0xff]
        %v1521 = vld [vmem:[%s9 + $0x1c8] sm:$0xff]
        %v1522 = vld [vmem:[%s9 + $0x1d0] sm:$0xff]
        %v1523 = vld [vmem:[%s9 + $0x1d8] sm:$0xff]
        %v1524 = vld [vmem:[%s9 + $0x1e0] sm:$0xff]
        %v1525 = vld [vmem:[%s9 + $0x1e8] sm:$0xff]
        %v1526 = vld [vmem:[%s9 + $0x1f0] sm:$0xff]
        %v1527 = vld [vmem:[%s9 + $0x1f8] sm:$0xff]
        %v1528 = vld [vmem:[%s10] sm:$0x1]
        %v1530 = vperm.slane %v1528, 0
        %1532 = vmatpush.msra.mxu0 %v1479
        %1533 = vmatpush.msra.mxu0 %v1478
        %1534 = vmatpush.msra.mxu0 %v1477
        %1535 = vmatpush.msra.mxu0 %v1476
        %1536 = vmatpush.msra.mxu0 %v1475
        %1537 = vmatpush.msra.mxu0 %v1474
        %1538 = vmatpush.msra.mxu0 %v1473
        %1539 = vmatpush.msra.mxu0 %v1472
        %1540 = vmatpush.msra.mxu0 %v1471
        %1541 = vmatpush.msra.mxu0 %v1470
        %1542 = vmatpush.msra.mxu0 %v1469
        %1543 = vmatpush.msra.mxu0 %v1468
        %1544 = vmatpush.msra.mxu0 %v1467
        %1545 = vmatpush.msra.mxu0 %v1466
        %1546 = vmatpush.msra.mxu0 %v1465
        %1547 = vmatpush.msra.mxu0 %v1464
        %1548 = vmatmul.f32.gmra.mxu0 %v1460
        %v1549 = vpop.f32.mrf.mxu0
        %v1550 = vadd.f32 %v1530, %v1549
        %1551 = vdwg.mxu0
        %1552 = vmatpush.msra.mxu0 %v1495
        %1553 = vmatpush.msra.mxu0 %v1494
        %1554 = vmatpush.msra.mxu0 %v1493
        %1555 = vmatpush.msra.mxu0 %v1492
        %1556 = vmatpush.msra.mxu0 %v1491
        %1557 = vmatpush.msra.mxu0 %v1490
        %1558 = vmatpush.msra.mxu0 %v1489
        %1559 = vmatpush.msra.mxu0 %v1488
        %1560 = vmatpush.msra.mxu0 %v1487
        %1561 = vmatpush.msra.mxu0 %v1486
        %1562 = vmatpush.msra.mxu0 %v1485
        %1563 = vmatpush.msra.mxu0 %v1484
        %1564 = vmatpush.msra.mxu0 %v1483
        %1565 = vmatpush.msra.mxu0 %v1482
        %1566 = vmatpush.msra.mxu0 %v1481
        %1567 = vmatpush.msra.mxu0 %v1480
        %1568 = vmatmul.f32.gmra.mxu0 %v1461
        %v1569 = vpop.f32.mrf.mxu0
        %v1570 = vadd.f32 %v1550, %v1569
        %1571 = vdwg.mxu0
        %1572 = vmatpush.msra.mxu0 %v1511
        %1573 = vmatpush.msra.mxu0 %v1510
        %1574 = vmatpush.msra.mxu0 %v1509
        %1575 = vmatpush.msra.mxu0 %v1508
        %1576 = vmatpush.msra.mxu0 %v1507
        %1577 = vmatpush.msra.mxu0 %v1506
        %1578 = vmatpush.msra.mxu0 %v1505
        %1579 = vmatpush.msra.mxu0 %v1504
        %1580 = vmatpush.msra.mxu0 %v1503
        %1581 = vmatpush.msra.mxu0 %v1502
        %1582 = vmatpush.msra.mxu0 %v1501
        %1583 = vmatpush.msra.mxu0 %v1500
        %1584 = vmatpush.msra.mxu0 %v1499
        %1585 = vmatpush.msra.mxu0 %v1498
        %1586 = vmatpush.msra.mxu0 %v1497
        %1587 = vmatpush.msra.mxu0 %v1496
        %1588 = vmatmul.f32.gmra.mxu0 %v1462
        %v1589 = vpop.f32.mrf.mxu0
        %v1590 = vadd.f32 %v1570, %v1589
        %1591 = vdwg.mxu0
        %1592 = vmatpush.msra.mxu0 %v1527
        %1593 = vmatpush.msra.mxu0 %v1526
        %1594 = vmatpush.msra.mxu0 %v1525
        %1595 = vmatpush.msra.mxu0 %v1524
        %1596 = vmatpush.msra.mxu0 %v1523
        %1597 = vmatpush.msra.mxu0 %v1522
        %1598 = vmatpush.msra.mxu0 %v1521
        %1599 = vmatpush.msra.mxu0 %v1520
        %1600 = vmatpush.msra.mxu0 %v1519
        %1601 = vmatpush.msra.mxu0 %v1518
        %1602 = vmatpush.msra.mxu0 %v1517
        %1603 = vmatpush.msra.mxu0 %v1516
        %1604 = vmatpush.msra.mxu0 %v1515
        %1605 = vmatpush.msra.mxu0 %v1514
        %1606 = vmatpush.msra.mxu0 %v1513
        %1607 = vmatpush.msra.mxu0 %v1512
        %1608 = vmatmul.f32.gmra.mxu0 %v1463
        %v1609 = vpop.f32.mrf.mxu0
        %v1610 = vadd.f32 %v1590, %v1609
        %1611 = vdwg.mxu0
        %vm1612 = vcmp.ge.f32.partialorder %v1610, 0.0
        %v1613 = vmul.f32 %v1610, 0.2
        %v1614 = vsel %vm1612, %v1610, %v1613
        %1615 = vst.msk [vmem:[#allocation2] sm:$0xff] %vm850, %v1614
        %v1616 = vld [vmem:[#allocation2] sm:$0x1]
        %v1617 = vld [vmem:[#allocation2 + $0x1] sm:$0x1]
        %v1618 = vmax.f32 %v1616, %v1617
        %vm1619 = vcmask 253952
        %1620 = vst.msk [vmem:[#allocation4] sm:$0x1] %vm1619, %v1618
        %v1621 = vld [vmem:[#allocation2 + $0x2] sm:$0x1]
        %v1622 = vld [vmem:[#allocation2 + $0x3] sm:$0x1]
        %v1623 = vmax.f32 %v1621, %v1622
        %1624 = vst.msk [vmem:[#allocation4 + $0x1] sm:$0x1] %vm1619, %v1623
        %v1625 = vld [vmem:[#allocation2 + $0x4] sm:$0x1]
        %v1626 = vld [vmem:[#allocation2 + $0x5] sm:$0x1]
        %v1627 = vmax.f32 %v1625, %v1626
        %1628 = vst.msk [vmem:[#allocation4 + $0x2] sm:$0x1] %vm1619, %v1627
        %v1629 = vld [vmem:[#allocation2 + $0x6] sm:$0x1]
        %v1630 = vld [vmem:[#allocation2 + $0x7] sm:$0x1]
        %v1631 = vmax.f32 %v1629, %v1630
        %1632 = vst.msk [vmem:[#allocation4 + $0x3] sm:$0x1] %vm1619, %v1631
        %v1633 = vld [vmem:[#allocation4] sm:$0xf]
        %v1634 = vld [vmem:[%s817] sm:$0xf]
        %v1635 = vld [vmem:[%s821] sm:$0xf]
        %1636 = vst.msk [vmem:[#allocation2] sm:$0xff] %vm850, 0.0
        %1637 = vst.msk [vmem:[#allocation2 + $0x8] sm:$0xff] %vm850, 0.0
        %1638 = vst.msk [vmem:[#allocation2 + $0x10] sm:$0x7] %vm853, 0.0
        %vm1639 = vcmask 257024
        %1640 = vst.msk [vmem:[#allocation2] sm:$0xf] %vm1639, %v1633
        %v1641 = vld [vmem:[#allocation2] sm:$0xf]
        %1642 = vst.msk [vmem:[#allocation3] sm:$0xf] %vm1639, %v1641
        %v1643 = vld [vmem:[#allocation2 + $0x1] sm:$0xf]
        %1644 = vst.msk [vmem:[#allocation3 + $0x8] sm:$0xf] %vm1639, %v1643
        %v1645 = vld [vmem:[#allocation2 + $0x2] sm:$0xf]
        %1646 = vst.msk [vmem:[#allocation3 + $0x10] sm:$0xf] %vm1639, %v1645
        %v1647 = vld [vmem:[#allocation2 + $0x3] sm:$0xf]
        %1648 = vst.msk [vmem:[#allocation3 + $0x18] sm:$0xf] %vm1639, %v1647
        %1649 = vst.msk [vmem:[#allocation2] sm:$0xff] %vm850, 0.0
        %1650 = vst.msk [vmem:[#allocation2 + $0x8] sm:$0xff] %vm850, 0.0
        %1651 = vst.msk [vmem:[#allocation2 + $0x10] sm:$0x7] %vm853, 0.0
        %vm1652 = vcmask 125952
        %1653 = vst.msk [vmem:[#allocation2] sm:$0xf] %vm1652, %v1634
        %v1654 = vld [vmem:[#allocation2] sm:$0xf]
        %1655 = vst.msk [vmem:[#allocation3 + $0x20] sm:$0xf] %vm1652, %v1654
        %v1656 = vld [vmem:[#allocation2 + $0x1] sm:$0xf]
        %1657 = vst.msk [vmem:[#allocation3 + $0x28] sm:$0xf] %vm1652, %v1656
        %v1658 = vld [vmem:[#allocation2 + $0x2] sm:$0xf]
        %1659 = vst.msk [vmem:[#allocation3 + $0x30] sm:$0xf] %vm1652, %v1658
        %v1660 = vld [vmem:[#allocation2 + $0x3] sm:$0xf]
        %1661 = vst.msk [vmem:[#allocation3 + $0x38] sm:$0xf] %vm1652, %v1660
        %v1662 = vld [vmem:[#allocation3] sm:$0xf]
        %v1663 = vld [vmem:[#allocation3 + $0x8] sm:$0xf]
        %v1664 = vld [vmem:[#allocation3 + $0x10] sm:$0xf]
        %v1665 = vld [vmem:[#allocation3 + $0x18] sm:$0xf]
        %v1666 = vld [vmem:[#allocation3 + $0x20] sm:$0xf]
        %v1667 = vld [vmem:[#allocation3 + $0x28] sm:$0xf]
        %v1668 = vld [vmem:[#allocation3 + $0x30] sm:$0xf]
        %v1669 = vld [vmem:[#allocation3 + $0x38] sm:$0xf]
        %v1670 = vld [vmem:[%s11] sm:$0xff]
        %v1671 = vld [vmem:[%s11 + $0x8] sm:$0xff]
        %v1672 = vld [vmem:[%s11 + $0x10] sm:$0xff]
        %v1673 = vld [vmem:[%s11 + $0x18] sm:$0xff]
        %v1674 = vld [vmem:[%s11 + $0x20] sm:$0xff]
        %v1675 = vld [vmem:[%s11 + $0x28] sm:$0xff]
        %v1676 = vld [vmem:[%s11 + $0x30] sm:$0xff]
        %v1677 = vld [vmem:[%s11 + $0x38] sm:$0xff]
        %v1678 = vld [vmem:[%s11 + $0x40] sm:$0xff]
        %v1679 = vld [vmem:[%s11 + $0x48] sm:$0xff]
        %v1680 = vld [vmem:[%s11 + $0x50] sm:$0xff]
        %v1681 = vld [vmem:[%s11 + $0x58] sm:$0xff]
        %v1682 = vld [vmem:[%s11 + $0x60] sm:$0xff]
        %v1683 = vld [vmem:[%s11 + $0x68] sm:$0xff]
        %v1684 = vld [vmem:[%s11 + $0x70] sm:$0xff]
        %v1685 = vld [vmem:[%s11 + $0x78] sm:$0xff]
        %v1686 = vld [vmem:[%s11 + $0x80] sm:$0xff]
        %v1687 = vld [vmem:[%s11 + $0x88] sm:$0xff]
        %v1688 = vld [vmem:[%s11 + $0x90] sm:$0xff]
        %v1689 = vld [vmem:[%s11 + $0x98] sm:$0xff]
        %v1690 = vld [vmem:[%s11 + $0xa0] sm:$0xff]
        %v1691 = vld [vmem:[%s11 + $0xa8] sm:$0xff]
        %v1692 = vld [vmem:[%s11 + $0xb0] sm:$0xff]
        %v1693 = vld [vmem:[%s11 + $0xb8] sm:$0xff]
        %v1694 = vld [vmem:[%s11 + $0xc0] sm:$0xff]
        %v1695 = vld [vmem:[%s11 + $0xc8] sm:$0xff]
        %v1696 = vld [vmem:[%s11 + $0xd0] sm:$0xff]
        %v1697 = vld [vmem:[%s11 + $0xd8] sm:$0xff]
        %v1698 = vld [vmem:[%s11 + $0xe0] sm:$0xff]
        %v1699 = vld [vmem:[%s11 + $0xe8] sm:$0xff]
        %v1700 = vld [vmem:[%s11 + $0xf0] sm:$0xff]
        %v1701 = vld [vmem:[%s11 + $0xf8] sm:$0xff]
        %v1702 = vld [vmem:[%s11 + $0x100] sm:$0xff]
        %v1703 = vld [vmem:[%s11 + $0x108] sm:$0xff]
        %v1704 = vld [vmem:[%s11 + $0x110] sm:$0xff]
        %v1705 = vld [vmem:[%s11 + $0x118] sm:$0xff]
        %v1706 = vld [vmem:[%s11 + $0x120] sm:$0xff]
        %v1707 = vld [vmem:[%s11 + $0x128] sm:$0xff]
        %v1708 = vld [vmem:[%s11 + $0x130] sm:$0xff]
        %v1709 = vld [vmem:[%s11 + $0x138] sm:$0xff]
        %v1710 = vld [vmem:[%s11 + $0x140] sm:$0xff]
        %v1711 = vld [vmem:[%s11 + $0x148] sm:$0xff]
        %v1712 = vld [vmem:[%s11 + $0x150] sm:$0xff]
        %v1713 = vld [vmem:[%s11 + $0x158] sm:$0xff]
        %v1714 = vld [vmem:[%s11 + $0x160] sm:$0xff]
        %v1715 = vld [vmem:[%s11 + $0x168] sm:$0xff]
        %v1716 = vld [vmem:[%s11 + $0x170] sm:$0xff]
        %v1717 = vld [vmem:[%s11 + $0x178] sm:$0xff]
        %v1718 = vld [vmem:[%s11 + $0x180] sm:$0xff]
        %v1719 = vld [vmem:[%s11 + $0x188] sm:$0xff]
        %v1720 = vld [vmem:[%s11 + $0x190] sm:$0xff]
        %v1721 = vld [vmem:[%s11 + $0x198] sm:$0xff]
        %v1722 = vld [vmem:[%s11 + $0x1a0] sm:$0xff]
        %v1723 = vld [vmem:[%s11 + $0x1a8] sm:$0xff]
        %v1724 = vld [vmem:[%s11 + $0x1b0] sm:$0xff]
        %v1725 = vld [vmem:[%s11 + $0x1b8] sm:$0xff]
        %v1726 = vld [vmem:[%s11 + $0x1c0] sm:$0xff]
        %v1727 = vld [vmem:[%s11 + $0x1c8] sm:$0xff]
        %v1728 = vld [vmem:[%s11 + $0x1d0] sm:$0xff]
        %v1729 = vld [vmem:[%s11 + $0x1d8] sm:$0xff]
        %v1730 = vld [vmem:[%s11 + $0x1e0] sm:$0xff]
        %v1731 = vld [vmem:[%s11 + $0x1e8] sm:$0xff]
        %v1732 = vld [vmem:[%s11 + $0x1f0] sm:$0xff]
        %v1733 = vld [vmem:[%s11 + $0x1f8] sm:$0xff]
        %v1734 = vld [vmem:[%s11 + $0x200] sm:$0xff]
        %v1735 = vld [vmem:[%s11 + $0x208] sm:$0xff]
        %v1736 = vld [vmem:[%s11 + $0x210] sm:$0xff]
        %v1737 = vld [vmem:[%s11 + $0x218] sm:$0xff]
        %v1738 = vld [vmem:[%s11 + $0x220] sm:$0xff]
        %v1739 = vld [vmem:[%s11 + $0x228] sm:$0xff]
        %v1740 = vld [vmem:[%s11 + $0x230] sm:$0xff]
        %v1741 = vld [vmem:[%s11 + $0x238] sm:$0xff]
        %v1742 = vld [vmem:[%s11 + $0x240] sm:$0xff]
        %v1743 = vld [vmem:[%s11 + $0x248] sm:$0xff]
        %v1744 = vld [vmem:[%s11 + $0x250] sm:$0xff]
        %v1745 = vld [vmem:[%s11 + $0x258] sm:$0xff]
        %v1746 = vld [vmem:[%s11 + $0x260] sm:$0xff]
        %v1747 = vld [vmem:[%s11 + $0x268] sm:$0xff]
        %v1748 = vld [vmem:[%s11 + $0x270] sm:$0xff]
        %v1749 = vld [vmem:[%s11 + $0x278] sm:$0xff]
        %v1750 = vld [vmem:[%s11 + $0x280] sm:$0xff]
        %v1751 = vld [vmem:[%s11 + $0x288] sm:$0xff]
        %v1752 = vld [vmem:[%s11 + $0x290] sm:$0xff]
        %v1753 = vld [vmem:[%s11 + $0x298] sm:$0xff]
        %v1754 = vld [vmem:[%s11 + $0x2a0] sm:$0xff]
        %v1755 = vld [vmem:[%s11 + $0x2a8] sm:$0xff]
        %v1756 = vld [vmem:[%s11 + $0x2b0] sm:$0xff]
        %v1757 = vld [vmem:[%s11 + $0x2b8] sm:$0xff]
        %v1758 = vld [vmem:[%s11 + $0x2c0] sm:$0xff]
        %v1759 = vld [vmem:[%s11 + $0x2c8] sm:$0xff]
        %v1760 = vld [vmem:[%s11 + $0x2d0] sm:$0xff]
        %v1761 = vld [vmem:[%s11 + $0x2d8] sm:$0xff]
        %v1762 = vld [vmem:[%s11 + $0x2e0] sm:$0xff]
        %v1763 = vld [vmem:[%s11 + $0x2e8] sm:$0xff]
        %v1764 = vld [vmem:[%s11 + $0x2f0] sm:$0xff]
        %v1765 = vld [vmem:[%s11 + $0x2f8] sm:$0xff]
        %v1766 = vld [vmem:[%s11 + $0x300] sm:$0xff]
        %v1767 = vld [vmem:[%s11 + $0x308] sm:$0xff]
        %v1768 = vld [vmem:[%s11 + $0x310] sm:$0xff]
        %v1769 = vld [vmem:[%s11 + $0x318] sm:$0xff]
        %v1770 = vld [vmem:[%s11 + $0x320] sm:$0xff]
        %v1771 = vld [vmem:[%s11 + $0x328] sm:$0xff]
        %v1772 = vld [vmem:[%s11 + $0x330] sm:$0xff]
        %v1773 = vld [vmem:[%s11 + $0x338] sm:$0xff]
        %v1774 = vld [vmem:[%s11 + $0x340] sm:$0xff]
        %v1775 = vld [vmem:[%s11 + $0x348] sm:$0xff]
        %v1776 = vld [vmem:[%s11 + $0x350] sm:$0xff]
        %v1777 = vld [vmem:[%s11 + $0x358] sm:$0xff]
        %v1778 = vld [vmem:[%s11 + $0x360] sm:$0xff]
        %v1779 = vld [vmem:[%s11 + $0x368] sm:$0xff]
        %v1780 = vld [vmem:[%s11 + $0x370] sm:$0xff]
        %v1781 = vld [vmem:[%s11 + $0x378] sm:$0xff]
        %v1782 = vld [vmem:[%s11 + $0x380] sm:$0xff]
        %v1783 = vld [vmem:[%s11 + $0x388] sm:$0xff]
        %v1784 = vld [vmem:[%s11 + $0x390] sm:$0xff]
        %v1785 = vld [vmem:[%s11 + $0x398] sm:$0xff]
        %v1786 = vld [vmem:[%s11 + $0x3a0] sm:$0xff]
        %v1787 = vld [vmem:[%s11 + $0x3a8] sm:$0xff]
        %v1788 = vld [vmem:[%s11 + $0x3b0] sm:$0xff]
        %v1789 = vld [vmem:[%s11 + $0x3b8] sm:$0xff]
        %v1790 = vld [vmem:[%s11 + $0x3c0] sm:$0xff]
        %v1791 = vld [vmem:[%s11 + $0x3c8] sm:$0xff]
        %v1792 = vld [vmem:[%s11 + $0x3d0] sm:$0xff]
        %v1793 = vld [vmem:[%s11 + $0x3d8] sm:$0xff]
        %v1794 = vld [vmem:[%s11 + $0x3e0] sm:$0xff]
        %v1795 = vld [vmem:[%s11 + $0x3e8] sm:$0xff]
        %v1796 = vld [vmem:[%s11 + $0x3f0] sm:$0xff]
        %v1797 = vld [vmem:[%s11 + $0x3f8] sm:$0xff]
        %1798 = vmatpush.msra.mxu0 %v1685
        %1799 = vmatpush.msra.mxu0 %v1684
        %1800 = vmatpush.msra.mxu0 %v1683
        %1801 = vmatpush.msra.mxu0 %v1682
        %1802 = vmatpush.msra.mxu0 %v1681
        %1803 = vmatpush.msra.mxu0 %v1680
        %1804 = vmatpush.msra.mxu0 %v1679
        %1805 = vmatpush.msra.mxu0 %v1678
        %1806 = vmatpush.msra.mxu0 %v1677
        %1807 = vmatpush.msra.mxu0 %v1676
        %1808 = vmatpush.msra.mxu0 %v1675
        %1809 = vmatpush.msra.mxu0 %v1674
        %1810 = vmatpush.msra.mxu0 %v1673
        %1811 = vmatpush.msra.mxu0 %v1672
        %1812 = vmatpush.msra.mxu0 %v1671
        %1813 = vmatpush.msra.mxu0 %v1670
        %1814 = vmatmul.f32.gmra.mxu0 %v1662
        %v1815 = vpop.f32.mrf.mxu0
        %v1816 = vadd.f32 0.0, %v1815
        %1817 = vdwg.mxu0
        %1818 = vmatpush.msra.mxu0 %v1701
        %1819 = vmatpush.msra.mxu0 %v1700
        %1820 = vmatpush.msra.mxu0 %v1699
        %1821 = vmatpush.msra.mxu0 %v1698
        %1822 = vmatpush.msra.mxu0 %v1697
        %1823 = vmatpush.msra.mxu0 %v1696
        %1824 = vmatpush.msra.mxu0 %v1695
        %1825 = vmatpush.msra.mxu0 %v1694
        %1826 = vmatpush.msra.mxu0 %v1693
        %1827 = vmatpush.msra.mxu0 %v1692
        %1828 = vmatpush.msra.mxu0 %v1691
        %1829 = vmatpush.msra.mxu0 %v1690
        %1830 = vmatpush.msra.mxu0 %v1689
        %1831 = vmatpush.msra.mxu0 %v1688
        %1832 = vmatpush.msra.mxu0 %v1687
        %1833 = vmatpush.msra.mxu0 %v1686
        %1834 = vmatmul.f32.gmra.mxu0 %v1663
        %v1835 = vpop.f32.mrf.mxu0
        %v1836 = vadd.f32 %v1816, %v1835
        %1837 = vdwg.mxu0
        %1838 = vmatpush.msra.mxu0 %v1717
        %1839 = vmatpush.msra.mxu0 %v1716
        %1840 = vmatpush.msra.mxu0 %v1715
        %1841 = vmatpush.msra.mxu0 %v1714
        %1842 = vmatpush.msra.mxu0 %v1713
        %1843 = vmatpush.msra.mxu0 %v1712
        %1844 = vmatpush.msra.mxu0 %v1711
        %1845 = vmatpush.msra.mxu0 %v1710
        %1846 = vmatpush.msra.mxu0 %v1709
        %1847 = vmatpush.msra.mxu0 %v1708
        %1848 = vmatpush.msra.mxu0 %v1707
        %1849 = vmatpush.msra.mxu0 %v1706
        %1850 = vmatpush.msra.mxu0 %v1705
        %1851 = vmatpush.msra.mxu0 %v1704
        %1852 = vmatpush.msra.mxu0 %v1703
        %1853 = vmatpush.msra.mxu0 %v1702
        %1854 = vmatmul.f32.gmra.mxu0 %v1664
        %v1855 = vpop.f32.mrf.mxu0
        %v1856 = vadd.f32 %v1836, %v1855
        %1857 = vdwg.mxu0
        %1858 = vmatpush.msra.mxu0 %v1733
        %1859 = vmatpush.msra.mxu0 %v1732
        %1860 = vmatpush.msra.mxu0 %v1731
        %1861 = vmatpush.msra.mxu0 %v1730
        %1862 = vmatpush.msra.mxu0 %v1729
        %1863 = vmatpush.msra.mxu0 %v1728
        %1864 = vmatpush.msra.mxu0 %v1727
        %1865 = vmatpush.msra.mxu0 %v1726
        %1866 = vmatpush.msra.mxu0 %v1725
        %1867 = vmatpush.msra.mxu0 %v1724
        %1868 = vmatpush.msra.mxu0 %v1723
        %1869 = vmatpush.msra.mxu0 %v1722
        %1870 = vmatpush.msra.mxu0 %v1721
        %1871 = vmatpush.msra.mxu0 %v1720
        %1872 = vmatpush.msra.mxu0 %v1719
        %1873 = vmatpush.msra.mxu0 %v1718
        %1874 = vmatmul.f32.gmra.mxu0 %v1665
        %v1875 = vpop.f32.mrf.mxu0
        %v1876 = vadd.f32 %v1856, %v1875
        %1877 = vdwg.mxu0
        %1878 = vmatpush.msra.mxu0 %v1749
        %1879 = vmatpush.msra.mxu0 %v1748
        %1880 = vmatpush.msra.mxu0 %v1747
        %1881 = vmatpush.msra.mxu0 %v1746
        %1882 = vmatpush.msra.mxu0 %v1745
        %1883 = vmatpush.msra.mxu0 %v1744
        %1884 = vmatpush.msra.mxu0 %v1743
        %1885 = vmatpush.msra.mxu0 %v1742
        %1886 = vmatpush.msra.mxu0 %v1741
        %1887 = vmatpush.msra.mxu0 %v1740
        %1888 = vmatpush.msra.mxu0 %v1739
        %1889 = vmatpush.msra.mxu0 %v1738
        %1890 = vmatpush.msra.mxu0 %v1737
        %1891 = vmatpush.msra.mxu0 %v1736
        %1892 = vmatpush.msra.mxu0 %v1735
        %1893 = vmatpush.msra.mxu0 %v1734
        %1894 = vmatmul.f32.gmra.mxu0 %v1666
        %v1895 = vpop.f32.mrf.mxu0
        %v1896 = vadd.f32 %v1876, %v1895
        %1897 = vdwg.mxu0
        %1898 = vmatpush.msra.mxu0 %v1765
        %1899 = vmatpush.msra.mxu0 %v1764
        %1900 = vmatpush.msra.mxu0 %v1763
        %1901 = vmatpush.msra.mxu0 %v1762
        %1902 = vmatpush.msra.mxu0 %v1761
        %1903 = vmatpush.msra.mxu0 %v1760
        %1904 = vmatpush.msra.mxu0 %v1759
        %1905 = vmatpush.msra.mxu0 %v1758
        %1906 = vmatpush.msra.mxu0 %v1757
        %1907 = vmatpush.msra.mxu0 %v1756
        %1908 = vmatpush.msra.mxu0 %v1755
        %1909 = vmatpush.msra.mxu0 %v1754
        %1910 = vmatpush.msra.mxu0 %v1753
        %1911 = vmatpush.msra.mxu0 %v1752
        %1912 = vmatpush.msra.mxu0 %v1751
        %1913 = vmatpush.msra.mxu0 %v1750
        %1914 = vmatmul.f32.gmra.mxu0 %v1667
        %v1915 = vpop.f32.mrf.mxu0
        %v1916 = vadd.f32 %v1896, %v1915
        %1917 = vdwg.mxu0
        %1918 = vmatpush.msra.mxu0 %v1781
        %1919 = vmatpush.msra.mxu0 %v1780
        %1920 = vmatpush.msra.mxu0 %v1779
        %1921 = vmatpush.msra.mxu0 %v1778
        %1922 = vmatpush.msra.mxu0 %v1777
        %1923 = vmatpush.msra.mxu0 %v1776
        %1924 = vmatpush.msra.mxu0 %v1775
        %1925 = vmatpush.msra.mxu0 %v1774
        %1926 = vmatpush.msra.mxu0 %v1773
        %1927 = vmatpush.msra.mxu0 %v1772
        %1928 = vmatpush.msra.mxu0 %v1771
        %1929 = vmatpush.msra.mxu0 %v1770
        %1930 = vmatpush.msra.mxu0 %v1769
        %1931 = vmatpush.msra.mxu0 %v1768
        %1932 = vmatpush.msra.mxu0 %v1767
        %1933 = vmatpush.msra.mxu0 %v1766
        %1934 = vmatmul.f32.gmra.mxu0 %v1668
        %v1935 = vpop.f32.mrf.mxu0
        %v1936 = vadd.f32 %v1916, %v1935
        %1937 = vdwg.mxu0
        %1938 = vmatpush.msra.mxu0 %v1797
        %1939 = vmatpush.msra.mxu0 %v1796
        %1940 = vmatpush.msra.mxu0 %v1795
        %1941 = vmatpush.msra.mxu0 %v1794
        %1942 = vmatpush.msra.mxu0 %v1793
        %1943 = vmatpush.msra.mxu0 %v1792
        %1944 = vmatpush.msra.mxu0 %v1791
        %1945 = vmatpush.msra.mxu0 %v1790
        %1946 = vmatpush.msra.mxu0 %v1789
        %1947 = vmatpush.msra.mxu0 %v1788
        %1948 = vmatpush.msra.mxu0 %v1787
        %1949 = vmatpush.msra.mxu0 %v1786
        %1950 = vmatpush.msra.mxu0 %v1785
        %1951 = vmatpush.msra.mxu0 %v1784
        %1952 = vmatpush.msra.mxu0 %v1783
        %1953 = vmatpush.msra.mxu0 %v1782
        %1954 = vmatmul.f32.gmra.mxu0 %v1669
        %v1955 = vpop.f32.mrf.mxu0
        %v1956 = vadd.f32 %v1936, %v1955
        %1957 = vdwg.mxu0
        %v1958 = vxor.u32 %v1956, 2147483648
        %v1959 = vmul.f32 %v1958, 1.442695
        %v1960 = vpow.pop %v1959
        %v1961 = vadd.f32 %v1960, 1.0
        %v1962 = vrcp.pop %v1961
        %v1963 = vmul.f32 %v1961, %v1962
        %v1964 = vsub.f32 1.0, %v1963
        %v1965 = vmul.f32 %v1962, %v1964
        %v1966 = vadd.f32 %v1962, %v1965
        %vm1967 = vweird.f32 %v1961
        %vm1968 = vweird.f32 %v1962
        %vm1969 = vmor %vm1967, %vm1968
        %v1970 = vsel %vm1969, %v1962, %v1966
        %v1971 = vand.u32 2147483647, %v1961
        %vm1972 = vcmp.eq.f32.partialorder %v1971, 8.507059e+37
        %v1973 = vand.u32 %v1961, 2147483648
        %v1974 = vor.u32 1.1754944e-38, %v1973
        %v1975 = vsel %vm1972, %v1974, %v1970
        %v1976 = vmul.f32 1.0, %v1975
        %v1977 = vtanh.pop %v1956
        %1979 = vrot.lane.b32.xlu0 %v1635, 16
        %v1980 = vpop.permute.xlu0 %1979
        %v1982 = vmul.f32 %v1976, %v1980
        %1984 = vrot.lane.b32.xlu0 %v1977, 96
        %v1985 = vpop.permute.xlu0 %1984
        %v1987 = vmul.f32 %v1976, %v1985
        %1989 = vrot.lane.b32.xlu0 %v1987, 16
        %v1990 = vpop.permute.xlu0 %1989
        %v1992 = vadd.f32 %v1982, %v1990
        %v1993 = vtanh.pop %v1992
        %1995 = vrot.lane.b32.xlu0 %v1993, 32
        %v1996 = vpop.permute.xlu0 %1995
        %v1998 = vmul.f32 %v1976, %v1996
        %2000 = vrot.lane.b32.xlu0 %v1998, 80
        %v2001 = vpop.permute.xlu0 %2000
        %2003 = vst.msk [vmem:[%s801] sm:$0xf] %vm1652, %v2001
        %2005 = vrot.lane.b32.xlu0 %v1992, 112
        %v2006 = vpop.permute.xlu0 %2005
        %2008 = vst.msk [vmem:[%s808] sm:$0xf] %vm1652, %v2006
        %2009 = vst.msk [vmem:[#allocation2] sm:$0xf] %vm1652, %v2001
        %v2010 = vld [vmem:[#allocation2] sm:$0x1]
        %2011 = vst.msk [vmem:[#allocation4] sm:$0x1] %vm1250, %v2010
        %2012 = vst.msk [vmem:[#allocation4 + $0x1] sm:$0x1] %vm1250, %v2010
        %v2013 = vld [vmem:[#allocation2 + $0x1] sm:$0x1]
        %2014 = vst.msk [vmem:[#allocation4 + $0x2] sm:$0x1] %vm1250, %v2013
        %2015 = vst.msk [vmem:[#allocation4 + $0x3] sm:$0x1] %vm1250, %v2013
        %v2016 = vld [vmem:[#allocation2 + $0x2] sm:$0x1]
        %2017 = vst.msk [vmem:[#allocation4 + $0x4] sm:$0x1] %vm1250, %v2016
        %2018 = vst.msk [vmem:[#allocation4 + $0x5] sm:$0x1] %vm1250, %v2016
        %v2019 = vld [vmem:[#allocation2 + $0x3] sm:$0x1]
        %2020 = vst.msk [vmem:[#allocation4 + $0x6] sm:$0x1] %vm1250, %v2019
        %2021 = vst.msk [vmem:[#allocation4 + $0x7] sm:$0x1] %vm1250, %v2019
        %v2022 = vld [vmem:[#allocation4] sm:$0xff]
        %2023 = vst.msk [vmem:[#allocation2] sm:$0xff] %vm850, 0.0
        %2024 = vst.msk [vmem:[#allocation2 + $0x8] sm:$0xff] %vm850, 0.0
        %2025 = vst.msk [vmem:[#allocation2 + $0x10] sm:$0x7] %vm853, 0.0
        %2026 = vst.msk [vmem:[#allocation2] sm:$0xff] %vm1052, %v2022
        %v2027 = vld [vmem:[#allocation2] sm:$0xff]
        %2028 = vst.msk [vmem:[#allocation3] sm:$0xff] %vm1052, %v2027
        %v2029 = vld [vmem:[#allocation2 + $0x1] sm:$0xff]
        %2030 = vst.msk [vmem:[#allocation3 + $0x8] sm:$0xff] %vm1052, %v2029
        %v2031 = vld [vmem:[#allocation2 + $0x2] sm:$0xff]
        %2032 = vst.msk [vmem:[#allocation3 + $0x10] sm:$0xff] %vm1052, %v2031
        %v2033 = vld [vmem:[#allocation2 + $0x3] sm:$0xff]
        %2034 = vst.msk [vmem:[#allocation3 + $0x18] sm:$0xff] %vm1052, %v2033
        %v2035 = vld [vmem:[#allocation3] sm:$0xff]
        %v2036 = vld [vmem:[#allocation3 + $0x8] sm:$0xff]
        %v2037 = vld [vmem:[#allocation3 + $0x10] sm:$0xff]
        %v2038 = vld [vmem:[#allocation3 + $0x18] sm:$0xff]
        %v2039 = vld [vmem:[%s12] sm:$0xff]
        %v2040 = vld [vmem:[%s12 + $0x8] sm:$0xff]
        %v2041 = vld [vmem:[%s12 + $0x10] sm:$0xff]
        %v2042 = vld [vmem:[%s12 + $0x18] sm:$0xff]
        %v2043 = vld [vmem:[%s12 + $0x20] sm:$0xff]
        %v2044 = vld [vmem:[%s12 + $0x28] sm:$0xff]
        %v2045 = vld [vmem:[%s12 + $0x30] sm:$0xff]
        %v2046 = vld [vmem:[%s12 + $0x38] sm:$0xff]
        %v2047 = vld [vmem:[%s12 + $0x40] sm:$0xff]
        %v2048 = vld [vmem:[%s12 + $0x48] sm:$0xff]
        %v2049 = vld [vmem:[%s12 + $0x50] sm:$0xff]
        %v2050 = vld [vmem:[%s12 + $0x58] sm:$0xff]
        %v2051 = vld [vmem:[%s12 + $0x60] sm:$0xff]
        %v2052 = vld [vmem:[%s12 + $0x68] sm:$0xff]
        %v2053 = vld [vmem:[%s12 + $0x70] sm:$0xff]
        %v2054 = vld [vmem:[%s12 + $0x78] sm:$0xff]
        %v2055 = vld [vmem:[%s12 + $0x80] sm:$0xff]
        %v2056 = vld [vmem:[%s12 + $0x88] sm:$0xff]
        %v2057 = vld [vmem:[%s12 + $0x90] sm:$0xff]
        %v2058 = vld [vmem:[%s12 + $0x98] sm:$0xff]
        %v2059 = vld [vmem:[%s12 + $0xa0] sm:$0xff]
        %v2060 = vld [vmem:[%s12 + $0xa8] sm:$0xff]
        %v2061 = vld [vmem:[%s12 + $0xb0] sm:$0xff]
        %v2062 = vld [vmem:[%s12 + $0xb8] sm:$0xff]
        %v2063 = vld [vmem:[%s12 + $0xc0] sm:$0xff]
        %v2064 = vld [vmem:[%s12 + $0xc8] sm:$0xff]
        %v2065 = vld [vmem:[%s12 + $0xd0] sm:$0xff]
        %v2066 = vld [vmem:[%s12 + $0xd8] sm:$0xff]
        %v2067 = vld [vmem:[%s12 + $0xe0] sm:$0xff]
        %v2068 = vld [vmem:[%s12 + $0xe8] sm:$0xff]
        %v2069 = vld [vmem:[%s12 + $0xf0] sm:$0xff]
        %v2070 = vld [vmem:[%s12 + $0xf8] sm:$0xff]
        %v2071 = vld [vmem:[%s12 + $0x100] sm:$0xff]
        %v2072 = vld [vmem:[%s12 + $0x108] sm:$0xff]
        %v2073 = vld [vmem:[%s12 + $0x110] sm:$0xff]
        %v2074 = vld [vmem:[%s12 + $0x118] sm:$0xff]
        %v2075 = vld [vmem:[%s12 + $0x120] sm:$0xff]
        %v2076 = vld [vmem:[%s12 + $0x128] sm:$0xff]
        %v2077 = vld [vmem:[%s12 + $0x130] sm:$0xff]
        %v2078 = vld [vmem:[%s12 + $0x138] sm:$0xff]
        %v2079 = vld [vmem:[%s12 + $0x140] sm:$0xff]
        %v2080 = vld [vmem:[%s12 + $0x148] sm:$0xff]
        %v2081 = vld [vmem:[%s12 + $0x150] sm:$0xff]
        %v2082 = vld [vmem:[%s12 + $0x158] sm:$0xff]
        %v2083 = vld [vmem:[%s12 + $0x160] sm:$0xff]
        %v2084 = vld [vmem:[%s12 + $0x168] sm:$0xff]
        %v2085 = vld [vmem:[%s12 + $0x170] sm:$0xff]
        %v2086 = vld [vmem:[%s12 + $0x178] sm:$0xff]
        %v2087 = vld [vmem:[%s12 + $0x180] sm:$0xff]
        %v2088 = vld [vmem:[%s12 + $0x188] sm:$0xff]
        %v2089 = vld [vmem:[%s12 + $0x190] sm:$0xff]
        %v2090 = vld [vmem:[%s12 + $0x198] sm:$0xff]
        %v2091 = vld [vmem:[%s12 + $0x1a0] sm:$0xff]
        %v2092 = vld [vmem:[%s12 + $0x1a8] sm:$0xff]
        %v2093 = vld [vmem:[%s12 + $0x1b0] sm:$0xff]
        %v2094 = vld [vmem:[%s12 + $0x1b8] sm:$0xff]
        %v2095 = vld [vmem:[%s12 + $0x1c0] sm:$0xff]
        %v2096 = vld [vmem:[%s12 + $0x1c8] sm:$0xff]
        %v2097 = vld [vmem:[%s12 + $0x1d0] sm:$0xff]
        %v2098 = vld [vmem:[%s12 + $0x1d8] sm:$0xff]
        %v2099 = vld [vmem:[%s12 + $0x1e0] sm:$0xff]
        %v2100 = vld [vmem:[%s12 + $0x1e8] sm:$0xff]
        %v2101 = vld [vmem:[%s12 + $0x1f0] sm:$0xff]
        %v2102 = vld [vmem:[%s12 + $0x1f8] sm:$0xff]
        %v2103 = vld [vmem:[%s13] sm:$0x1]
        %v2105 = vperm.slane %v2103, 0
        %2107 = vmatpush.msra.mxu0 %v2054
        %2108 = vmatpush.msra.mxu0 %v2053
        %2109 = vmatpush.msra.mxu0 %v2052
        %2110 = vmatpush.msra.mxu0 %v2051
        %2111 = vmatpush.msra.mxu0 %v2050
        %2112 = vmatpush.msra.mxu0 %v2049
        %2113 = vmatpush.msra.mxu0 %v2048
        %2114 = vmatpush.msra.mxu0 %v2047
        %2115 = vmatpush.msra.mxu0 %v2046
        %2116 = vmatpush.msra.mxu0 %v2045
        %2117 = vmatpush.msra.mxu0 %v2044
        %2118 = vmatpush.msra.mxu0 %v2043
        %2119 = vmatpush.msra.mxu0 %v2042
        %2120 = vmatpush.msra.mxu0 %v2041
        %2121 = vmatpush.msra.mxu0 %v2040
        %2122 = vmatpush.msra.mxu0 %v2039
        %2123 = vmatmul.f32.gmra.mxu0 %v2035
        %v2124 = vpop.f32.mrf.mxu0
        %v2125 = vadd.f32 %v2105, %v2124
        %2126 = vdwg.mxu0
        %2127 = vmatpush.msra.mxu0 %v2070
        %2128 = vmatpush.msra.mxu0 %v2069
        %2129 = vmatpush.msra.mxu0 %v2068
        %2130 = vmatpush.msra.mxu0 %v2067
        %2131 = vmatpush.msra.mxu0 %v2066
        %2132 = vmatpush.msra.mxu0 %v2065
        %2133 = vmatpush.msra.mxu0 %v2064
        %2134 = vmatpush.msra.mxu0 %v2063
        %2135 = vmatpush.msra.mxu0 %v2062
        %2136 = vmatpush.msra.mxu0 %v2061
        %2137 = vmatpush.msra.mxu0 %v2060
        %2138 = vmatpush.msra.mxu0 %v2059
        %2139 = vmatpush.msra.mxu0 %v2058
        %2140 = vmatpush.msra.mxu0 %v2057
        %2141 = vmatpush.msra.mxu0 %v2056
        %2142 = vmatpush.msra.mxu0 %v2055
        %2143 = vmatmul.f32.gmra.mxu0 %v2036
        %v2144 = vpop.f32.mrf.mxu0
        %v2145 = vadd.f32 %v2125, %v2144
        %2146 = vdwg.mxu0
        %2147 = vmatpush.msra.mxu0 %v2086
        %2148 = vmatpush.msra.mxu0 %v2085
        %2149 = vmatpush.msra.mxu0 %v2084
        %2150 = vmatpush.msra.mxu0 %v2083
        %2151 = vmatpush.msra.mxu0 %v2082
        %2152 = vmatpush.msra.mxu0 %v2081
        %2153 = vmatpush.msra.mxu0 %v2080
        %2154 = vmatpush.msra.mxu0 %v2079
        %2155 = vmatpush.msra.mxu0 %v2078
        %2156 = vmatpush.msra.mxu0 %v2077
        %2157 = vmatpush.msra.mxu0 %v2076
        %2158 = vmatpush.msra.mxu0 %v2075
        %2159 = vmatpush.msra.mxu0 %v2074
        %2160 = vmatpush.msra.mxu0 %v2073
        %2161 = vmatpush.msra.mxu0 %v2072
        %2162 = vmatpush.msra.mxu0 %v2071
        %2163 = vmatmul.f32.gmra.mxu0 %v2037
        %v2164 = vpop.f32.mrf.mxu0
        %v2165 = vadd.f32 %v2145, %v2164
        %2166 = vdwg.mxu0
        %2167 = vmatpush.msra.mxu0 %v2102
        %2168 = vmatpush.msra.mxu0 %v2101
        %2169 = vmatpush.msra.mxu0 %v2100
        %2170 = vmatpush.msra.mxu0 %v2099
        %2171 = vmatpush.msra.mxu0 %v2098
        %2172 = vmatpush.msra.mxu0 %v2097
        %2173 = vmatpush.msra.mxu0 %v2096
        %2174 = vmatpush.msra.mxu0 %v2095
        %2175 = vmatpush.msra.mxu0 %v2094
        %2176 = vmatpush.msra.mxu0 %v2093
        %2177 = vmatpush.msra.mxu0 %v2092
        %2178 = vmatpush.msra.mxu0 %v2091
        %2179 = vmatpush.msra.mxu0 %v2090
        %2180 = vmatpush.msra.mxu0 %v2089
        %2181 = vmatpush.msra.mxu0 %v2088
        %2182 = vmatpush.msra.mxu0 %v2087
        %2183 = vmatmul.f32.gmra.mxu0 %v2038
        %v2184 = vpop.f32.mrf.mxu0
        %v2185 = vadd.f32 %v2165, %v2184
        %2186 = vdwg.mxu0
        %vm2187 = vcmp.ge.f32.partialorder %v2185, 0.0
        %v2188 = vmul.f32 %v2185, 0.2
        %v2189 = vsel %vm2187, %v2185, %v2188
        %2190 = vst.msk [vmem:[#allocation2] sm:$0xff] %vm850, 0.0
        %2191 = vst.msk [vmem:[#allocation2 + $0x8] sm:$0xff] %vm850, 0.0
        %2192 = vst.msk [vmem:[#allocation2 + $0x10] sm:$0x7] %vm853, 0.0
        %2193 = vst.msk [vmem:[#allocation2] sm:$0xff] %vm850, %v2189
        %v2194 = vld [vmem:[#allocation2] sm:$0xff]
        %2195 = vst.msk [vmem:[#allocation3] sm:$0xff] %vm850, %v2194
        %v2196 = vld [vmem:[#allocation2 + $0x1] sm:$0xff]
        %2197 = vst.msk [vmem:[#allocation3 + $0x8] sm:$0xff] %vm850, %v2196
        %v2198 = vld [vmem:[#allocation2 + $0x2] sm:$0xff]
        %2199 = vst.msk [vmem:[#allocation3 + $0x10] sm:$0xff] %vm850, %v2198
        %v2200 = vld [vmem:[#allocation2 + $0x3] sm:$0xff]
        %2201 = vst.msk [vmem:[#allocation3 + $0x18] sm:$0xff] %vm850, %v2200
        %v2202 = vld [vmem:[#allocation3] sm:$0xff]
        %v2203 = vld [vmem:[#allocation3 + $0x8] sm:$0xff]
        %v2204 = vld [vmem:[#allocation3 + $0x10] sm:$0xff]
        %v2205 = vld [vmem:[#allocation3 + $0x18] sm:$0xff]
        %v2206 = vld [vmem:[%s14] sm:$0xff]
        %v2207 = vld [vmem:[%s14 + $0x8] sm:$0xff]
        %v2208 = vld [vmem:[%s14 + $0x10] sm:$0xff]
        %v2209 = vld [vmem:[%s14 + $0x18] sm:$0xff]
        %v2210 = vld [vmem:[%s14 + $0x20] sm:$0xff]
        %v2211 = vld [vmem:[%s14 + $0x28] sm:$0xff]
        %v2212 = vld [vmem:[%s14 + $0x30] sm:$0xff]
        %v2213 = vld [vmem:[%s14 + $0x38] sm:$0xff]
        %v2214 = vld [vmem:[%s14 + $0x40] sm:$0xff]
        %v2215 = vld [vmem:[%s14 + $0x48] sm:$0xff]
        %v2216 = vld [vmem:[%s14 + $0x50] sm:$0xff]
        %v2217 = vld [vmem:[%s14 + $0x58] sm:$0xff]
        %v2218 = vld [vmem:[%s14 + $0x60] sm:$0xff]
        %v2219 = vld [vmem:[%s14 + $0x68] sm:$0xff]
        %v2220 = vld [vmem:[%s14 + $0x70] sm:$0xff]
        %v2221 = vld [vmem:[%s14 + $0x78] sm:$0xff]
        %v2222 = vld [vmem:[%s14 + $0x80] sm:$0xff]
        %v2223 = vld [vmem:[%s14 + $0x88] sm:$0xff]
        %v2224 = vld [vmem:[%s14 + $0x90] sm:$0xff]
        %v2225 = vld [vmem:[%s14 + $0x98] sm:$0xff]
        %v2226 = vld [vmem:[%s14 + $0xa0] sm:$0xff]
        %v2227 = vld [vmem:[%s14 + $0xa8] sm:$0xff]
        %v2228 = vld [vmem:[%s14 + $0xb0] sm:$0xff]
        %v2229 = vld [vmem:[%s14 + $0xb8] sm:$0xff]
        %v2230 = vld [vmem:[%s14 + $0xc0] sm:$0xff]
        %v2231 = vld [vmem:[%s14 + $0xc8] sm:$0xff]
        %v2232 = vld [vmem:[%s14 + $0xd0] sm:$0xff]
        %v2233 = vld [vmem:[%s14 + $0xd8] sm:$0xff]
        %v2234 = vld [vmem:[%s14 + $0xe0] sm:$0xff]
        %v2235 = vld [vmem:[%s14 + $0xe8] sm:$0xff]
        %v2236 = vld [vmem:[%s14 + $0xf0] sm:$0xff]
        %v2237 = vld [vmem:[%s14 + $0xf8] sm:$0xff]
        %v2238 = vld [vmem:[%s14 + $0x100] sm:$0xff]
        %v2239 = vld [vmem:[%s14 + $0x108] sm:$0xff]
        %v2240 = vld [vmem:[%s14 + $0x110] sm:$0xff]
        %v2241 = vld [vmem:[%s14 + $0x118] sm:$0xff]
        %v2242 = vld [vmem:[%s14 + $0x120] sm:$0xff]
        %v2243 = vld [vmem:[%s14 + $0x128] sm:$0xff]
        %v2244 = vld [vmem:[%s14 + $0x130] sm:$0xff]
        %v2245 = vld [vmem:[%s14 + $0x138] sm:$0xff]
        %v2246 = vld [vmem:[%s14 + $0x140] sm:$0xff]
        %v2247 = vld [vmem:[%s14 + $0x148] sm:$0xff]
        %v2248 = vld [vmem:[%s14 + $0x150] sm:$0xff]
        %v2249 = vld [vmem:[%s14 + $0x158] sm:$0xff]
        %v2250 = vld [vmem:[%s14 + $0x160] sm:$0xff]
        %v2251 = vld [vmem:[%s14 + $0x168] sm:$0xff]
        %v2252 = vld [vmem:[%s14 + $0x170] sm:$0xff]
        %v2253 = vld [vmem:[%s14 + $0x178] sm:$0xff]
        %v2254 = vld [vmem:[%s14 + $0x180] sm:$0xff]
        %v2255 = vld [vmem:[%s14 + $0x188] sm:$0xff]
        %v2256 = vld [vmem:[%s14 + $0x190] sm:$0xff]
        %v2257 = vld [vmem:[%s14 + $0x198] sm:$0xff]
        %v2258 = vld [vmem:[%s14 + $0x1a0] sm:$0xff]
        %v2259 = vld [vmem:[%s14 + $0x1a8] sm:$0xff]
        %v2260 = vld [vmem:[%s14 + $0x1b0] sm:$0xff]
        %v2261 = vld [vmem:[%s14 + $0x1b8] sm:$0xff]
        %v2262 = vld [vmem:[%s14 + $0x1c0] sm:$0xff]
        %v2263 = vld [vmem:[%s14 + $0x1c8] sm:$0xff]
        %v2264 = vld [vmem:[%s14 + $0x1d0] sm:$0xff]
        %v2265 = vld [vmem:[%s14 + $0x1d8] sm:$0xff]
        %v2266 = vld [vmem:[%s14 + $0x1e0] sm:$0xff]
        %v2267 = vld [vmem:[%s14 + $0x1e8] sm:$0xff]
        %v2268 = vld [vmem:[%s14 + $0x1f0] sm:$0xff]
        %v2269 = vld [vmem:[%s14 + $0x1f8] sm:$0xff]
        %v2270 = vld [vmem:[%s15] sm:$0x1]
        %v2272 = vperm.slane %v2270, 0
        %2274 = vmatpush.msra.mxu0 %v2221
        %2275 = vmatpush.msra.mxu0 %v2220
        %2276 = vmatpush.msra.mxu0 %v2219
        %2277 = vmatpush.msra.mxu0 %v2218
        %2278 = vmatpush.msra.mxu0 %v2217
        %2279 = vmatpush.msra.mxu0 %v2216
        %2280 = vmatpush.msra.mxu0 %v2215
        %2281 = vmatpush.msra.mxu0 %v2214
        %2282 = vmatpush.msra.mxu0 %v2213
        %2283 = vmatpush.msra.mxu0 %v2212
        %2284 = vmatpush.msra.mxu0 %v2211
        %2285 = vmatpush.msra.mxu0 %v2210
        %2286 = vmatpush.msra.mxu0 %v2209
        %2287 = vmatpush.msra.mxu0 %v2208
        %2288 = vmatpush.msra.mxu0 %v2207
        %2289 = vmatpush.msra.mxu0 %v2206
        %2290 = vmatmul.f32.gmra.mxu0 %v2202
        %v2291 = vpop.f32.mrf.mxu0
        %v2292 = vadd.f32 %v2272, %v2291
        %2293 = vdwg.mxu0
        %2294 = vmatpush.msra.mxu0 %v2237
        %2295 = vmatpush.msra.mxu0 %v2236
        %2296 = vmatpush.msra.mxu0 %v2235
        %2297 = vmatpush.msra.mxu0 %v2234
        %2298 = vmatpush.msra.mxu0 %v2233
        %2299 = vmatpush.msra.mxu0 %v2232
        %2300 = vmatpush.msra.mxu0 %v2231
        %2301 = vmatpush.msra.mxu0 %v2230
        %2302 = vmatpush.msra.mxu0 %v2229
        %2303 = vmatpush.msra.mxu0 %v2228
        %2304 = vmatpush.msra.mxu0 %v2227
        %2305 = vmatpush.msra.mxu0 %v2226
        %2306 = vmatpush.msra.mxu0 %v2225
        %2307 = vmatpush.msra.mxu0 %v2224
        %2308 = vmatpush.msra.mxu0 %v2223
        %2309 = vmatpush.msra.mxu0 %v2222
        %2310 = vmatmul.f32.gmra.mxu0 %v2203
        %v2311 = vpop.f32.mrf.mxu0
        %v2312 = vadd.f32 %v2292, %v2311
        %2313 = vdwg.mxu0
        %2314 = vmatpush.msra.mxu0 %v2253
        %2315 = vmatpush.msra.mxu0 %v2252
        %2316 = vmatpush.msra.mxu0 %v2251
        %2317 = vmatpush.msra.mxu0 %v2250
        %2318 = vmatpush.msra.mxu0 %v2249
        %2319 = vmatpush.msra.mxu0 %v2248
        %2320 = vmatpush.msra.mxu0 %v2247
        %2321 = vmatpush.msra.mxu0 %v2246
        %2322 = vmatpush.msra.mxu0 %v2245
        %2323 = vmatpush.msra.mxu0 %v2244
        %2324 = vmatpush.msra.mxu0 %v2243
        %2325 = vmatpush.msra.mxu0 %v2242
        %2326 = vmatpush.msra.mxu0 %v2241
        %2327 = vmatpush.msra.mxu0 %v2240
        %2328 = vmatpush.msra.mxu0 %v2239
        %2329 = vmatpush.msra.mxu0 %v2238
        %2330 = vmatmul.f32.gmra.mxu0 %v2204
        %v2331 = vpop.f32.mrf.mxu0
        %v2332 = vadd.f32 %v2312, %v2331
        %2333 = vdwg.mxu0
        %2334 = vmatpush.msra.mxu0 %v2269
        %2335 = vmatpush.msra.mxu0 %v2268
        %2336 = vmatpush.msra.mxu0 %v2267
        %2337 = vmatpush.msra.mxu0 %v2266
        %2338 = vmatpush.msra.mxu0 %v2265
        %2339 = vmatpush.msra.mxu0 %v2264
        %2340 = vmatpush.msra.mxu0 %v2263
        %2341 = vmatpush.msra.mxu0 %v2262
        %2342 = vmatpush.msra.mxu0 %v2261
        %2343 = vmatpush.msra.mxu0 %v2260
        %2344 = vmatpush.msra.mxu0 %v2259
        %2345 = vmatpush.msra.mxu0 %v2258
        %2346 = vmatpush.msra.mxu0 %v2257
        %2347 = vmatpush.msra.mxu0 %v2256
        %2348 = vmatpush.msra.mxu0 %v2255
        %2349 = vmatpush.msra.mxu0 %v2254
        %2350 = vmatmul.f32.gmra.mxu0 %v2205
        %v2351 = vpop.f32.mrf.mxu0
        %v2352 = vadd.f32 %v2332, %v2351
        %2353 = vdwg.mxu0
        %vm2354 = vcmp.ge.f32.partialorder %v2352, 0.0
        %v2355 = vmul.f32 %v2352, 0.2
        %v2356 = vsel %vm2354, %v2352, %v2355
        %v2357 = vadd.f32 %v2356, %v1614
        %2358 = vst.msk [vmem:[#allocation2] sm:$0xff] %vm850, %v2357
        %v2359 = vld [vmem:[#allocation2] sm:$0x1]
        %2360 = vst.msk [vmem:[#allocation4] sm:$0x1] %vm1619, %v2359
        %2361 = vst.msk [vmem:[#allocation4 + $0x1] sm:$0x1] %vm1619, %v2359
        %v2362 = vld [vmem:[#allocation2 + $0x1] sm:$0x1]
        %2363 = vst.msk [vmem:[#allocation4 + $0x2] sm:$0x1] %vm1619, %v2362
        %2364 = vst.msk [vmem:[#allocation4 + $0x3] sm:$0x1] %vm1619, %v2362
        %v2365 = vld [vmem:[#allocation2 + $0x2] sm:$0x1]
        %2366 = vst.msk [vmem:[#allocation4 + $0x4] sm:$0x1] %vm1619, %v2365
        %2367 = vst.msk [vmem:[#allocation4 + $0x5] sm:$0x1] %vm1619, %v2365
        %v2368 = vld [vmem:[#allocation2 + $0x3] sm:$0x1]
        %2369 = vst.msk [vmem:[#allocation4 + $0x6] sm:$0x1] %vm1619, %v2368
        %2370 = vst.msk [vmem:[#allocation4 + $0x7] sm:$0x1] %vm1619, %v2368
        %v2371 = vld [vmem:[#allocation2 + $0x4] sm:$0x1]
        %2372 = vst.msk [vmem:[#allocation4 + $0x8] sm:$0x1] %vm1619, %v2371
        %2373 = vst.msk [vmem:[#allocation4 + $0x9] sm:$0x1] %vm1619, %v2371
        %v2374 = vld [vmem:[#allocation2 + $0x5] sm:$0x1]
        %2375 = vst.msk [vmem:[#allocation4 + $0xa] sm:$0x1] %vm1619, %v2374
        %2376 = vst.msk [vmem:[#allocation4 + $0xb] sm:$0x1] %vm1619, %v2374
        %v2377 = vld [vmem:[#allocation2 + $0x6] sm:$0x1]
        %2378 = vst.msk [vmem:[#allocation4 + $0xc] sm:$0x1] %vm1619, %v2377
        %2379 = vst.msk [vmem:[#allocation4 + $0xd] sm:$0x1] %vm1619, %v2377
        %v2380 = vld [vmem:[#allocation2 + $0x7] sm:$0x1]
        %2381 = vst.msk [vmem:[#allocation4 + $0xe] sm:$0x1] %vm1619, %v2380
        %2382 = vst.msk [vmem:[#allocation4 + $0xf] sm:$0x1] %vm1619, %v2380
        %v2383 = vld [vmem:[#allocation4] sm:$0xff]
        %v2384 = vld [vmem:[#allocation4 + $0x8] sm:$0xff]
        %2385 = vst.msk [vmem:[#allocation2] sm:$0xff] %vm850, 0.0
        %2386 = vst.msk [vmem:[#allocation2 + $0x8] sm:$0xff] %vm850, 0.0
        %2387 = vst.msk [vmem:[#allocation2 + $0x10] sm:$0x7] %vm853, 0.0
        %2388 = vst.msk [vmem:[#allocation2] sm:$0xff] %vm850, %v2383
        %2389 = vst.msk [vmem:[#allocation2 + $0x8] sm:$0xff] %vm850, %v2384
        %v2390 = vld [vmem:[#allocation2] sm:$0xff]
        %v2391 = vld [vmem:[#allocation2 + $0x8] sm:$0xff]
        %2392 = vst.msk [vmem:[#allocation3] sm:$0xff] %vm850, %v2390
        %2393 = vst.msk [vmem:[#allocation3 + $0x40] sm:$0xff] %vm850, %v2391
        %v2394 = vld [vmem:[#allocation2 + $0x1] sm:$0xff]
        %v2395 = vld [vmem:[#allocation2 + $0x9] sm:$0xff]
        %2396 = vst.msk [vmem:[#allocation3 + $0x8] sm:$0xff] %vm850, %v2394
        %2397 = vst.msk [vmem:[#allocation3 + $0x48] sm:$0xff] %vm850, %v2395
        %v2398 = vld [vmem:[#allocation2 + $0x2] sm:$0xff]
        %v2399 = vld [vmem:[#allocation2 + $0xa] sm:$0xff]
        %2400 = vst.msk [vmem:[#allocation3 + $0x10] sm:$0xff] %vm850, %v2398
        %2401 = vst.msk [vmem:[#allocation3 + $0x50] sm:$0xff] %vm850, %v2399
        %v2402 = vld [vmem:[#allocation2 + $0x3] sm:$0xff]
        %v2403 = vld [vmem:[#allocation2 + $0xb] sm:$0xff]
        %2404 = vst.msk [vmem:[#allocation3 + $0x18] sm:$0xff] %vm850, %v2402
        %2405 = vst.msk [vmem:[#allocation3 + $0x58] sm:$0xff] %vm850, %v2403
        %v2406 = vld [vmem:[#allocation3] sm:$0xff]
        %v2407 = vld [vmem:[#allocation3 + $0x8] sm:$0xff]
        %v2408 = vld [vmem:[#allocation3 + $0x10] sm:$0xff]
        %v2409 = vld [vmem:[#allocation3 + $0x18] sm:$0xff]
        %v2410 = vld [vmem:[#allocation3 + $0x40] sm:$0xff]
        %v2411 = vld [vmem:[#allocation3 + $0x48] sm:$0xff]
        %v2412 = vld [vmem:[#allocation3 + $0x50] sm:$0xff]
        %v2413 = vld [vmem:[#allocation3 + $0x58] sm:$0xff]
        %v2414 = vld [vmem:[%s16] sm:$0xff]
        %v2415 = vld [vmem:[%s16 + $0x8] sm:$0xff]
        %v2416 = vld [vmem:[%s16 + $0x10] sm:$0xff]
        %v2417 = vld [vmem:[%s16 + $0x18] sm:$0xff]
        %v2418 = vld [vmem:[%s16 + $0x20] sm:$0xff]
        %v2419 = vld [vmem:[%s16 + $0x28] sm:$0xff]
        %v2420 = vld [vmem:[%s16 + $0x30] sm:$0xff]
        %v2421 = vld [vmem:[%s16 + $0x38] sm:$0xff]
        %v2422 = vld [vmem:[%s16 + $0x40] sm:$0xff]
        %v2423 = vld [vmem:[%s16 + $0x48] sm:$0xff]
        %v2424 = vld [vmem:[%s16 + $0x50] sm:$0xff]
        %v2425 = vld [vmem:[%s16 + $0x58] sm:$0xff]
        %v2426 = vld [vmem:[%s16 + $0x60] sm:$0xff]
        %v2427 = vld [vmem:[%s16 + $0x68] sm:$0xff]
        %v2428 = vld [vmem:[%s16 + $0x70] sm:$0xff]
        %v2429 = vld [vmem:[%s16 + $0x78] sm:$0xff]
        %v2430 = vld [vmem:[%s16 + $0x80] sm:$0xff]
        %v2431 = vld [vmem:[%s16 + $0x88] sm:$0xff]
        %v2432 = vld [vmem:[%s16 + $0x90] sm:$0xff]
        %v2433 = vld [vmem:[%s16 + $0x98] sm:$0xff]
        %v2434 = vld [vmem:[%s16 + $0xa0] sm:$0xff]
        %v2435 = vld [vmem:[%s16 + $0xa8] sm:$0xff]
        %v2436 = vld [vmem:[%s16 + $0xb0] sm:$0xff]
        %v2437 = vld [vmem:[%s16 + $0xb8] sm:$0xff]
        %v2438 = vld [vmem:[%s16 + $0xc0] sm:$0xff]
        %v2439 = vld [vmem:[%s16 + $0xc8] sm:$0xff]
        %v2440 = vld [vmem:[%s16 + $0xd0] sm:$0xff]
        %v2441 = vld [vmem:[%s16 + $0xd8] sm:$0xff]
        %v2442 = vld [vmem:[%s16 + $0xe0] sm:$0xff]
        %v2443 = vld [vmem:[%s16 + $0xe8] sm:$0xff]
        %v2444 = vld [vmem:[%s16 + $0xf0] sm:$0xff]
        %v2445 = vld [vmem:[%s16 + $0xf8] sm:$0xff]
        %v2446 = vld [vmem:[%s16 + $0x100] sm:$0xff]
        %v2447 = vld [vmem:[%s16 + $0x108] sm:$0xff]
        %v2448 = vld [vmem:[%s16 + $0x110] sm:$0xff]
        %v2449 = vld [vmem:[%s16 + $0x118] sm:$0xff]
        %v2450 = vld [vmem:[%s16 + $0x120] sm:$0xff]
        %v2451 = vld [vmem:[%s16 + $0x128] sm:$0xff]
        %v2452 = vld [vmem:[%s16 + $0x130] sm:$0xff]
        %v2453 = vld [vmem:[%s16 + $0x138] sm:$0xff]
        %v2454 = vld [vmem:[%s16 + $0x140] sm:$0xff]
        %v2455 = vld [vmem:[%s16 + $0x148] sm:$0xff]
        %v2456 = vld [vmem:[%s16 + $0x150] sm:$0xff]
        %v2457 = vld [vmem:[%s16 + $0x158] sm:$0xff]
        %v2458 = vld [vmem:[%s16 + $0x160] sm:$0xff]
        %v2459 = vld [vmem:[%s16 + $0x168] sm:$0xff]
        %v2460 = vld [vmem:[%s16 + $0x170] sm:$0xff]
        %v2461 = vld [vmem:[%s16 + $0x178] sm:$0xff]
        %v2462 = vld [vmem:[%s16 + $0x180] sm:$0xff]
        %v2463 = vld [vmem:[%s16 + $0x188] sm:$0xff]
        %v2464 = vld [vmem:[%s16 + $0x190] sm:$0xff]
        %v2465 = vld [vmem:[%s16 + $0x198] sm:$0xff]
        %v2466 = vld [vmem:[%s16 + $0x1a0] sm:$0xff]
        %v2467 = vld [vmem:[%s16 + $0x1a8] sm:$0xff]
        %v2468 = vld [vmem:[%s16 + $0x1b0] sm:$0xff]
        %v2469 = vld [vmem:[%s16 + $0x1b8] sm:$0xff]
        %v2470 = vld [vmem:[%s16 + $0x1c0] sm:$0xff]
        %v2471 = vld [vmem:[%s16 + $0x1c8] sm:$0xff]
        %v2472 = vld [vmem:[%s16 + $0x1d0] sm:$0xff]
        %v2473 = vld [vmem:[%s16 + $0x1d8] sm:$0xff]
        %v2474 = vld [vmem:[%s16 + $0x1e0] sm:$0xff]
        %v2475 = vld [vmem:[%s16 + $0x1e8] sm:$0xff]
        %v2476 = vld [vmem:[%s16 + $0x1f0] sm:$0xff]
        %v2477 = vld [vmem:[%s16 + $0x1f8] sm:$0xff]
        %v2478 = vld [vmem:[%s17] sm:$0x1]
        %v2480 = vperm.slane %v2478, 0
        %2482 = vmatpush.msra.mxu0 %v2429
        %2483 = vmatpush.msra.mxu0 %v2428
        %2484 = vmatpush.msra.mxu0 %v2427
        %2485 = vmatpush.msra.mxu0 %v2426
        %2486 = vmatpush.msra.mxu0 %v2425
        %2487 = vmatpush.msra.mxu0 %v2424
        %2488 = vmatpush.msra.mxu0 %v2423
        %2489 = vmatpush.msra.mxu0 %v2422
        %2490 = vmatpush.msra.mxu0 %v2421
        %2491 = vmatpush.msra.mxu0 %v2420
        %2492 = vmatpush.msra.mxu0 %v2419
        %2493 = vmatpush.msra.mxu0 %v2418
        %2494 = vmatpush.msra.mxu0 %v2417
        %2495 = vmatpush.msra.mxu0 %v2416
        %2496 = vmatpush.msra.mxu0 %v2415
        %2497 = vmatpush.msra.mxu0 %v2414
        %2498 = vmatmul.f32.gmra.mxu0 %v2406
        %v2499 = vpop.f32.mrf.mxu0
        %v2500 = vadd.f32 %v2480, %v2499
        %2501 = vmatmul.f32.gmra.mxu0 %v2410
        %v2502 = vpop.f32.mrf.mxu0
        %v2503 = vadd.f32 %v2480, %v2502
        %2504 = vdwg.mxu0
        %2505 = vmatpush.msra.mxu0 %v2445
        %2506 = vmatpush.msra.mxu0 %v2444
        %2507 = vmatpush.msra.mxu0 %v2443
        %2508 = vmatpush.msra.mxu0 %v2442
        %2509 = vmatpush.msra.mxu0 %v2441
        %2510 = vmatpush.msra.mxu0 %v2440
        %2511 = vmatpush.msra.mxu0 %v2439
        %2512 = vmatpush.msra.mxu0 %v2438
        %2513 = vmatpush.msra.mxu0 %v2437
        %2514 = vmatpush.msra.mxu0 %v2436
        %2515 = vmatpush.msra.mxu0 %v2435
        %2516 = vmatpush.msra.mxu0 %v2434
        %2517 = vmatpush.msra.mxu0 %v2433
        %2518 = vmatpush.msra.mxu0 %v2432
        %2519 = vmatpush.msra.mxu0 %v2431
        %2520 = vmatpush.msra.mxu0 %v2430
        %2521 = vmatmul.f32.gmra.mxu0 %v2407
        %v2522 = vpop.f32.mrf.mxu0
        %v2523 = vadd.f32 %v2500, %v2522
        %2524 = vmatmul.f32.gmra.mxu0 %v2411
        %v2525 = vpop.f32.mrf.mxu0
        %v2526 = vadd.f32 %v2503, %v2525
        %2527 = vdwg.mxu0
        %2528 = vmatpush.msra.mxu0 %v2461
        %2529 = vmatpush.msra.mxu0 %v2460
        %2530 = vmatpush.msra.mxu0 %v2459
        %2531 = vmatpush.msra.mxu0 %v2458
        %2532 = vmatpush.msra.mxu0 %v2457
        %2533 = vmatpush.msra.mxu0 %v2456
        %2534 = vmatpush.msra.mxu0 %v2455
        %2535 = vmatpush.msra.mxu0 %v2454
        %2536 = vmatpush.msra.mxu0 %v2453
        %2537 = vmatpush.msra.mxu0 %v2452
        %2538 = vmatpush.msra.mxu0 %v2451
        %2539 = vmatpush.msra.mxu0 %v2450
        %2540 = vmatpush.msra.mxu0 %v2449
        %2541 = vmatpush.msra.mxu0 %v2448
        %2542 = vmatpush.msra.mxu0 %v2447
        %2543 = vmatpush.msra.mxu0 %v2446
        %2544 = vmatmul.f32.gmra.mxu0 %v2408
        %v2545 = vpop.f32.mrf.mxu0
        %v2546 = vadd.f32 %v2523, %v2545
        %2547 = vmatmul.f32.gmra.mxu0 %v2412
        %v2548 = vpop.f32.mrf.mxu0
        %v2549 = vadd.f32 %v2526, %v2548
        %2550 = vdwg.mxu0
        %2551 = vmatpush.msra.mxu0 %v2477
        %2552 = vmatpush.msra.mxu0 %v2476
        %2553 = vmatpush.msra.mxu0 %v2475
        %2554 = vmatpush.msra.mxu0 %v2474
        %2555 = vmatpush.msra.mxu0 %v2473
        %2556 = vmatpush.msra.mxu0 %v2472
        %2557 = vmatpush.msra.mxu0 %v2471
        %2558 = vmatpush.msra.mxu0 %v2470
        %2559 = vmatpush.msra.mxu0 %v2469
        %2560 = vmatpush.msra.mxu0 %v2468
        %2561 = vmatpush.msra.mxu0 %v2467
        %2562 = vmatpush.msra.mxu0 %v2466
        %2563 = vmatpush.msra.mxu0 %v2465
        %2564 = vmatpush.msra.mxu0 %v2464
        %2565 = vmatpush.msra.mxu0 %v2463
        %2566 = vmatpush.msra.mxu0 %v2462
        %2567 = vmatmul.f32.gmra.mxu0 %v2409
        %v2568 = vpop.f32.mrf.mxu0
        %v2569 = vadd.f32 %v2546, %v2568
        %2570 = vmatmul.f32.gmra.mxu0 %v2413
        %v2571 = vpop.f32.mrf.mxu0
        %v2572 = vadd.f32 %v2549, %v2571
        %2573 = vdwg.mxu0
        %vm2574 = vcmp.ge.f32.partialorder %v2569, 0.0
        %vm2575 = vcmp.ge.f32.partialorder %v2572, 0.0
        %v2576 = vmul.f32 %v2569, 0.2
        %v2577 = vmul.f32 %v2572, 0.2
        %v2578 = vsel %vm2574, %v2569, %v2576
        %v2579 = vsel %vm2575, %v2572, %v2577
        %2580 = vst.msk [vmem:[#allocation2] sm:$0xff] %vm850, 0.0
        %2581 = vst.msk [vmem:[#allocation2 + $0x8] sm:$0xff] %vm850, 0.0
        %2582 = vst.msk [vmem:[#allocation2 + $0x10] sm:$0x7] %vm853, 0.0
        %2583 = vst.msk [vmem:[#allocation2] sm:$0xff] %vm1052, %v2578
        %2584 = vst.msk [vmem:[#allocation2 + $0x8] sm:$0xff] %vm1052, %v2579
        %v2585 = vld [vmem:[#allocation2] sm:$0xff]
        %v2586 = vld [vmem:[#allocation2 + $0x8] sm:$0xff]
        %2587 = vst.msk [vmem:[#allocation3] sm:$0xff] %vm1052, %v2585
        %2588 = vst.msk [vmem:[#allocation3 + $0x40] sm:$0xff] %vm1052, %v2586
        %v2589 = vld [vmem:[#allocation2 + $0x1] sm:$0xff]
        %v2590 = vld [vmem:[#allocation2 + $0x9] sm:$0xff]
        %2591 = vst.msk [vmem:[#allocation3 + $0x8] sm:$0xff] %vm1052, %v2589
        %2592 = vst.msk [vmem:[#allocation3 + $0x48] sm:$0xff] %vm1052, %v2590
        %v2593 = vld [vmem:[#allocation2 + $0x2] sm:$0xff]
        %v2594 = vld [vmem:[#allocation2 + $0xa] sm:$0xff]
        %2595 = vst.msk [vmem:[#allocation3 + $0x10] sm:$0xff] %vm1052, %v2593
        %2596 = vst.msk [vmem:[#allocation3 + $0x50] sm:$0xff] %vm1052, %v2594
        %v2597 = vld [vmem:[#allocation2 + $0x3] sm:$0xff]
        %v2598 = vld [vmem:[#allocation2 + $0xb] sm:$0xff]
        %2599 = vst.msk [vmem:[#allocation3 + $0x18] sm:$0xff] %vm1052, %v2597
        %2600 = vst.msk [vmem:[#allocation3 + $0x58] sm:$0xff] %vm1052, %v2598
        %v2601 = vld [vmem:[#allocation3] sm:$0xff]
        %v2602 = vld [vmem:[#allocation3 + $0x8] sm:$0xff]
        %v2603 = vld [vmem:[#allocation3 + $0x10] sm:$0xff]
        %v2604 = vld [vmem:[#allocation3 + $0x18] sm:$0xff]
        %v2605 = vld [vmem:[#allocation3 + $0x40] sm:$0xff]
        %v2606 = vld [vmem:[#allocation3 + $0x48] sm:$0xff]
        %v2607 = vld [vmem:[#allocation3 + $0x50] sm:$0xff]
        %v2608 = vld [vmem:[#allocation3 + $0x58] sm:$0xff]
        %v2609 = vld [vmem:[%s18] sm:$0xff]
        %v2610 = vld [vmem:[%s18 + $0x8] sm:$0xff]
        %v2611 = vld [vmem:[%s18 + $0x10] sm:$0xff]
        %v2612 = vld [vmem:[%s18 + $0x18] sm:$0xff]
        %v2613 = vld [vmem:[%s18 + $0x20] sm:$0xff]
        %v2614 = vld [vmem:[%s18 + $0x28] sm:$0xff]
        %v2615 = vld [vmem:[%s18 + $0x30] sm:$0xff]
        %v2616 = vld [vmem:[%s18 + $0x38] sm:$0xff]
        %v2617 = vld [vmem:[%s18 + $0x40] sm:$0xff]
        %v2618 = vld [vmem:[%s18 + $0x48] sm:$0xff]
        %v2619 = vld [vmem:[%s18 + $0x50] sm:$0xff]
        %v2620 = vld [vmem:[%s18 + $0x58] sm:$0xff]
        %v2621 = vld [vmem:[%s18 + $0x60] sm:$0xff]
        %v2622 = vld [vmem:[%s18 + $0x68] sm:$0xff]
        %v2623 = vld [vmem:[%s18 + $0x70] sm:$0xff]
        %v2624 = vld [vmem:[%s18 + $0x78] sm:$0xff]
        %v2625 = vld [vmem:[%s18 + $0x80] sm:$0xff]
        %v2626 = vld [vmem:[%s18 + $0x88] sm:$0xff]
        %v2627 = vld [vmem:[%s18 + $0x90] sm:$0xff]
        %v2628 = vld [vmem:[%s18 + $0x98] sm:$0xff]
        %v2629 = vld [vmem:[%s18 + $0xa0] sm:$0xff]
        %v2630 = vld [vmem:[%s18 + $0xa8] sm:$0xff]
        %v2631 = vld [vmem:[%s18 + $0xb0] sm:$0xff]
        %v2632 = vld [vmem:[%s18 + $0xb8] sm:$0xff]
        %v2633 = vld [vmem:[%s18 + $0xc0] sm:$0xff]
        %v2634 = vld [vmem:[%s18 + $0xc8] sm:$0xff]
        %v2635 = vld [vmem:[%s18 + $0xd0] sm:$0xff]
        %v2636 = vld [vmem:[%s18 + $0xd8] sm:$0xff]
        %v2637 = vld [vmem:[%s18 + $0xe0] sm:$0xff]
        %v2638 = vld [vmem:[%s18 + $0xe8] sm:$0xff]
        %v2639 = vld [vmem:[%s18 + $0xf0] sm:$0xff]
        %v2640 = vld [vmem:[%s18 + $0xf8] sm:$0xff]
        %v2641 = vld [vmem:[%s18 + $0x100] sm:$0xff]
        %v2642 = vld [vmem:[%s18 + $0x108] sm:$0xff]
        %v2643 = vld [vmem:[%s18 + $0x110] sm:$0xff]
        %v2644 = vld [vmem:[%s18 + $0x118] sm:$0xff]
        %v2645 = vld [vmem:[%s18 + $0x120] sm:$0xff]
        %v2646 = vld [vmem:[%s18 + $0x128] sm:$0xff]
        %v2647 = vld [vmem:[%s18 + $0x130] sm:$0xff]
        %v2648 = vld [vmem:[%s18 + $0x138] sm:$0xff]
        %v2649 = vld [vmem:[%s18 + $0x140] sm:$0xff]
        %v2650 = vld [vmem:[%s18 + $0x148] sm:$0xff]
        %v2651 = vld [vmem:[%s18 + $0x150] sm:$0xff]
        %v2652 = vld [vmem:[%s18 + $0x158] sm:$0xff]
        %v2653 = vld [vmem:[%s18 + $0x160] sm:$0xff]
        %v2654 = vld [vmem:[%s18 + $0x168] sm:$0xff]
        %v2655 = vld [vmem:[%s18 + $0x170] sm:$0xff]
        %v2656 = vld [vmem:[%s18 + $0x178] sm:$0xff]
        %v2657 = vld [vmem:[%s18 + $0x180] sm:$0xff]
        %v2658 = vld [vmem:[%s18 + $0x188] sm:$0xff]
        %v2659 = vld [vmem:[%s18 + $0x190] sm:$0xff]
        %v2660 = vld [vmem:[%s18 + $0x198] sm:$0xff]
        %v2661 = vld [vmem:[%s18 + $0x1a0] sm:$0xff]
        %v2662 = vld [vmem:[%s18 + $0x1a8] sm:$0xff]
        %v2663 = vld [vmem:[%s18 + $0x1b0] sm:$0xff]
        %v2664 = vld [vmem:[%s18 + $0x1b8] sm:$0xff]
        %v2665 = vld [vmem:[%s18 + $0x1c0] sm:$0xff]
        %v2666 = vld [vmem:[%s18 + $0x1c8] sm:$0xff]
        %v2667 = vld [vmem:[%s18 + $0x1d0] sm:$0xff]
        %v2668 = vld [vmem:[%s18 + $0x1d8] sm:$0xff]
        %v2669 = vld [vmem:[%s18 + $0x1e0] sm:$0xff]
        %v2670 = vld [vmem:[%s18 + $0x1e8] sm:$0xff]
        %v2671 = vld [vmem:[%s18 + $0x1f0] sm:$0xff]
        %v2672 = vld [vmem:[%s18 + $0x1f8] sm:$0xff]
        %v2673 = vld [vmem:[%s19] sm:$0x1]
        %v2675 = vperm.slane %v2673, 0
        %2677 = vmatpush.msra.mxu0 %v2624
        %2678 = vmatpush.msra.mxu0 %v2623
        %2679 = vmatpush.msra.mxu0 %v2622
        %2680 = vmatpush.msra.mxu0 %v2621
        %2681 = vmatpush.msra.mxu0 %v2620
        %2682 = vmatpush.msra.mxu0 %v2619
        %2683 = vmatpush.msra.mxu0 %v2618
        %2684 = vmatpush.msra.mxu0 %v2617
        %2685 = vmatpush.msra.mxu0 %v2616
        %2686 = vmatpush.msra.mxu0 %v2615
        %2687 = vmatpush.msra.mxu0 %v2614
        %2688 = vmatpush.msra.mxu0 %v2613
        %2689 = vmatpush.msra.mxu0 %v2612
        %2690 = vmatpush.msra.mxu0 %v2611
        %2691 = vmatpush.msra.mxu0 %v2610
        %2692 = vmatpush.msra.mxu0 %v2609
        %2693 = vmatmul.f32.gmra.mxu0 %v2601
        %v2694 = vpop.f32.mrf.mxu0
        %v2695 = vadd.f32 %v2675, %v2694
        %2696 = vmatmul.f32.gmra.mxu0 %v2605
        %v2697 = vpop.f32.mrf.mxu0
        %v2698 = vadd.f32 %v2675, %v2697
        %2699 = vdwg.mxu0
        %2700 = vmatpush.msra.mxu0 %v2640
        %2701 = vmatpush.msra.mxu0 %v2639
        %2702 = vmatpush.msra.mxu0 %v2638
        %2703 = vmatpush.msra.mxu0 %v2637
        %2704 = vmatpush.msra.mxu0 %v2636
        %2705 = vmatpush.msra.mxu0 %v2635
        %2706 = vmatpush.msra.mxu0 %v2634
        %2707 = vmatpush.msra.mxu0 %v2633
        %2708 = vmatpush.msra.mxu0 %v2632
        %2709 = vmatpush.msra.mxu0 %v2631
        %2710 = vmatpush.msra.mxu0 %v2630
        %2711 = vmatpush.msra.mxu0 %v2629
        %2712 = vmatpush.msra.mxu0 %v2628
        %2713 = vmatpush.msra.mxu0 %v2627
        %2714 = vmatpush.msra.mxu0 %v2626
        %2715 = vmatpush.msra.mxu0 %v2625
        %2716 = vmatmul.f32.gmra.mxu0 %v2602
        %v2717 = vpop.f32.mrf.mxu0
        %v2718 = vadd.f32 %v2695, %v2717
        %2719 = vmatmul.f32.gmra.mxu0 %v2606
        %v2720 = vpop.f32.mrf.mxu0
        %v2721 = vadd.f32 %v2698, %v2720
        %2722 = vdwg.mxu0
        %2723 = vmatpush.msra.mxu0 %v2656
        %2724 = vmatpush.msra.mxu0 %v2655
        %2725 = vmatpush.msra.mxu0 %v2654
        %2726 = vmatpush.msra.mxu0 %v2653
        %2727 = vmatpush.msra.mxu0 %v2652
        %2728 = vmatpush.msra.mxu0 %v2651
        %2729 = vmatpush.msra.mxu0 %v2650
        %2730 = vmatpush.msra.mxu0 %v2649
        %2731 = vmatpush.msra.mxu0 %v2648
        %2732 = vmatpush.msra.mxu0 %v2647
        %2733 = vmatpush.msra.mxu0 %v2646
        %2734 = vmatpush.msra.mxu0 %v2645
        %2735 = vmatpush.msra.mxu0 %v2644
        %2736 = vmatpush.msra.mxu0 %v2643
        %2737 = vmatpush.msra.mxu0 %v2642
        %2738 = vmatpush.msra.mxu0 %v2641
        %2739 = vmatmul.f32.gmra.mxu0 %v2603
        %v2740 = vpop.f32.mrf.mxu0
        %v2741 = vadd.f32 %v2718, %v2740
        %2742 = vmatmul.f32.gmra.mxu0 %v2607
        %v2743 = vpop.f32.mrf.mxu0
        %v2744 = vadd.f32 %v2721, %v2743
        %2745 = vdwg.mxu0
        %2746 = vmatpush.msra.mxu0 %v2672
        %2747 = vmatpush.msra.mxu0 %v2671
        %2748 = vmatpush.msra.mxu0 %v2670
        %2749 = vmatpush.msra.mxu0 %v2669
        %2750 = vmatpush.msra.mxu0 %v2668
        %2751 = vmatpush.msra.mxu0 %v2667
        %2752 = vmatpush.msra.mxu0 %v2666
        %2753 = vmatpush.msra.mxu0 %v2665
        %2754 = vmatpush.msra.mxu0 %v2664
        %2755 = vmatpush.msra.mxu0 %v2663
        %2756 = vmatpush.msra.mxu0 %v2662
        %2757 = vmatpush.msra.mxu0 %v2661
        %2758 = vmatpush.msra.mxu0 %v2660
        %2759 = vmatpush.msra.mxu0 %v2659
        %2760 = vmatpush.msra.mxu0 %v2658
        %2761 = vmatpush.msra.mxu0 %v2657
        %2762 = vmatmul.f32.gmra.mxu0 %v2604
        %v2763 = vpop.f32.mrf.mxu0
        %v2764 = vadd.f32 %v2741, %v2763
        %2765 = vmatmul.f32.gmra.mxu0 %v2608
        %v2766 = vpop.f32.mrf.mxu0
        %v2767 = vadd.f32 %v2744, %v2766
        %2768 = vdwg.mxu0
        %vm2769 = vcmp.ge.f32.partialorder %v2764, 0.0
        %vm2770 = vcmp.ge.f32.partialorder %v2767, 0.0
        %v2771 = vmul.f32 %v2764, 0.2
        %v2772 = vmul.f32 %v2767, 0.2
        %v2773 = vsel %vm2769, %v2764, %v2771
        %v2774 = vsel %vm2770, %v2767, %v2772
        %v2775 = vadd.f32 %v2773, %v1243
        %v2776 = vadd.f32 %v2774, %v1244
        %2777 = vst.msk [vmem:[#allocation2] sm:$0xff] %vm850, 0.0
        %2778 = vst.msk [vmem:[#allocation2 + $0x8] sm:$0xff] %vm850, 0.0
        %2779 = vst.msk [vmem:[#allocation2 + $0x10] sm:$0x7] %vm853, 0.0
        %2780 = vst.msk [vmem:[#allocation2] sm:$0xff] %vm1052, %v2775
        %2781 = vst.msk [vmem:[#allocation2 + $0x8] sm:$0xff] %vm1052, %v2776
        %v2782 = vld [vmem:[#allocation2] sm:$0xff]
        %v2783 = vld [vmem:[#allocation2 + $0x8] sm:$0xff]
        %2784 = vst.msk [vmem:[#allocation3] sm:$0xff] %vm1052, %v2782
        %2785 = vst.msk [vmem:[#allocation3 + $0x40] sm:$0xff] %vm1052, %v2783
        %v2786 = vld [vmem:[#allocation2 + $0x1] sm:$0xff]
        %v2787 = vld [vmem:[#allocation2 + $0x9] sm:$0xff]
        %2788 = vst.msk [vmem:[#allocation3 + $0x8] sm:$0xff] %vm1052, %v2786
        %2789 = vst.msk [vmem:[#allocation3 + $0x48] sm:$0xff] %vm1052, %v2787
        %v2790 = vld [vmem:[#allocation2 + $0x2] sm:$0xff]
        %v2791 = vld [vmem:[#allocation2 + $0xa] sm:$0xff]
        %2792 = vst.msk [vmem:[#allocation3 + $0x10] sm:$0xff] %vm1052, %v2790
        %2793 = vst.msk [vmem:[#allocation3 + $0x50] sm:$0xff] %vm1052, %v2791
        %v2794 = vld [vmem:[#allocation2 + $0x3] sm:$0xff]
        %v2795 = vld [vmem:[#allocation2 + $0xb] sm:$0xff]
        %2796 = vst.msk [vmem:[#allocation3 + $0x18] sm:$0xff] %vm1052, %v2794
        %2797 = vst.msk [vmem:[#allocation3 + $0x58] sm:$0xff] %vm1052, %v2795
        %v2798 = vld [vmem:[#allocation3] sm:$0xff]
        %v2799 = vld [vmem:[#allocation3 + $0x8] sm:$0xff]
        %v2800 = vld [vmem:[#allocation3 + $0x10] sm:$0xff]
        %v2801 = vld [vmem:[#allocation3 + $0x18] sm:$0xff]
        %v2802 = vld [vmem:[#allocation3 + $0x40] sm:$0xff]
        %v2803 = vld [vmem:[#allocation3 + $0x48] sm:$0xff]
        %v2804 = vld [vmem:[#allocation3 + $0x50] sm:$0xff]
        %v2805 = vld [vmem:[#allocation3 + $0x58] sm:$0xff]
        %v2806 = vld [vmem:[%s20] sm:$0xff]
        %v2807 = vld [vmem:[%s20 + $0x8] sm:$0xff]
        %v2808 = vld [vmem:[%s20 + $0x10] sm:$0xff]
        %v2809 = vld [vmem:[%s20 + $0x18] sm:$0xff]
        %v2810 = vld [vmem:[%s20 + $0x20] sm:$0xff]
        %v2811 = vld [vmem:[%s20 + $0x28] sm:$0xff]
        %v2812 = vld [vmem:[%s20 + $0x30] sm:$0xff]
        %v2813 = vld [vmem:[%s20 + $0x38] sm:$0xff]
        %v2814 = vld [vmem:[%s20 + $0x40] sm:$0xff]
        %v2815 = vld [vmem:[%s20 + $0x48] sm:$0xff]
        %v2816 = vld [vmem:[%s20 + $0x50] sm:$0xff]
        %v2817 = vld [vmem:[%s20 + $0x58] sm:$0xff]
        %v2818 = vld [vmem:[%s20 + $0x60] sm:$0xff]
        %v2819 = vld [vmem:[%s20 + $0x68] sm:$0xff]
        %v2820 = vld [vmem:[%s20 + $0x70] sm:$0xff]
        %v2821 = vld [vmem:[%s20 + $0x78] sm:$0xff]
        %v2822 = vld [vmem:[%s20 + $0x80] sm:$0xff]
        %v2823 = vld [vmem:[%s20 + $0x88] sm:$0xff]
        %v2824 = vld [vmem:[%s20 + $0x90] sm:$0xff]
        %v2825 = vld [vmem:[%s20 + $0x98] sm:$0xff]
        %v2826 = vld [vmem:[%s20 + $0xa0] sm:$0xff]
        %v2827 = vld [vmem:[%s20 + $0xa8] sm:$0xff]
        %v2828 = vld [vmem:[%s20 + $0xb0] sm:$0xff]
        %v2829 = vld [vmem:[%s20 + $0xb8] sm:$0xff]
        %v2830 = vld [vmem:[%s20 + $0xc0] sm:$0xff]
        %v2831 = vld [vmem:[%s20 + $0xc8] sm:$0xff]
        %v2832 = vld [vmem:[%s20 + $0xd0] sm:$0xff]
        %v2833 = vld [vmem:[%s20 + $0xd8] sm:$0xff]
        %v2834 = vld [vmem:[%s20 + $0xe0] sm:$0xff]
        %v2835 = vld [vmem:[%s20 + $0xe8] sm:$0xff]
        %v2836 = vld [vmem:[%s20 + $0xf0] sm:$0xff]
        %v2837 = vld [vmem:[%s20 + $0xf8] sm:$0xff]
        %v2838 = vld [vmem:[%s20 + $0x100] sm:$0xff]
        %v2839 = vld [vmem:[%s20 + $0x108] sm:$0xff]
        %v2840 = vld [vmem:[%s20 + $0x110] sm:$0xff]
        %v2841 = vld [vmem:[%s20 + $0x118] sm:$0xff]
        %v2842 = vld [vmem:[%s20 + $0x120] sm:$0xff]
        %v2843 = vld [vmem:[%s20 + $0x128] sm:$0xff]
        %v2844 = vld [vmem:[%s20 + $0x130] sm:$0xff]
        %v2845 = vld [vmem:[%s20 + $0x138] sm:$0xff]
        %v2846 = vld [vmem:[%s20 + $0x140] sm:$0xff]
        %v2847 = vld [vmem:[%s20 + $0x148] sm:$0xff]
        %v2848 = vld [vmem:[%s20 + $0x150] sm:$0xff]
        %v2849 = vld [vmem:[%s20 + $0x158] sm:$0xff]
        %v2850 = vld [vmem:[%s20 + $0x160] sm:$0xff]
        %v2851 = vld [vmem:[%s20 + $0x168] sm:$0xff]
        %v2852 = vld [vmem:[%s20 + $0x170] sm:$0xff]
        %v2853 = vld [vmem:[%s20 + $0x178] sm:$0xff]
        %v2854 = vld [vmem:[%s20 + $0x180] sm:$0xff]
        %v2855 = vld [vmem:[%s20 + $0x188] sm:$0xff]
        %v2856 = vld [vmem:[%s20 + $0x190] sm:$0xff]
        %v2857 = vld [vmem:[%s20 + $0x198] sm:$0xff]
        %v2858 = vld [vmem:[%s20 + $0x1a0] sm:$0xff]
        %v2859 = vld [vmem:[%s20 + $0x1a8] sm:$0xff]
        %v2860 = vld [vmem:[%s20 + $0x1b0] sm:$0xff]
        %v2861 = vld [vmem:[%s20 + $0x1b8] sm:$0xff]
        %v2862 = vld [vmem:[%s20 + $0x1c0] sm:$0xff]
        %v2863 = vld [vmem:[%s20 + $0x1c8] sm:$0xff]
        %v2864 = vld [vmem:[%s20 + $0x1d0] sm:$0xff]
        %v2865 = vld [vmem:[%s20 + $0x1d8] sm:$0xff]
        %v2866 = vld [vmem:[%s20 + $0x1e0] sm:$0xff]
        %v2867 = vld [vmem:[%s20 + $0x1e8] sm:$0xff]
        %v2868 = vld [vmem:[%s20 + $0x1f0] sm:$0xff]
        %v2869 = vld [vmem:[%s20 + $0x1f8] sm:$0xff]
        %v2870 = vld [vmem:[%s21] sm:$0x1]
        %v2872 = vperm.slane %v2870, 0
        %2874 = vmatpush.msra.mxu0 %v2821
        %2875 = vmatpush.msra.mxu0 %v2820
        %2876 = vmatpush.msra.mxu0 %v2819
        %2877 = vmatpush.msra.mxu0 %v2818
        %2878 = vmatpush.msra.mxu0 %v2817
        %2879 = vmatpush.msra.mxu0 %v2816
        %2880 = vmatpush.msra.mxu0 %v2815
        %2881 = vmatpush.msra.mxu0 %v2814
        %2882 = vmatpush.msra.mxu0 %v2813
        %2883 = vmatpush.msra.mxu0 %v2812
        %2884 = vmatpush.msra.mxu0 %v2811
        %2885 = vmatpush.msra.mxu0 %v2810
        %2886 = vmatpush.msra.mxu0 %v2809
        %2887 = vmatpush.msra.mxu0 %v2808
        %2888 = vmatpush.msra.mxu0 %v2807
        %2889 = vmatpush.msra.mxu0 %v2806
        %2890 = vmatmul.f32.gmra.mxu0 %v2798
        %v2891 = vpop.f32.mrf.mxu0
        %v2892 = vadd.f32 %v2872, %v2891
        %2893 = vmatmul.f32.gmra.mxu0 %v2802
        %v2894 = vpop.f32.mrf.mxu0
        %v2895 = vadd.f32 %v2872, %v2894
        %2896 = vdwg.mxu0
        %2897 = vmatpush.msra.mxu0 %v2837
        %2898 = vmatpush.msra.mxu0 %v2836
        %2899 = vmatpush.msra.mxu0 %v2835
        %2900 = vmatpush.msra.mxu0 %v2834
        %2901 = vmatpush.msra.mxu0 %v2833
        %2902 = vmatpush.msra.mxu0 %v2832
        %2903 = vmatpush.msra.mxu0 %v2831
        %2904 = vmatpush.msra.mxu0 %v2830
        %2905 = vmatpush.msra.mxu0 %v2829
        %2906 = vmatpush.msra.mxu0 %v2828
        %2907 = vmatpush.msra.mxu0 %v2827
        %2908 = vmatpush.msra.mxu0 %v2826
        %2909 = vmatpush.msra.mxu0 %v2825
        %2910 = vmatpush.msra.mxu0 %v2824
        %2911 = vmatpush.msra.mxu0 %v2823
        %2912 = vmatpush.msra.mxu0 %v2822
        %2913 = vmatmul.f32.gmra.mxu0 %v2799
        %v2914 = vpop.f32.mrf.mxu0
        %v2915 = vadd.f32 %v2892, %v2914
        %2916 = vmatmul.f32.gmra.mxu0 %v2803
        %v2917 = vpop.f32.mrf.mxu0
        %v2918 = vadd.f32 %v2895, %v2917
        %2919 = vdwg.mxu0
        %2920 = vmatpush.msra.mxu0 %v2853
        %2921 = vmatpush.msra.mxu0 %v2852
        %2922 = vmatpush.msra.mxu0 %v2851
        %2923 = vmatpush.msra.mxu0 %v2850
        %2924 = vmatpush.msra.mxu0 %v2849
        %2925 = vmatpush.msra.mxu0 %v2848
        %2926 = vmatpush.msra.mxu0 %v2847
        %2927 = vmatpush.msra.mxu0 %v2846
        %2928 = vmatpush.msra.mxu0 %v2845
        %2929 = vmatpush.msra.mxu0 %v2844
        %2930 = vmatpush.msra.mxu0 %v2843
        %2931 = vmatpush.msra.mxu0 %v2842
        %2932 = vmatpush.msra.mxu0 %v2841
        %2933 = vmatpush.msra.mxu0 %v2840
        %2934 = vmatpush.msra.mxu0 %v2839
        %2935 = vmatpush.msra.mxu0 %v2838
        %2936 = vmatmul.f32.gmra.mxu0 %v2800
        %v2937 = vpop.f32.mrf.mxu0
        %v2938 = vadd.f32 %v2915, %v2937
        %2939 = vmatmul.f32.gmra.mxu0 %v2804
        %v2940 = vpop.f32.mrf.mxu0
        %v2941 = vadd.f32 %v2918, %v2940
        %2942 = vdwg.mxu0
        %2943 = vmatpush.msra.mxu0 %v2869
        %2944 = vmatpush.msra.mxu0 %v2868
        %2945 = vmatpush.msra.mxu0 %v2867
        %2946 = vmatpush.msra.mxu0 %v2866
        %2947 = vmatpush.msra.mxu0 %v2865
        %2948 = vmatpush.msra.mxu0 %v2864
        %2949 = vmatpush.msra.mxu0 %v2863
        %2950 = vmatpush.msra.mxu0 %v2862
        %2951 = vmatpush.msra.mxu0 %v2861
        %2952 = vmatpush.msra.mxu0 %v2860
        %2953 = vmatpush.msra.mxu0 %v2859
        %2954 = vmatpush.msra.mxu0 %v2858
        %2955 = vmatpush.msra.mxu0 %v2857
        %2956 = vmatpush.msra.mxu0 %v2856
        %2957 = vmatpush.msra.mxu0 %v2855
        %2958 = vmatpush.msra.mxu0 %v2854
        %2959 = vmatmul.f32.gmra.mxu0 %v2801
        %v2960 = vpop.f32.mrf.mxu0
        %v2961 = vadd.f32 %v2938, %v2960
        %2962 = vmatmul.f32.gmra.mxu0 %v2805
        %v2963 = vpop.f32.mrf.mxu0
        %v2964 = vadd.f32 %v2941, %v2963
        %2965 = vdwg.mxu0
        %v2966 = vmul.f32 %v2961, %v2961
        %v2967 = vmul.f32 %v2964, %v2964
        %v2968 = vmul.f32 %v848, %v848
        %v2969 = vmul.f32 %v849, %v849
        %2972 = vrot.lane.b32.xlu0 %v2968, 127
        %v2973 = vpop.permute.xlu0 %2972
        %2974 = vrot.lane.b32.xlu0 %v2969, 127
        %v2975 = vpop.permute.xlu0 %2974
        %v2978 = vadd.f32 %v2966, %v2973
        %v2979 = vadd.f32 %v2967, %v2975
        %v2980 = vrsqrt.pop %v2978
        %v2981 = vmul.f32 %v2980, %v2978
        %v2982 = vmul.f32 %v2981, %v2980
        %v2983 = vmul.f32 0.5, %v2982
        %v2984 = vsub.f32 1.5, %v2983
        %v2985 = vmul.f32 %v2980, %v2984
        %v2986 = vmul.f32 %v2978, %v2985
        %vm2987 = vcmp.eq.f32.partialorder %v2978, inf
        %v2988 = vsel %vm2987, %v2978, %v2986
        %vm2989 = vcmp.eq.f32.partialorder %v2978, 0.0
        %v2990 = vand.u32 %v2978, 2147483648
        %v2991 = vsel %vm2989, %v2990, %v2988
        %v2992 = vrsqrt.pop %v2979
        %v2993 = vmul.f32 %v2992, %v2979
        %v2994 = vmul.f32 %v2993, %v2992
        %v2995 = vmul.f32 0.5, %v2994
        %v2996 = vsub.f32 1.5, %v2995
        %v2997 = vmul.f32 %v2992, %v2996
        %v2998 = vmul.f32 %v2979, %v2997
        %vm2999 = vcmp.eq.f32.partialorder %v2979, inf
        %v3000 = vsel %vm2999, %v2979, %v2998
        %vm3001 = vcmp.eq.f32.partialorder %v2979, 0.0
        %v3002 = vand.u32 %v2979, 2147483648
        %v3003 = vsel %vm3001, %v3002, %v3000
        %vm3004 = vcmp.gt.f32.partialorder %v2991, 0.0
        %vm3005 = vcmp.gt.f32.partialorder %v3003, 0.0
        %v3006 = vtanh.pop %v2991
        %v3007 = vtanh.pop %v3003
        %v3008 = vrcp.pop %v2991
        %v3009 = vmul.f32 %v2991, %v3008
        %v3010 = vsub.f32 1.0, %v3009
        %v3011 = vmul.f32 %v3008, %v3010
        %v3012 = vadd.f32 %v3008, %v3011
        %vm3013 = vweird.f32 %v2991
        %vm3014 = vweird.f32 %v3008
        %vm3015 = vmor %vm3013, %vm3014
        %v3016 = vsel %vm3015, %v3008, %v3012
        %v3017 = vand.u32 2147483647, %v2991
        %vm3018 = vcmp.eq.f32.partialorder %v3017, 8.507059e+37
        %v3019 = vand.u32 %v2991, 2147483648
        %v3020 = vor.u32 1.1754944e-38, %v3019
        %v3021 = vsel %vm3018, %v3020, %v3016
        %v3022 = vmul.f32 %v3006, %v3021
        %v3023 = vrcp.pop %v3003
        %v3024 = vmul.f32 %v3003, %v3023
        %v3025 = vsub.f32 1.0, %v3024
        %v3026 = vmul.f32 %v3023, %v3025
        %v3027 = vadd.f32 %v3023, %v3026
        %vm3028 = vweird.f32 %v3003
        %vm3029 = vweird.f32 %v3023
        %vm3030 = vmor %vm3028, %vm3029
        %v3031 = vsel %vm3030, %v3023, %v3027
        %v3032 = vand.u32 2147483647, %v3003
        %vm3033 = vcmp.eq.f32.partialorder %v3032, 8.507059e+37
        %v3034 = vand.u32 %v3003, 2147483648
        %v3035 = vor.u32 1.1754944e-38, %v3034
        %v3036 = vsel %vm3033, %v3035, %v3031
        %v3037 = vmul.f32 %v3007, %v3036
        %v3038 = vsel %vm3004, %v3022, 1.0
        %v3039 = vsel %vm3005, %v3037, 1.0
        %3042 = vrot.lane.b32.xlu0 %v848, 126
        %v3043 = vpop.permute.xlu0 %3042
        %3044 = vrot.lane.b32.xlu0 %v849, 126
        %v3045 = vpop.permute.xlu0 %3044
        %v3048 = vmul.f32 %v2961, %v3043
        %v3049 = vmul.f32 %v2964, %v3045
        %v3050 = vmul.f32 %v848, %v3043
        %v3051 = vmul.f32 %v849, %v3045
        %3054 = vrot.lane.b32.xlu0 %v3050, 127
        %v3055 = vpop.permute.xlu0 %3054
        %3056 = vrot.lane.b32.xlu0 %v3051, 127
        %v3057 = vpop.permute.xlu0 %3056
        %v3060 = vsub.f32 %v3048, %v3055
        %v3061 = vsub.f32 %v3049, %v3057
        %v3062 = vmul.f32 %v3038, %v3060
        %v3063 = vmul.f32 %v3039, %v3061
        %vm3064 = vcmask 7168
        %3065 = vst.msk [vmem:[%s826] sm:$0xff] %vm3064, %v3062
        %vm3066 = vcmask 4096
        %3067 = vst.msk [vmem:[%s826 + $0x8] sm:$0x1f] %vm3066, %v3063
        %3068 = vrot.lane.b32.xlu0 %v848, 127
        %v3069 = vpop.permute.xlu0 %3068
        %3070 = vrot.lane.b32.xlu0 %v849, 127
        %v3071 = vpop.permute.xlu0 %3070
        %v3074 = vmul.f32 %v848, %v3069
        %v3075 = vmul.f32 %v849, %v3071
        %3076 = vrot.lane.b32.xlu0 %v848, 125
        %v3077 = vpop.permute.xlu0 %3076
        %3078 = vrot.lane.b32.xlu0 %v849, 125
        %v3079 = vpop.permute.xlu0 %3078
        %v3082 = vmul.f32 %v2961, %v3077
        %v3083 = vmul.f32 %v2964, %v3079
        %3086 = vrot.lane.b32.xlu0 %v3082, 1
        %v3087 = vpop.permute.xlu0 %3086
        %3088 = vrot.lane.b32.xlu0 %v3083, 1
        %v3089 = vpop.permute.xlu0 %3088
        %v3092 = vadd.f32 %v3074, %v3087
        %v3093 = vadd.f32 %v3075, %v3089
        %3096 = vrot.lane.b32.xlu0 %v3092, 127
        %v3097 = vpop.permute.xlu0 %3096
        %3098 = vrot.lane.b32.xlu0 %v3093, 127
        %v3099 = vpop.permute.xlu0 %3098
        %v3102 = vmul.f32 %v3038, %v3097
        %v3103 = vmul.f32 %v3039, %v3099
        %3104 = vst.msk [vmem:[%s831] sm:$0xff] %vm3064, %v3102
        %3105 = vst.msk [vmem:[%s831 + $0x8] sm:$0x1f] %vm3066, %v3103
        %p3106 = scmp.lt.s32.totalorder %s43, 1
        %s3107 = scalar_select %p3106, %s43, 1
        %s3108 = smul.addr %s3107, 2
        %s3109 = smul.addr %s3108, 8
        %s3110 = scalar_lea.vmem %s22, %s3109
        %p3111 = scmp.lt.s32.totalorder %s43, 1
        %s3112 = scalar_select %p3111, %s43, 1
        %s3113 = smul.addr %s3112, 2
        %s3114 = smul.addr %s3113, 8
        %s3115 = scalar_lea.vmem %s23, %s3114
        %s3116 = sand.u32 %s580, 1
        %s3117 = scalar_lea.sflag [#allocation6], %s3116
        %s3118 = sand.u32 %s580, 1
        %s3119 = smul.addr %s3118, 4
        %s3120 = scalar_lea.vmem [#allocation5], %s3119
        %s3121 = sand.u32 %s606, 1
        %s3122 = scalar_lea.sflag [#allocation8], %s3121
        %s3123 = sand.u32 %s606, 1
        %s3124 = smul.addr %s3123, 4
        %s3125 = scalar_lea.vmem [#allocation7], %s3124
        // Predicated region
        $region109: #{fcrn_forward.1} parent=107 // pred_check
          %p3126 = pneg %p538
        $region110: #{fcrn_forward.1} parent=107 // pred_check_branch
          %3128 = sbr.rel (%p3126) target = $region112
        $region111: #{fcrn_forward.1} parent=107 // pred_region
          _
        $region112: #{fcrn_forward.1} parent=107 // pred_fallthru
          _
        // Predicated region
        $region113: #{fcrn_forward.1} parent=107 // pred_check
          %p3129 = pneg %p564
        $region114: #{fcrn_forward.1} parent=107 // pred_check_branch
          %3131 = sbr.rel (%p3129) target = $region116
        $region115: #{fcrn_forward.1} parent=107 // pred_region
          _
        $region116: #{fcrn_forward.1} parent=107 // pred_fallthru
          _
        // Predicated region
        $region117: #{fcrn_forward.1} parent=107 // pred_check
          %p3132 = pneg %p590
        $region118: #{fcrn_forward.1} parent=107 // pred_check_branch
          %3134 = sbr.rel (%p3132) target = $region120
        $region119: #{fcrn_forward.1} parent=107 // pred_region
          %3136 = vsyncadd %s3117, 0
          %s3137 = smul.addr %s43, 4
          %s3138 = scalar_lea.hbm %s24, %s3137
          %s3140 = sshll.u32 %s3120, 4
          %s3141 = int_to_ptr.vmem [resolvable:$true] %s3140
          %s3142 = sshll.u32 %s3138, 4
          %s3143 = int_to_ptr.hbm [resolvable:$true] %s3142
          %3145 = dma.vmem_to_hbm [thread:$0]  %s3141, 64, %s3143, %s3117
        $region120: #{fcrn_forward.1} parent=107 // pred_fallthru
          _
        // Predicated region
        $region121: #{fcrn_forward.1} parent=107 // pred_check
          %p3146 = pneg %p616
        $region122: #{fcrn_forward.1} parent=107 // pred_check_branch
          %3148 = sbr.rel (%p3146) target = $region124
        $region123: #{fcrn_forward.1} parent=107 // pred_region
          %3150 = vsyncadd %s3122, 0
          %s3151 = smul.addr %s43, 4
          %s3152 = scalar_lea.hbm %s25, %s3151
          %s3154 = sshll.u32 %s3125, 4
          %s3155 = int_to_ptr.vmem [resolvable:$true] %s3154
          %s3156 = sshll.u32 %s3152, 4
          %s3157 = int_to_ptr.hbm [resolvable:$true] %s3156
          %3159 = dma.vmem_to_hbm [thread:$0]  %s3155, 64, %s3157, %s3122
        $region124: #{fcrn_forward.1} parent=107 // pred_fallthru
          _
      $region108: #{fcrn_forward.1} parent=5 // pred_fallthru
        _
      %p3160 = scmp.le.s32.totalorder 2, %s38
      // Predicated region
      $region125: #{fcrn_forward.1} parent=5 // pred_check
        %p3161 = pneg %p3160
      $region126: #{fcrn_forward.1} parent=5 // pred_check_branch
        %3163 = sbr.rel (%p3161) target = $region128
      $region127: #{fcrn_forward.1} parent=5 // pred_region
        %s3164 = ssub.s32 %s38, 2
        // Predicated region
        $region129: #{fcrn_forward.1} parent=127 // pred_check
          %p3165 = pneg %p544
        $region130: #{fcrn_forward.1} parent=127 // pred_check_branch
          %3167 = sbr.rel (%p3165) target = $region132
        $region131: #{fcrn_forward.1} parent=127 // pred_region
          %p3168 = scmp.lt.s32.totalorder %s44, 1
          %s3169 = scalar_select %p3168, %s44, 1
          %s3170 = smul.addr %s3169, 2
          %s3171 = smul.addr %s3170, 8
          %s3172 = scalar_lea.vmem %s22, %s3171
        $region132: #{fcrn_forward.1} parent=127 // pred_fallthru
          _
        // Predicated region
        $region133: #{fcrn_forward.1} parent=127 // pred_check
          %p3173 = pneg %p570
        $region134: #{fcrn_forward.1} parent=127 // pred_check_branch
          %3175 = sbr.rel (%p3173) target = $region136
        $region135: #{fcrn_forward.1} parent=127 // pred_region
          %p3176 = scmp.lt.s32.totalorder %s44, 1
          %s3177 = scalar_select %p3176, %s44, 1
          %s3178 = smul.addr %s3177, 2
          %s3179 = smul.addr %s3178, 8
          %s3180 = scalar_lea.vmem %s23, %s3179
        $region136: #{fcrn_forward.1} parent=127 // pred_fallthru
          _
        // Predicated region
        $region137: #{fcrn_forward.1} parent=127 // pred_check
          %p3181 = pneg %p596
        $region138: #{fcrn_forward.1} parent=127 // pred_check_branch
          %3183 = sbr.rel (%p3181) target = $region140
        $region139: #{fcrn_forward.1} parent=127 // pred_region
          %s3184 = sand.u32 %s581, 1
          %s3185 = scalar_lea.sflag [#allocation6], %s3184
          %s3186 = sand.u32 %s581, 1
          %s3187 = smul.addr %s3186, 4
          %s3188 = scalar_lea.vmem [#allocation5], %s3187
          %3190 = dma.done %s3185, 64
        $region140: #{fcrn_forward.1} parent=127 // pred_fallthru
          _
        // Predicated region
        $region141: #{fcrn_forward.1} parent=127 // pred_check
          %p3191 = pneg %p622
        $region142: #{fcrn_forward.1} parent=127 // pred_check_branch
          %3193 = sbr.rel (%p3191) target = $region144
        $region143: #{fcrn_forward.1} parent=127 // pred_region
          %s3194 = sand.u32 %s607, 1
          %s3195 = scalar_lea.sflag [#allocation8], %s3194
          %s3196 = sand.u32 %s607, 1
          %s3197 = smul.addr %s3196, 4
          %s3198 = scalar_lea.vmem [#allocation7], %s3197
          %3200 = dma.done %s3195, 64
        $region144: #{fcrn_forward.1} parent=127 // pred_fallthru
          _
      $region128: #{fcrn_forward.1} parent=5 // pred_fallthru
        _
    $region6: #{fcrn_forward.1} parent=1 // loop_footer
      %s42 = sadd.s32 1, %s38
    $region7: #{fcrn_forward.1} parent=1 // loop_footer_branch
      %37 = sbr.rel target = $region3
    $region8: #{fcrn_forward.1} parent=1 // loop_exit
      _
    %3201 = vsyncpa [#allocation6], 1
    %s3202 = scalar_lea.sflag [#allocation6], 1
    %3203 = vsyncpa %s3202, 1
    %3204 = vsyncpa [#allocation8], 1
    %s3205 = scalar_lea.sflag [#allocation8], 1
    %3206 = vsyncpa %s3205, 1

</llo_original>
